<compile_context>
chip_gen: v5e
topology: v5e:2x2
jax: 0.10.0
libtpu: 0.0.40
codegen_flags: <defaults>
</compile_context>

<pallas_src>
import functools
import math

import jax
import jax.numpy as jnp
from jax.experimental import pallas as pl
from jax.experimental.pallas import tpu as pltpu

LRELU_SLOPE = 0.2


def _round_up(x, m):
    return ((x + m - 1) // m) * m


def _lrelu(v):
    return jnp.where(v >= 0, v, LRELU_SLOPE * v)


# ---------------------------------------------------------------------------
# Fused MiddleBlock kernel: fc1 + bias + lrelu + dropout + fc2 + bias + lrelu
# ---------------------------------------------------------------------------
def _middle_block_kernel(x_ref, w1_ref, b1_ref, mask_ref, w2_ref, b2_ref,
                         o_ref, h_ref, *, n_k):
    j = pl.program_id(0)

    # ----- phase 1: stream fc1 weight K-tiles, accumulate hidden in VMEM -----
    @pl.when(j == 0)
    def _():
        h_ref[...] = jnp.zeros_like(h_ref)

    @pl.when(j < n_k)
    def _():
        h_ref[...] += jnp.dot(x_ref[...], w1_ref[...],
                              preferred_element_type=jnp.float32)

    # ----- end of phase 1: bias + LeakyReLU + dropout (hidden stays in VMEM) -
    @pl.when(j == n_k - 1)
    def _():
        h = _lrelu(h_ref[...] + b1_ref[...])
        h_ref[...] = h * mask_ref[...]          # mask = keep{0,1} * 1/(1-p)

    # ----- phase 2: stream fc2 weight N-tiles, emit lane-dense output tiles --
    @pl.when(j >= n_k)
    def _():
        acc = jnp.dot(h_ref[...].astype(jnp.bfloat16), w2_ref[...],
                      preferred_element_type=jnp.float32)
        o_ref[...] = _lrelu(acc + b2_ref[...]).astype(o_ref.dtype)


# ---------------------------------------------------------------------------
# Parameters: master f32 weights + pre-padded / pre-cast bf16 copies (built once)
# ---------------------------------------------------------------------------
def build_params(key, features, middle_features, max_batch=8):
    k1, k2, k3, k4 = jax.random.split(key, 4)
    # nn.Linear default init: U(-1/sqrt(fan_in), 1/sqrt(fan_in))
    lim1 = 1.0 / math.sqrt(features)
    lim2 = 1.0 / math.sqrt(middle_features)
    w1 = jax.random.uniform(k1, (features, middle_features), jnp.float32, -lim1, lim1)
    b1 = jax.random.uniform(k2, (middle_features,), jnp.float32, -lim1, lim1)
    w2 = jax.random.uniform(k3, (middle_features, features), jnp.float32, -lim2, lim2)
    b2 = jax.random.uniform(k4, (features,), jnp.float32, -lim2, lim2)

    # tile sizes: 512-wide weight tiles (lane-dense, multiple of 128)
    T = 512 if features >= 512 else _round_up(features, 128)
    Fp = _round_up(features, T)
    Mp = _round_up(middle_features, 128)
    Bp = _round_up(max_batch, 8)
    n_k = Fp // T          # fc1 K tiles
    n_n = Fp // T          # fc2 N tiles

    w1p = jnp.zeros((Fp, Mp), jnp.bfloat16).at[:features, :middle_features].set(
        w1.astype(jnp.bfloat16))
    b1p = jnp.zeros((1, Mp), jnp.float32).at[0, :middle_features].set(b1)
    w2p = jnp.zeros((Mp, Fp), jnp.bfloat16).at[:middle_features, :features].set(
        w2.astype(jnp.bfloat16))
    b2p = jnp.zeros((1, Fp), jnp.float32).at[0, :features].set(b2)

    return {
        "features": features, "middle_features": middle_features,
        "Fp": Fp, "Mp": Mp, "Bp": Bp, "T": T, "n_k": n_k, "n_n": n_n,
        "w1": w1p, "b1": b1p, "w2": w2p, "b2": b2p,
        # f32 masters only used by the reference check in __main__
        "w1_f32": w1, "b1_f32": b1, "w2_f32": w2, "b2_f32": b2,
    }


# ---------------------------------------------------------------------------
# Forward
# ---------------------------------------------------------------------------
def middle_block_apply(params, x, dropout_key):
    """x: (b, c, h, w) float32 (torch NCHW). Returns (b, c, h, w) float32."""
    b, c, hh, ww = x.shape
    feat = c * hh * ww
    p = params
    assert feat == p["features"] and b <= p["Bp"]
    Fp, Mp, Bp, T, n_k, n_n = p["Fp"], p["Mp"], p["Bp"], p["T"], p["n_k"], p["n_n"]

    # torch `.view(b, c*w*h)` on contiguous NCHW == row-major reshape
    x_flat = x.reshape(b, feat)
    xp = jnp.zeros((Bp, Fp), jnp.bfloat16).at[:b, :feat].set(
        x_flat.astype(jnp.bfloat16))

    # dropout keep-mask, Bernoulli(0.5), inverted-dropout scaling (x2)
    # TODO(synk): not bit-identical to torch RNG; same distribution as
    # F.dropout(p=0.5, training=True).  In-kernel pltpu PRNG has no CPU/interpret
    # lowering, so the mask is drawn on the host and streamed in (32 KB).
    keep = jax.random.bernoulli(dropout_key, 0.5, (Bp, Mp))
    mask = keep.astype(jnp.float32) * 2.0

    out = pl.pallas_call(
        functools.partial(_middle_block_kernel, n_k=n_k),
        out_shape=jax.ShapeDtypeStruct((Bp, Fp), jnp.float32),
        grid=(n_k + n_n,),
        in_specs=[
            pl.BlockSpec((Bp, T), lambda j: (0, jnp.minimum(j, n_k - 1))),   # x
            pl.BlockSpec((T, Mp), lambda j: (jnp.minimum(j, n_k - 1), 0)),   # W1
            pl.BlockSpec((1, Mp), lambda j: (0, 0)),                         # b1
            pl.BlockSpec((Bp, Mp), lambda j: (0, 0)),                        # mask
            pl.BlockSpec((Mp, T), lambda j: (0, jnp.maximum(j - n_k, 0))),   # W2
            pl.BlockSpec((1, T), lambda j: (0, jnp.maximum(j - n_k, 0))),    # b2
        ],
        out_specs=pl.BlockSpec((Bp, T), lambda j: (0, jnp.maximum(j - n_k, 0))),
        scratch_shapes=[pltpu.VMEM((Bp, Mp), jnp.float32)],                  # hidden
        compiler_params=pltpu.CompilerParams(
            dimension_semantics=("arbitrary",),   # scratch carries state across axis
        ),
    )(xp, p["w1"], p["b1"], mask, p["w2"], p["b2"])

    return out[:b, :feat].reshape(b, c, hh, ww)


# ---------------------------------------------------------------------------
if __name__ == "__main__":
    batch, c, hh, ww = 2, 4, 16, 16
    features = c * hh * ww            # 1024
    middle_features = 1024

    key = jax.random.PRNGKey(0)
    pkey, xkey, dkey = jax.random.split(key, 3)
    params = build_params(pkey, features, middle_features, max_batch=batch)
    x = jax.random.normal(xkey, (batch, c, hh, ww), jnp.float32)

    out = middle_block_apply(params, x, dkey)
    out = jax.block_until_ready(out)
    assert out.shape == (batch, c, hh, ww), out.shape
    assert bool(jnp.all(jnp.isfinite(out)))

    # Reference (same dropout mask, same bf16 casts; only accumulation differs)
    keep = jax.random.bernoulli(dkey, 0.5, (params["Bp"], params["Mp"]))
    mask = keep.astype(jnp.float32)[:batch, :middle_features] * 2.0
    w1f = params["w1"][:features, :middle_features].astype(jnp.float32)
    w2f = params["w2"][:middle_features, :features].astype(jnp.float32)
    b1f = params["b1"][0, :middle_features]
    b2f = params["b2"][0, :features]
    xf = x.reshape(batch, features).astype(jnp.bfloat16).astype(jnp.float32)
    h_ref = _lrelu(xf @ w1f + b1f) * mask
    h_ref = h_ref.astype(jnp.bfloat16).astype(jnp.float32)
    ref = _lrelu(h_ref @ w2f + b2f).reshape(batch, c, hh, ww)
    assert bool(jnp.allclose(out, ref, rtol=1e-2, atol=1e-2)), (
        float(jnp.max(jnp.abs(out - ref))))

    print("KERNEL_OK")
</pallas_src>

<mosaic_0001>
module attributes {stable_mosaic.version = 11 : i64} {
  func.func @_middle_block_kernel(%arg0: i32, %arg1: memref<8x512xbf16, #tpu.memory_space<vmem>>, %arg2: memref<512x1024xbf16, #tpu.memory_space<vmem>>, %arg3: memref<1x1024xf32, #tpu.memory_space<vmem>>, %arg4: memref<8x1024xf32, #tpu.memory_space<vmem>>, %arg5: memref<1024x512xbf16, #tpu.memory_space<vmem>>, %arg6: memref<1x512xf32, #tpu.memory_space<vmem>>, %arg7: memref<8x512xf32, #tpu.memory_space<vmem>>, %arg8: memref<8x1024xf32, #tpu.memory_space<vmem>>) attributes {dimension_semantics = [#tpu.dimension_semantics<arbitrary>], iteration_bounds = array<i64: 4>, scalar_prefetch = 0 : i64, scratch_operands = 1 : i64, tpu.core_type = #tpu.core_type<tc>, window_params = [{transform_indices = @transform_0, window_bounds = array<i64: 8, 512>}, {transform_indices = @transform_1, window_bounds = array<i64: 512, 1024>}, {pipeline_mode = #tpu.pipeline_mode<synchronous>, transform_indices = @transform_2, window_bounds = array<i64: 1, 1024>}, {pipeline_mode = #tpu.pipeline_mode<synchronous>, transform_indices = @transform_3, window_bounds = array<i64: 8, 1024>}, {transform_indices = @transform_4, window_bounds = array<i64: 1024, 512>}, {transform_indices = @transform_5, window_bounds = array<i64: 1, 512>}, {transform_indices = @transform_6, window_bounds = array<i64: 8, 512>}]} {
    %c0_i32 = arith.constant 0 : i32
    %0 = arith.cmpi eq, %arg0, %c0_i32 : i32
    %1 = arith.extui %0 : i1 to i32
    %c0_i32_0 = arith.constant 0 : i32
    %2 = arith.cmpi ne, %1, %c0_i32_0 : i32
    scf.if %2 {
      %cst = arith.constant 0.000000e+00 : f32
      %12 = vector.broadcast %cst : f32 to vector<8x1024xf32>
      %c0 = arith.constant 0 : index
      %c0_5 = arith.constant 0 : index
      %13 = vector.load %arg8[%c0, %c0_5] : memref<8x1024xf32, #tpu.memory_space<vmem>>, vector<8x1024xf32>
      tpu.vector_store %arg8[%c0, %c0_5], %12 {strides = array<i32>} : memref<8x1024xf32, #tpu.memory_space<vmem>>, vector<8x1024xf32>,
    } else {
    }
    %c2_i32 = arith.constant 2 : i32
    %3 = arith.cmpi slt, %arg0, %c2_i32 : i32
    %4 = arith.extui %3 : i1 to i32
    %c0_i32_1 = arith.constant 0 : i32
    %5 = arith.cmpi ne, %4, %c0_i32_1 : i32
    scf.if %5 {
      %c0 = arith.constant 0 : index
      %c0_5 = arith.constant 0 : index
      %12 = vector.load %arg8[%c0, %c0_5] : memref<8x1024xf32, #tpu.memory_space<vmem>>, vector<8x1024xf32>
      %c0_6 = arith.constant 0 : index
      %c0_7 = arith.constant 0 : index
      %13 = vector.load %arg1[%c0_6, %c0_7] : memref<8x512xbf16, #tpu.memory_space<vmem>>, vector<8x512xbf16>
      %c0_8 = arith.constant 0 : index
      %c0_9 = arith.constant 0 : index
      %14 = vector.load %arg2[%c0_8, %c0_9] : memref<512x1024xbf16, #tpu.memory_space<vmem>>, vector<512x1024xbf16>
      %cst = arith.constant dense<0.000000e+00> : vector<8x1024xf32>
      %15 = tpu.matmul %13, %14, %cst {dimension_numbers = #tpu.dot_dimension_numbers<[1], [0], [0], [1], [0, 0, 1, 1], [], []>} : vector<8x512xbf16>, vector<512x1024xbf16>, vector<8x1024xf32> -> vector<8x1024xf32>
      %16 = arith.addf %12, %15 : vector<8x1024xf32>
      %c0_10 = arith.constant 0 : index
      %c0_11 = arith.constant 0 : index
      %17 = vector.load %arg8[%c0_10, %c0_11] : memref<8x1024xf32, #tpu.memory_space<vmem>>, vector<8x1024xf32>
      tpu.vector_store %arg8[%c0_10, %c0_11], %16 {strides = array<i32>} : memref<8x1024xf32, #tpu.memory_space<vmem>>, vector<8x1024xf32>,
    } else {
    }
    %c1_i32 = arith.constant 1 : i32
    %6 = arith.cmpi eq, %arg0, %c1_i32 : i32
    %7 = arith.extui %6 : i1 to i32
    %c0_i32_2 = arith.constant 0 : i32
    %8 = arith.cmpi ne, %7, %c0_i32_2 : i32
    scf.if %8 {
      %c0 = arith.constant 0 : index
      %c0_5 = arith.constant 0 : index
      %12 = vector.load %arg8[%c0, %c0_5] : memref<8x1024xf32, #tpu.memory_space<vmem>>, vector<8x1024xf32>
      %c0_6 = arith.constant 0 : index
      %c0_7 = arith.constant 0 : index
      %13 = vector.load %arg3[%c0_6, %c0_7] : memref<1x1024xf32, #tpu.memory_space<vmem>>, vector<1x1024xf32>
      %14 = vector.broadcast %13 : vector<1x1024xf32> to vector<8x1024xf32>
      %15 = arith.addf %12, %14 : vector<8x1024xf32>
      %cst = arith.constant 0.000000e+00 : f32
      %16 = vector.broadcast %cst : f32 to vector<8x1024xf32>
      %17 = arith.cmpf oge, %15, %16 : vector<8x1024xf32>
      %cst_8 = arith.constant 2.000000e-01 : f32
      %18 = vector.broadcast %cst_8 : f32 to vector<8x1024xf32>
      %19 = arith.mulf %18, %15 : vector<8x1024xf32>
      %20 = arith.select %17, %15, %19 : vector<8x1024xi1>, vector<8x1024xf32>
      %c0_9 = arith.constant 0 : index
      %c0_10 = arith.constant 0 : index
      %21 = vector.load %arg4[%c0_9, %c0_10] : memref<8x1024xf32, #tpu.memory_space<vmem>>, vector<8x1024xf32>
      %22 = arith.mulf %20, %21 : vector<8x1024xf32>
      %c0_11 = arith.constant 0 : index
      %c0_12 = arith.constant 0 : index
      %23 = vector.load %arg8[%c0_11, %c0_12] : memref<8x1024xf32, #tpu.memory_space<vmem>>, vector<8x1024xf32>
      tpu.vector_store %arg8[%c0_11, %c0_12], %22 {strides = array<i32>} : memref<8x1024xf32, #tpu.memory_space<vmem>>, vector<8x1024xf32>,
    } else {
    }
    %c2_i32_3 = arith.constant 2 : i32
    %9 = arith.cmpi sge, %arg0, %c2_i32_3 : i32
    %10 = arith.extui %9 : i1 to i32
    %c0_i32_4 = arith.constant 0 : i32
    %11 = arith.cmpi ne, %10, %c0_i32_4 : i32
    scf.if %11 {
      %c0 = arith.constant 0 : index
      %c0_5 = arith.constant 0 : index
      %12 = vector.load %arg8[%c0, %c0_5] : memref<8x1024xf32, #tpu.memory_space<vmem>>, vector<8x1024xf32>
      %13 = arith.truncf %12 : vector<8x1024xf32> to vector<8x1024xbf16>
      %c0_6 = arith.constant 0 : index
      %c0_7 = arith.constant 0 : index
      %14 = vector.load %arg5[%c0_6, %c0_7] : memref<1024x512xbf16, #tpu.memory_space<vmem>>, vector<1024x512xbf16>
      %cst = arith.constant dense<0.000000e+00> : vector<8x512xf32>
      %15 = tpu.matmul %13, %14, %cst {dimension_numbers = #tpu.dot_dimension_numbers<[1], [0], [0], [1], [0, 0, 1, 1], [], []>} : vector<8x1024xbf16>, vector<1024x512xbf16>, vector<8x512xf32> -> vector<8x512xf32>
      %c0_8 = arith.constant 0 : index
      %c0_9 = arith.constant 0 : index
      %16 = vector.load %arg6[%c0_8, %c0_9] : memref<1x512xf32, #tpu.memory_space<vmem>>, vector<1x512xf32>
      %17 = vector.broadcast %16 : vector<1x512xf32> to vector<8x512xf32>
      %18 = arith.addf %15, %17 : vector<8x512xf32>
      %cst_10 = arith.constant 0.000000e+00 : f32
      %19 = vector.broadcast %cst_10 : f32 to vector<8x512xf32>
      %20 = arith.cmpf oge, %18, %19 : vector<8x512xf32>
      %cst_11 = arith.constant 2.000000e-01 : f32
      %21 = vector.broadcast %cst_11 : f32 to vector<8x512xf32>
      %22 = arith.mulf %21, %18 : vector<8x512xf32>
      %23 = arith.select %20, %18, %22 : vector<8x512xi1>, vector<8x512xf32>
      %c0_12 = arith.constant 0 : index
      %c0_13 = arith.constant 0 : index
      %24 = vector.load %arg7[%c0_12, %c0_13] : memref<8x512xf32, #tpu.memory_space<vmem>>, vector<8x512xf32>
      tpu.vector_store %arg7[%c0_12, %c0_13], %23 {strides = array<i32>} : memref<8x512xf32, #tpu.memory_space<vmem>>, vector<8x512xf32>,
    } else {
    }
    return
  }
  func.func @transform_0(%arg0: i32) -> (i32, i32) {
    %c1_i32 = arith.constant 1 : i32
    %0 = arith.minsi %arg0, %c1_i32 : i32
    %c0_i32 = arith.constant 0 : i32
    %c0_i32_0 = arith.constant 0 : i32
    return %c0_i32, %0 : i32, i32
  }
  func.func @transform_1(%arg0: i32) -> (i32, i32) {
    %c1_i32 = arith.constant 1 : i32
    %0 = arith.minsi %arg0, %c1_i32 : i32
    %c0_i32 = arith.constant 0 : i32
    %c0_i32_0 = arith.constant 0 : i32
    return %0, %c0_i32 : i32, i32
  }
  func.func @transform_2(%arg0: i32) -> (i32, i32) {
    %c0_i32 = arith.constant 0 : i32
    %c0_i32_0 = arith.constant 0 : i32
    %c0_i32_1 = arith.constant 0 : i32
    return %c0_i32, %c0_i32_0 : i32, i32
  }
  func.func @transform_3(%arg0: i32) -> (i32, i32) {
    %c0_i32 = arith.constant 0 : i32
    %c0_i32_0 = arith.constant 0 : i32
    %c0_i32_1 = arith.constant 0 : i32
    return %c0_i32, %c0_i32_0 : i32, i32
  }
  func.func @transform_4(%arg0: i32) -> (i32, i32) {
    %c2_i32 = arith.constant 2 : i32
    %0 = arith.subi %arg0, %c2_i32 : i32
    %c0_i32 = arith.constant 0 : i32
    %1 = arith.maxsi %0, %c0_i32 : i32
    %c0_i32_0 = arith.constant 0 : i32
    %c0_i32_1 = arith.constant 0 : i32
    return %c0_i32_0, %1 : i32, i32
  }
  func.func @transform_5(%arg0: i32) -> (i32, i32) {
    %c2_i32 = arith.constant 2 : i32
    %0 = arith.subi %arg0, %c2_i32 : i32
    %c0_i32 = arith.constant 0 : i32
    %1 = arith.maxsi %0, %c0_i32 : i32
    %c0_i32_0 = arith.constant 0 : i32
    %c0_i32_1 = arith.constant 0 : i32
    return %c0_i32_0, %1 : i32, i32
  }
  func.func @transform_6(%arg0: i32) -> (i32, i32) {
    %c2_i32 = arith.constant 2 : i32
    %0 = arith.subi %arg0, %c2_i32 : i32
    %c0_i32 = arith.constant 0 : i32
    %1 = arith.maxsi %0, %c0_i32 : i32
    %c0_i32_0 = arith.constant 0 : i32
    %c0_i32_1 = arith.constant 0 : i32
    return %c0_i32_0, %1 : i32, i32
  }
}

</mosaic_0001>

<llo_original>
// kernel: tpu_custom_call.1
$region0: #{tpu_custom_call.1}
  #allocation0 [shape = 'u32[]', space=smem, size = 0x4, offset = 0x4, fixed_abs, tag = 'smem constant byte address 0x4 - core index']
  #allocation1 [shape = 'u32[72,128]{1,0:T(1,128)}', space=vmem, size = 0x9000, scoped, tag = 'internal scratch']
  #allocation2 [shape = 'f32[8,1024]{1,0:T(8,128)}', space=vmem, size = 0x8000, scoped, tag = 'scratch operand']
  %s0 = inlined_call_operand.hbm [shape: bf16[8,1024], index: 0, kind: input, shape index: {}]
  %s1 = inlined_call_operand.hbm [shape: bf16[1024,1024], index: 1, kind: input, shape index: {}]
  %s2 = inlined_call_operand.hbm [shape: f32[1,1024], index: 2, kind: input, shape index: {}]
  %s3 = inlined_call_operand.hbm [shape: f32[8,1024], index: 3, kind: input, shape index: {}]
  %s4 = inlined_call_operand.hbm [shape: bf16[1024,1024], index: 4, kind: input, shape index: {}]
  %s5 = inlined_call_operand.hbm [shape: f32[1,1024], index: 5, kind: input, shape index: {}]
  %s6 = inlined_call_operand.hbm [shape: f32[8,1024], index: 6, kind: output, shape index: {}]
  %s7 = sld [smem:[#allocation0]]
  $region97: #{tpu_custom_call.1} parent=0
    _
  %s9 = ssub.s32 1, %s7
  %s10 = scalar_select 0, %s9, %s7
  $region1: #{tpu_custom_call.1} parent=0
    #allocation3 [shape = 'u8[16384]{0}', space=vmem, size = 0x4000, scoped, tag = 'input window, operand 0']
    #allocation4 [shape = 's32[2]{0}', space=sflag, size = 0x8, scoped, tag = 'scoped memory for tpu_custom_call.1']
    #allocation5 [shape = 's32[2]{0}', space=sflag, size = 0x8, scoped, tag = 'scoped memory for tpu_custom_call.1']
    #allocation6 [shape = 'u8[2097152]{0}', space=vmem, size = 0x200000, scoped, tag = 'input window, operand 1']
    #allocation7 [shape = 's32[2]{0}', space=sflag, size = 0x8, scoped, tag = 'scoped memory for tpu_custom_call.1']
    #allocation8 [shape = 'u8[4096]{0}', space=vmem, size = 0x1000, scoped, tag = 'input window, operand 2, single buffered']
    #allocation9 [shape = 'u8[32768]{0}', space=vmem, size = 0x8000, scoped, tag = 'input window, operand 3, single buffered']
    #allocation10 [shape = 's32[1]{0}', space=sflag, size = 0x4, scoped, tag = 'scoped memory for tpu_custom_call.1']
    #allocation11 [shape = 'u8[2097152]{0}', space=vmem, size = 0x200000, scoped, tag = 'input window, operand 4']
    #allocation12 [shape = 'u8[4096]{0}', space=vmem, size = 0x1000, scoped, tag = 'input window, operand 5']
    #allocation13 [shape = 'u8[32768]{0}', space=vmem, size = 0x8000, scoped, tag = 'output window, operand 0']
    %11 = vsyncpa [#allocation4], 0
    %s12 = scalar_lea.sflag [#allocation4], 1
    %13 = vsyncpa %s12, 0
    %14 = vsyncpa [#allocation7], 0
    %s15 = scalar_lea.sflag [#allocation7], 1
    %16 = vsyncpa %s15, 0
    %17 = vsyncpa [#allocation10], 0
    %18 = vsyncpa [#allocation5], 0
    %s19 = scalar_lea.sflag [#allocation5], 1
    %20 = vsyncpa %s19, 0
    loop: start=0, step=1, limit=6
    $region2: #{tpu_custom_call.1} parent=1 // loop_pre_header
      _
    $region3: #{tpu_custom_call.1} parent=1 // loop_header
      %s22 = sphi 0, %s26
      %p23 = scmp.ge.s32.totalorder %s22, 6
      %s36 = sphi 0, %s38
      %s39 = sphi 0, %s36
      %s40 = sphi 0, %s39
      %s56 = sphi 0, %s40
      %s66 = sphi 0, %s68
      %s69 = sphi 0, %s66
      %s70 = sphi 0, %s69
      %s86 = sphi 0, %s70
      %s90 = sphi 0, %s90
      %s92 = sphi 0, %s90
      %s93 = sphi 0, %s92
      %s107 = sphi 0, %s93
      %s111 = sphi 0, %s111
      %s113 = sphi 0, %s111
      %s114 = sphi 0, %s113
      %s128 = sphi 0, %s114
      %s140 = sphi 0, %s142
      %s143 = sphi 0, %s140
      %s144 = sphi 0, %s143
      %s160 = sphi 0, %s144
      %s172 = sphi 0, %s174
      %s175 = sphi 0, %s172
      %s176 = sphi 0, %s175
      %s192 = sphi 0, %s176
      %s204 = sphi 0, %s206
      %s207 = sphi 0, %s204
      %s208 = sphi 0, %s207
      %s224 = sphi 0, %s208
    $region4: #{tpu_custom_call.1} parent=1 // loop_header_branch
      %25 = sbr.rel (%p23) target = $region8
    $region5: #{tpu_custom_call.1} parent=1 // loop_body
      %s27 = ssub.s32 %s22, 1
      %s28 = ssub.s32 %s22, 2
      %s29 = sadd.s32 %s22, 1
      %p30 = scmp.lt.s32.totalorder %s22, 1
      %s31 = scalar_select %p30, %s22, 1
      %p32 = scmp.lt.s32.totalorder %s29, 1
      %s33 = scalar_select %p32, %s29, 1
      %s34 = ssub.s32 %s31, %s33
      %p35 = scmp.eq.s32.totalorder %s34, 0
      %s37 = sadd.s32 %s36, 1
      %s38 = scalar_select %p35, %s36, %s37
      %p41 = pneg %p35
      %p42 = scmp.eq.s32.totalorder %s22, 3
      %p43 = por %p41, %p42
      %p44 = scmp.ne.s32.totalorder %s36, %s39
      %p45 = scmp.eq.s32.totalorder %s22, 0
      %p46 = por %p44, %p45
      %p47 = scmp.ne.s32.totalorder %s36, %s39
      %p48 = scmp.eq.s32.totalorder %s27, 3
      %p49 = por %p47, %p48
      %p50 = scmp.ne.s32.totalorder %s39, %s40
      %p51 = scmp.eq.s32.totalorder %s27, 0
      %p52 = por %p50, %p51
      %p53 = scmp.ne.s32.totalorder %s39, %s40
      %p54 = scmp.eq.s32.totalorder %s28, 3
      %p55 = por %p53, %p54
      %p57 = scmp.ne.s32.totalorder %s40, %s56
      %p58 = scmp.eq.s32.totalorder %s28, 0
      %p59 = por %p57, %p58
      %p60 = scmp.lt.s32.totalorder %s22, 1
      %s61 = scalar_select %p60, %s22, 1
      %p62 = scmp.lt.s32.totalorder %s29, 1
      %s63 = scalar_select %p62, %s29, 1
      %s64 = ssub.s32 %s61, %s63
      %p65 = scmp.eq.s32.totalorder %s64, 0
      %s67 = sadd.s32 %s66, 1
      %s68 = scalar_select %p65, %s66, %s67
      %p71 = pneg %p65
      %p72 = scmp.eq.s32.totalorder %s22, 3
      %p73 = por %p71, %p72
      %p74 = scmp.ne.s32.totalorder %s66, %s69
      %p75 = scmp.eq.s32.totalorder %s22, 0
      %p76 = por %p74, %p75
      %p77 = scmp.ne.s32.totalorder %s66, %s69
      %p78 = scmp.eq.s32.totalorder %s27, 3
      %p79 = por %p77, %p78
      %p80 = scmp.ne.s32.totalorder %s69, %s70
      %p81 = scmp.eq.s32.totalorder %s27, 0
      %p82 = por %p80, %p81
      %p83 = scmp.ne.s32.totalorder %s69, %s70
      %p84 = scmp.eq.s32.totalorder %s28, 3
      %p85 = por %p83, %p84
      %p87 = scmp.ne.s32.totalorder %s70, %s86
      %p88 = scmp.eq.s32.totalorder %s28, 0
      %p89 = por %p87, %p88
      %s91 = sadd.s32 %s90, 1
      %p94 = scmp.eq.s32.totalorder %s22, 3
      %p95 = scmp.ne.s32.totalorder %s90, %s92
      %p96 = scmp.eq.s32.totalorder %s22, 0
      %p97 = por %p95, %p96
      %p98 = scmp.ne.s32.totalorder %s90, %s92
      %p99 = scmp.eq.s32.totalorder %s27, 3
      %p100 = por %p98, %p99
      %p101 = scmp.ne.s32.totalorder %s92, %s93
      %p102 = scmp.eq.s32.totalorder %s27, 0
      %p103 = por %p101, %p102
      %p104 = scmp.ne.s32.totalorder %s92, %s93
      %p105 = scmp.eq.s32.totalorder %s28, 3
      %p106 = por %p104, %p105
      %p108 = scmp.ne.s32.totalorder %s93, %s107
      %p109 = scmp.eq.s32.totalorder %s28, 0
      %p110 = por %p108, %p109
      %s112 = sadd.s32 %s111, 1
      %p115 = scmp.eq.s32.totalorder %s22, 3
      %p116 = scmp.ne.s32.totalorder %s111, %s113
      %p117 = scmp.eq.s32.totalorder %s22, 0
      %p118 = por %p116, %p117
      %p119 = scmp.ne.s32.totalorder %s111, %s113
      %p120 = scmp.eq.s32.totalorder %s27, 3
      %p121 = por %p119, %p120
      %p122 = scmp.ne.s32.totalorder %s113, %s114
      %p123 = scmp.eq.s32.totalorder %s27, 0
      %p124 = por %p122, %p123
      %p125 = scmp.ne.s32.totalorder %s113, %s114
      %p126 = scmp.eq.s32.totalorder %s28, 3
      %p127 = por %p125, %p126
      %p129 = scmp.ne.s32.totalorder %s114, %s128
      %p130 = scmp.eq.s32.totalorder %s28, 0
      %p131 = por %p129, %p130
      %s132 = ssub.s32 %s22, 2
      %p133 = scmp.gt.s32.totalorder %s132, 0
      %s134 = scalar_select %p133, %s132, 0
      %s135 = ssub.s32 %s29, 2
      %p136 = scmp.gt.s32.totalorder %s135, 0
      %s137 = scalar_select %p136, %s135, 0
      %s138 = ssub.s32 %s134, %s137
      %p139 = scmp.eq.s32.totalorder %s138, 0
      %s141 = sadd.s32 %s140, 1
      %s142 = scalar_select %p139, %s140, %s141
      %p145 = pneg %p139
      %p146 = scmp.eq.s32.totalorder %s22, 3
      %p147 = por %p145, %p146
      %p148 = scmp.ne.s32.totalorder %s140, %s143
      %p149 = scmp.eq.s32.totalorder %s22, 0
      %p150 = por %p148, %p149
      %p151 = scmp.ne.s32.totalorder %s140, %s143
      %p152 = scmp.eq.s32.totalorder %s27, 3
      %p153 = por %p151, %p152
      %p154 = scmp.ne.s32.totalorder %s143, %s144
      %p155 = scmp.eq.s32.totalorder %s27, 0
      %p156 = por %p154, %p155
      %p157 = scmp.ne.s32.totalorder %s143, %s144
      %p158 = scmp.eq.s32.totalorder %s28, 3
      %p159 = por %p157, %p158
      %p161 = scmp.ne.s32.totalorder %s144, %s160
      %p162 = scmp.eq.s32.totalorder %s28, 0
      %p163 = por %p161, %p162
      %s164 = ssub.s32 %s22, 2
      %p165 = scmp.gt.s32.totalorder %s164, 0
      %s166 = scalar_select %p165, %s164, 0
      %s167 = ssub.s32 %s29, 2
      %p168 = scmp.gt.s32.totalorder %s167, 0
      %s169 = scalar_select %p168, %s167, 0
      %s170 = ssub.s32 %s166, %s169
      %p171 = scmp.eq.s32.totalorder %s170, 0
      %s173 = sadd.s32 %s172, 1
      %s174 = scalar_select %p171, %s172, %s173
      %p177 = pneg %p171
      %p178 = scmp.eq.s32.totalorder %s22, 3
      %p179 = por %p177, %p178
      %p180 = scmp.ne.s32.totalorder %s172, %s175
      %p181 = scmp.eq.s32.totalorder %s22, 0
      %p182 = por %p180, %p181
      %p183 = scmp.ne.s32.totalorder %s172, %s175
      %p184 = scmp.eq.s32.totalorder %s27, 3
      %p185 = por %p183, %p184
      %p186 = scmp.ne.s32.totalorder %s175, %s176
      %p187 = scmp.eq.s32.totalorder %s27, 0
      %p188 = por %p186, %p187
      %p189 = scmp.ne.s32.totalorder %s175, %s176
      %p190 = scmp.eq.s32.totalorder %s28, 3
      %p191 = por %p189, %p190
      %p193 = scmp.ne.s32.totalorder %s176, %s192
      %p194 = scmp.eq.s32.totalorder %s28, 0
      %p195 = por %p193, %p194
      %s196 = ssub.s32 %s22, 2
      %p197 = scmp.gt.s32.totalorder %s196, 0
      %s198 = scalar_select %p197, %s196, 0
      %s199 = ssub.s32 %s29, 2
      %p200 = scmp.gt.s32.totalorder %s199, 0
      %s201 = scalar_select %p200, %s199, 0
      %s202 = ssub.s32 %s198, %s201
      %p203 = scmp.eq.s32.totalorder %s202, 0
      %s205 = sadd.s32 %s204, 1
      %s206 = scalar_select %p203, %s204, %s205
      %p209 = pneg %p203
      %p210 = scmp.eq.s32.totalorder %s22, 3
      %p211 = por %p209, %p210
      %p212 = scmp.ne.s32.totalorder %s204, %s207
      %p213 = scmp.eq.s32.totalorder %s22, 0
      %p214 = por %p212, %p213
      %p215 = scmp.ne.s32.totalorder %s204, %s207
      %p216 = scmp.eq.s32.totalorder %s27, 3
      %p217 = por %p215, %p216
      %p218 = scmp.ne.s32.totalorder %s207, %s208
      %p219 = scmp.eq.s32.totalorder %s27, 0
      %p220 = por %p218, %p219
      %p221 = scmp.ne.s32.totalorder %s207, %s208
      %p222 = scmp.eq.s32.totalorder %s28, 3
      %p223 = por %p221, %p222
      %p225 = scmp.ne.s32.totalorder %s208, %s224
      %p226 = scmp.eq.s32.totalorder %s28, 0
      %p227 = por %p225, %p226
      %p228 = scmp.le.s32.totalorder 1, %s22
      %p229 = scmp.lt.s32.totalorder %s22, 5
      %p230 = pnand %p228, %p229
      %p231 = pneg %p230
      // Predicated region
      $region9: #{tpu_custom_call.1} parent=5 // pred_check
        _
      $region10: #{tpu_custom_call.1} parent=5 // pred_check_branch
        %233 = sbr.rel (%p230) target = $region12
      $region11: #{tpu_custom_call.1} parent=5 // pred_region
        %s234 = ssub.s32 %s22, 1
        // Predicated region
        $region13: #{tpu_custom_call.1} parent=11 // pred_check
          %p235 = pneg %p103
        $region14: #{tpu_custom_call.1} parent=11 // pred_check_branch
          %237 = sbr.rel (%p235) target = $region16
        $region15: #{tpu_custom_call.1} parent=11 // pred_region
          %239 = vsyncadd [#allocation7], 0
          %s241 = sshll.u32 %s2, 4
          %s242 = int_to_ptr.hbm [resolvable:$true] %s241
          %s243 = sshll.u32 [#allocation8], 4
          %s244 = int_to_ptr.vmem [resolvable:$true] %s243
          %246 = dma.hbm_to_vmem [thread:$0]  %s242, 128, %s244, [#allocation7]
        $region16: #{tpu_custom_call.1} parent=11 // pred_fallthru
          _
        // Predicated region
        $region17: #{tpu_custom_call.1} parent=11 // pred_check
          %p247 = pneg %p124
        $region18: #{tpu_custom_call.1} parent=11 // pred_check_branch
          %249 = sbr.rel (%p247) target = $region20
        $region19: #{tpu_custom_call.1} parent=11 // pred_region
          %251 = vsyncadd [#allocation10], 0
          %s253 = sshll.u32 %s3, 4
          %s254 = int_to_ptr.hbm [resolvable:$true] %s253
          %s255 = sshll.u32 [#allocation9], 4
          %s256 = int_to_ptr.vmem [resolvable:$true] %s255
          %258 = dma.hbm_to_vmem [thread:$0]  %s254, 1024, %s256, [#allocation10]
        $region20: #{tpu_custom_call.1} parent=11 // pred_fallthru
          _
      $region12: #{tpu_custom_call.1} parent=5 // pred_fallthru
        _
      %p259 = scmp.lt.s32.totalorder %s22, 4
      // Predicated region
      $region21: #{tpu_custom_call.1} parent=5 // pred_check
        %p260 = pneg %p259
      $region22: #{tpu_custom_call.1} parent=5 // pred_check_branch
        %262 = sbr.rel (%p260) target = $region24
      $region23: #{tpu_custom_call.1} parent=5 // pred_region
        // Predicated region
        $region25: #{tpu_custom_call.1} parent=23 // pred_check
          %p263 = pneg %p46
        $region26: #{tpu_custom_call.1} parent=23 // pred_check_branch
          %265 = sbr.rel (%p263) target = $region28
        $region27: #{tpu_custom_call.1} parent=23 // pred_region
          %s266 = sand.u32 %s22, 1
          %s267 = scalar_lea.sflag [#allocation4], %s266
          %s268 = sand.u32 %s36, 1
          %s269 = smul.addr %s268, 16
          %s270 = scalar_lea.vmem [#allocation3], %s269
          %p271 = scmp.lt.s32.totalorder %s22, 1
          %s272 = scalar_select %p271, %s22, 1
          %s273 = smul.u32 4, %s272
          %275 = vsyncadd %s267, 0
          %s276 = smul.addr %s273, 4
          %s277 = scalar_lea.hbm %s0, %s276
          %s279 = sshll.u32 %s277, 4
          %s280 = int_to_ptr.hbm [resolvable:$true] %s279
          %s281 = sshll.u32 %s270, 4
          %s282 = int_to_ptr.vmem [resolvable:$true] %s281
          %284 = dma.hbm_to_vmem [thread:$0]  %s280, 256, %s282, %s267
        $region28: #{tpu_custom_call.1} parent=23 // pred_fallthru
          _
        // Predicated region
        $region29: #{tpu_custom_call.1} parent=23 // pred_check
          %p285 = pneg %p76
        $region30: #{tpu_custom_call.1} parent=23 // pred_check_branch
          %287 = sbr.rel (%p285) target = $region32
        $region31: #{tpu_custom_call.1} parent=23 // pred_region
          %s288 = sand.u32 %s22, 1
          %s289 = scalar_lea.sflag [#allocation7], %s288
          %s290 = sand.u32 %s66, 1
          %s291 = smul.addr %s290, 2048
          %s292 = scalar_lea.vmem [#allocation6], %s291
          %p293 = scmp.lt.s32.totalorder %s22, 1
          %s294 = scalar_select %p293, %s22, 1
          %s295 = smul.u32 64, %s294
          %297 = vsyncadd %s289, 0
          %s298 = smul.addr %s295, 8
          %s299 = smul.addr %s298, 4
          %s300 = scalar_lea.hbm %s1, %s299
          %s301 = sshll.u32 %s300, 4
          %s302 = int_to_ptr.hbm [resolvable:$true] %s301
          %s303 = sshll.u32 %s292, 4
          %s304 = int_to_ptr.vmem [resolvable:$true] %s303
          %309 = dma.hbm_to_vmem [thread:$0]  %s302, 32768, %s304, %s289, 512, 512, 32
        $region32: #{tpu_custom_call.1} parent=23 // pred_fallthru
          _
        // Predicated region
        $region33: #{tpu_custom_call.1} parent=23 // pred_check
          %p310 = pneg %p150
        $region34: #{tpu_custom_call.1} parent=23 // pred_check_branch
          %312 = sbr.rel (%p310) target = $region36
        $region35: #{tpu_custom_call.1} parent=23 // pred_region
          %s313 = sand.u32 %s22, 1
          %s314 = scalar_lea.sflag [#allocation4], %s313
          %s315 = sand.u32 %s140, 1
          %s316 = smul.addr %s315, 2048
          %s317 = scalar_lea.vmem [#allocation11], %s316
          %s318 = ssub.s32 %s22, 2
          %p319 = scmp.gt.s32.totalorder %s318, 0
          %s320 = scalar_select %p319, %s318, 0
          %s321 = smul.u32 4, %s320
          %323 = vsyncadd %s314, 0
          %s324 = smul.addr %s321, 4
          %s325 = scalar_lea.hbm %s4, %s324
          %s326 = sshll.u32 %s325, 4
          %s327 = int_to_ptr.hbm [resolvable:$true] %s326
          %s328 = sshll.u32 %s317, 4
          %s329 = int_to_ptr.vmem [resolvable:$true] %s328
          %334 = dma.hbm_to_vmem [thread:$0]  %s327, 32768, %s329, %s314, 512, 256, 16
        $region36: #{tpu_custom_call.1} parent=23 // pred_fallthru
          _
        // Predicated region
        $region37: #{tpu_custom_call.1} parent=23 // pred_check
          %p335 = pneg %p182
        $region38: #{tpu_custom_call.1} parent=23 // pred_check_branch
          %337 = sbr.rel (%p335) target = $region40
        $region39: #{tpu_custom_call.1} parent=23 // pred_region
          %s338 = sand.u32 %s22, 1
          %s339 = scalar_lea.sflag [#allocation7], %s338
          %s340 = sand.u32 %s172, 1
          %s341 = smul.addr %s340, 4
          %s342 = scalar_lea.vmem [#allocation12], %s341
          %s343 = ssub.s32 %s22, 2
          %p344 = scmp.gt.s32.totalorder %s343, 0
          %s345 = scalar_select %p344, %s343, 0
          %s346 = smul.u32 4, %s345
          %348 = vsyncadd %s339, 0
          %s349 = scalar_lea.hbm %s5, %s346
          %s351 = sshll.u32 %s349, 4
          %s352 = int_to_ptr.hbm [resolvable:$true] %s351
          %s353 = sshll.u32 %s342, 4
          %s354 = int_to_ptr.vmem [resolvable:$true] %s353
          %356 = dma.hbm_to_vmem [thread:$0]  %s352, 64, %s354, %s339
        $region40: #{tpu_custom_call.1} parent=23 // pred_fallthru
          _
      $region24: #{tpu_custom_call.1} parent=5 // pred_fallthru
        _
      %p357 = scmp.le.s32.totalorder 1, %s22
      %p358 = scmp.lt.s32.totalorder %s22, 5
      %p359 = pnand %p357, %p358
      %p360 = pneg %p359
      // Predicated region
      $region41: #{tpu_custom_call.1} parent=5 // pred_check
        _
      $region42: #{tpu_custom_call.1} parent=5 // pred_check_branch
        %362 = sbr.rel (%p359) target = $region44
      $region43: #{tpu_custom_call.1} parent=5 // pred_region
        %s363 = ssub.s32 %s22, 1
        %s364 = sand.u32 %s27, 1
        %s365 = scalar_lea.sflag [#allocation4], %s364
        %s366 = sand.u32 %s39, 1
        %s367 = smul.addr %s366, 16
        %s368 = scalar_lea.vmem [#allocation3], %s367
        // Predicated region
        $region45: #{tpu_custom_call.1} parent=43 // pred_check
          %p369 = pneg %p52
        $region46: #{tpu_custom_call.1} parent=43 // pred_check_branch
          %371 = sbr.rel (%p369) target = $region48
        $region47: #{tpu_custom_call.1} parent=43 // pred_region
          %373 = dma.done %s365, 256
        $region48: #{tpu_custom_call.1} parent=43 // pred_fallthru
          _
        %s374 = sand.u32 %s27, 1
        %s375 = scalar_lea.sflag [#allocation7], %s374
        %s376 = sand.u32 %s69, 1
        %s377 = smul.addr %s376, 2048
        %s378 = scalar_lea.vmem [#allocation6], %s377
        // Predicated region
        $region49: #{tpu_custom_call.1} parent=43 // pred_check
          %p379 = pneg %p82
        $region50: #{tpu_custom_call.1} parent=43 // pred_check_branch
          %381 = sbr.rel (%p379) target = $region52
        $region51: #{tpu_custom_call.1} parent=43 // pred_region
          %383 = dma.done %s375, 32768
        $region52: #{tpu_custom_call.1} parent=43 // pred_fallthru
          _
        // Predicated region
        $region53: #{tpu_custom_call.1} parent=43 // pred_check
          %p384 = pneg %p103
        $region54: #{tpu_custom_call.1} parent=43 // pred_check_branch
          %386 = sbr.rel (%p384) target = $region56
        $region55: #{tpu_custom_call.1} parent=43 // pred_region
          %388 = dma.done [#allocation7], 128
        $region56: #{tpu_custom_call.1} parent=43 // pred_fallthru
          _
        // Predicated region
        $region57: #{tpu_custom_call.1} parent=43 // pred_check
          %p389 = pneg %p124
        $region58: #{tpu_custom_call.1} parent=43 // pred_check_branch
          %391 = sbr.rel (%p389) target = $region60
        $region59: #{tpu_custom_call.1} parent=43 // pred_region
          %393 = dma.done [#allocation10], 1024
        $region60: #{tpu_custom_call.1} parent=43 // pred_fallthru
          _
        %s394 = sand.u32 %s27, 1
        %s395 = scalar_lea.sflag [#allocation4], %s394
        %s396 = sand.u32 %s143, 1
        %s397 = smul.addr %s396, 2048
        %s398 = scalar_lea.vmem [#allocation11], %s397
        // Predicated region
        $region61: #{tpu_custom_call.1} parent=43 // pred_check
          %p399 = pneg %p156
        $region62: #{tpu_custom_call.1} parent=43 // pred_check_branch
          %401 = sbr.rel (%p399) target = $region64
        $region63: #{tpu_custom_call.1} parent=43 // pred_region
          %403 = dma.done %s395, 32768
        $region64: #{tpu_custom_call.1} parent=43 // pred_fallthru
          _
        %s404 = sand.u32 %s27, 1
        %s405 = scalar_lea.sflag [#allocation7], %s404
        %s406 = sand.u32 %s175, 1
        %s407 = smul.addr %s406, 4
        %s408 = scalar_lea.vmem [#allocation12], %s407
        // Predicated region
        $region65: #{tpu_custom_call.1} parent=43 // pred_check
          %p409 = pneg %p188
        $region66: #{tpu_custom_call.1} parent=43 // pred_check_branch
          %411 = sbr.rel (%p409) target = $region68
        $region67: #{tpu_custom_call.1} parent=43 // pred_region
          %413 = dma.done %s405, 64
        $region68: #{tpu_custom_call.1} parent=43 // pred_fallthru
          _
        %s414 = sand.u32 %s27, 1
        %s415 = scalar_lea.sflag [#allocation4], %s414
        %s416 = sand.u32 %s39, 1
        %s417 = smul.addr %s416, 16
        %s418 = scalar_lea.vmem [#allocation3], %s417
        %p419 = pneg %p52
        %p420 = pneg %p49
        %s421 = sand.u32 %s27, 1
        %s422 = scalar_lea.sflag [#allocation7], %s421
        %s423 = sand.u32 %s69, 1
        %s424 = smul.addr %s423, 2048
        %s425 = scalar_lea.vmem [#allocation6], %s424
        %p426 = pneg %p82
        %p427 = pneg %p79
        %p428 = pneg %p103
        %p429 = pneg %p100
        %p430 = pneg %p124
        %p431 = pneg %p121
        %s432 = sand.u32 %s27, 1
        %s433 = scalar_lea.sflag [#allocation4], %s432
        %s434 = sand.u32 %s143, 1
        %s435 = smul.addr %s434, 2048
        %s436 = scalar_lea.vmem [#allocation11], %s435
        %p437 = pneg %p156
        %p438 = pneg %p153
        %s439 = sand.u32 %s27, 1
        %s440 = scalar_lea.sflag [#allocation7], %s439
        %s441 = sand.u32 %s175, 1
        %s442 = smul.addr %s441, 4
        %s443 = scalar_lea.vmem [#allocation12], %s442
        %p444 = pneg %p188
        %p445 = pneg %p185
        %p446 = pneg %p220
        %p447 = pneg %p217
        %s448 = sand.u32 %s207, 1
        %s449 = scalar_lea.sflag [#allocation5], %s448
        %s450 = sand.u32 %s207, 1
        %s451 = smul.addr %s450, 32
        %s452 = scalar_lea.vmem [#allocation13], %s451
        %p453 = scmp.lt.s32.totalorder %s27, 1
        %s454 = scalar_select %p453, %s27, 1
        %s455 = smul.u32 4, %s454
        %p456 = scmp.lt.s32.totalorder %s27, 1
        %s457 = scalar_select %p456, %s27, 1
        %s458 = smul.u32 64, %s457
        %s459 = ssub.s32 %s27, 2
        %p460 = scmp.gt.s32.totalorder %s459, 0
        %s461 = scalar_select %p460, %s459, 0
        %s462 = smul.u32 4, %s461
        %s463 = ssub.s32 %s27, 2
        %p464 = scmp.gt.s32.totalorder %s463, 0
        %s465 = scalar_select %p464, %s463, 0
        %s466 = smul.u32 4, %s465
        %s467 = ssub.s32 %s27, 2
        %p468 = scmp.gt.s32.totalorder %s467, 0
        %s469 = scalar_select %p468, %s467, 0
        %s470 = smul.u32 4, %s469
        %p471 = scmp.eq.s32.totalorder %s27, 0
        // Predicated region
        $region69: #{tpu_custom_call.1} parent=43 // pred_check
          %p472 = pneg %p471
        $region70: #{tpu_custom_call.1} parent=43 // pred_check_branch
          %474 = sbr.rel (%p472) target = $region72
        $region71: #{tpu_custom_call.1} parent=43 // pred_region
          %475 = vst [vmem:[#allocation2] sm:$0xff] 0.0
          %476 = vst [vmem:[#allocation2 + $0x8] sm:$0xff] 0.0
          %477 = vst [vmem:[#allocation2 + $0x10] sm:$0xff] 0.0
          %478 = vst [vmem:[#allocation2 + $0x18] sm:$0xff] 0.0
          %479 = vst [vmem:[#allocation2 + $0x20] sm:$0xff] 0.0
          %480 = vst [vmem:[#allocation2 + $0x28] sm:$0xff] 0.0
          %481 = vst [vmem:[#allocation2 + $0x30] sm:$0xff] 0.0
          %482 = vst [vmem:[#allocation2 + $0x38] sm:$0xff] 0.0
        $region72: #{tpu_custom_call.1} parent=43 // pred_fallthru
          _
        %p483 = scmp.lt.s32.totalorder %s27, 2
        // Predicated region
        $region73: #{tpu_custom_call.1} parent=43 // pred_check
          %p484 = pneg %p483
        $region74: #{tpu_custom_call.1} parent=43 // pred_check_branch
          %486 = sbr.rel (%p484) target = $region76
        $region75: #{tpu_custom_call.1} parent=43 // pred_region
          %v487 = vld [vmem:[#allocation2] sm:$0xff]
          %v488 = vld [vmem:[#allocation2 + $0x8] sm:$0xff]
          %v489 = vld [vmem:[#allocation2 + $0x10] sm:$0xff]
          %v490 = vld [vmem:[#allocation2 + $0x18] sm:$0xff]
          %v491 = vld [vmem:[#allocation2 + $0x20] sm:$0xff]
          %v492 = vld [vmem:[#allocation2 + $0x28] sm:$0xff]
          %v493 = vld [vmem:[#allocation2 + $0x30] sm:$0xff]
          %v494 = vld [vmem:[#allocation2 + $0x38] sm:$0xff]
          %v495 = vld [vmem:[%s368] sm:$0xff]
          %v496 = vld [vmem:[%s368 + $0x8] sm:$0xff]
          %v497 = vld [vmem:[%s378] sm:$0xff]
          %v498 = vld [vmem:[%s378 + $0x8] sm:$0xff]
          %v499 = vld [vmem:[%s378 + $0x10] sm:$0xff]
          %v500 = vld [vmem:[%s378 + $0x18] sm:$0xff]
          %v501 = vld [vmem:[%s378 + $0x20] sm:$0xff]
          %v502 = vld [vmem:[%s378 + $0x28] sm:$0xff]
          %v503 = vld [vmem:[%s378 + $0x30] sm:$0xff]
          %v504 = vld [vmem:[%s378 + $0x38] sm:$0xff]
          %v505 = vld [vmem:[%s378 + $0x40] sm:$0xff]
          %v506 = vld [vmem:[%s378 + $0x48] sm:$0xff]
          %v507 = vld [vmem:[%s378 + $0x50] sm:$0xff]
          %v508 = vld [vmem:[%s378 + $0x58] sm:$0xff]
          %v509 = vld [vmem:[%s378 + $0x60] sm:$0xff]
          %v510 = vld [vmem:[%s378 + $0x68] sm:$0xff]
          %v511 = vld [vmem:[%s378 + $0x70] sm:$0xff]
          %v512 = vld [vmem:[%s378 + $0x78] sm:$0xff]
          %v513 = vld [vmem:[%s378 + $0x80] sm:$0xff]
          %v514 = vld [vmem:[%s378 + $0x88] sm:$0xff]
          %v515 = vld [vmem:[%s378 + $0x90] sm:$0xff]
          %v516 = vld [vmem:[%s378 + $0x98] sm:$0xff]
          %v517 = vld [vmem:[%s378 + $0xa0] sm:$0xff]
          %v518 = vld [vmem:[%s378 + $0xa8] sm:$0xff]
          %v519 = vld [vmem:[%s378 + $0xb0] sm:$0xff]
          %v520 = vld [vmem:[%s378 + $0xb8] sm:$0xff]
          %v521 = vld [vmem:[%s378 + $0xc0] sm:$0xff]
          %v522 = vld [vmem:[%s378 + $0xc8] sm:$0xff]
          %v523 = vld [vmem:[%s378 + $0xd0] sm:$0xff]
          %v524 = vld [vmem:[%s378 + $0xd8] sm:$0xff]
          %v525 = vld [vmem:[%s378 + $0xe0] sm:$0xff]
          %v526 = vld [vmem:[%s378 + $0xe8] sm:$0xff]
          %v527 = vld [vmem:[%s378 + $0xf0] sm:$0xff]
          %v528 = vld [vmem:[%s378 + $0xf8] sm:$0xff]
          %v529 = vld [vmem:[%s378 + $0x100] sm:$0xff]
          %v530 = vld [vmem:[%s378 + $0x108] sm:$0xff]
          %v531 = vld [vmem:[%s378 + $0x110] sm:$0xff]
          %v532 = vld [vmem:[%s378 + $0x118] sm:$0xff]
          %v533 = vld [vmem:[%s378 + $0x120] sm:$0xff]
          %v534 = vld [vmem:[%s378 + $0x128] sm:$0xff]
          %v535 = vld [vmem:[%s378 + $0x130] sm:$0xff]
          %v536 = vld [vmem:[%s378 + $0x138] sm:$0xff]
          %v537 = vld [vmem:[%s378 + $0x140] sm:$0xff]
          %v538 = vld [vmem:[%s378 + $0x148] sm:$0xff]
          %v539 = vld [vmem:[%s378 + $0x150] sm:$0xff]
          %v540 = vld [vmem:[%s378 + $0x158] sm:$0xff]
          %v541 = vld [vmem:[%s378 + $0x160] sm:$0xff]
          %v542 = vld [vmem:[%s378 + $0x168] sm:$0xff]
          %v543 = vld [vmem:[%s378 + $0x170] sm:$0xff]
          %v544 = vld [vmem:[%s378 + $0x178] sm:$0xff]
          %v545 = vld [vmem:[%s378 + $0x180] sm:$0xff]
          %v546 = vld [vmem:[%s378 + $0x188] sm:$0xff]
          %v547 = vld [vmem:[%s378 + $0x190] sm:$0xff]
          %v548 = vld [vmem:[%s378 + $0x198] sm:$0xff]
          %v549 = vld [vmem:[%s378 + $0x1a0] sm:$0xff]
          %v550 = vld [vmem:[%s378 + $0x1a8] sm:$0xff]
          %v551 = vld [vmem:[%s378 + $0x1b0] sm:$0xff]
          %v552 = vld [vmem:[%s378 + $0x1b8] sm:$0xff]
          %v553 = vld [vmem:[%s378 + $0x1c0] sm:$0xff]
          %v554 = vld [vmem:[%s378 + $0x1c8] sm:$0xff]
          %v555 = vld [vmem:[%s378 + $0x1d0] sm:$0xff]
          %v556 = vld [vmem:[%s378 + $0x1d8] sm:$0xff]
          %v557 = vld [vmem:[%s378 + $0x1e0] sm:$0xff]
          %v558 = vld [vmem:[%s378 + $0x1e8] sm:$0xff]
          %v559 = vld [vmem:[%s378 + $0x1f0] sm:$0xff]
          %v560 = vld [vmem:[%s378 + $0x1f8] sm:$0xff]
          %v561 = vld [vmem:[%s378 + $0x200] sm:$0xff]
          %v562 = vld [vmem:[%s378 + $0x208] sm:$0xff]
          %v563 = vld [vmem:[%s378 + $0x210] sm:$0xff]
          %v564 = vld [vmem:[%s378 + $0x218] sm:$0xff]
          %v565 = vld [vmem:[%s378 + $0x220] sm:$0xff]
          %v566 = vld [vmem:[%s378 + $0x228] sm:$0xff]
          %v567 = vld [vmem:[%s378 + $0x230] sm:$0xff]
          %v568 = vld [vmem:[%s378 + $0x238] sm:$0xff]
          %v569 = vld [vmem:[%s378 + $0x240] sm:$0xff]
          %v570 = vld [vmem:[%s378 + $0x248] sm:$0xff]
          %v571 = vld [vmem:[%s378 + $0x250] sm:$0xff]
          %v572 = vld [vmem:[%s378 + $0x258] sm:$0xff]
          %v573 = vld [vmem:[%s378 + $0x260] sm:$0xff]
          %v574 = vld [vmem:[%s378 + $0x268] sm:$0xff]
          %v575 = vld [vmem:[%s378 + $0x270] sm:$0xff]
          %v576 = vld [vmem:[%s378 + $0x278] sm:$0xff]
          %v577 = vld [vmem:[%s378 + $0x280] sm:$0xff]
          %v578 = vld [vmem:[%s378 + $0x288] sm:$0xff]
          %v579 = vld [vmem:[%s378 + $0x290] sm:$0xff]
          %v580 = vld [vmem:[%s378 + $0x298] sm:$0xff]
          %v581 = vld [vmem:[%s378 + $0x2a0] sm:$0xff]
          %v582 = vld [vmem:[%s378 + $0x2a8] sm:$0xff]
          %v583 = vld [vmem:[%s378 + $0x2b0] sm:$0xff]
          %v584 = vld [vmem:[%s378 + $0x2b8] sm:$0xff]
          %v585 = vld [vmem:[%s378 + $0x2c0] sm:$0xff]
          %v586 = vld [vmem:[%s378 + $0x2c8] sm:$0xff]
          %v587 = vld [vmem:[%s378 + $0x2d0] sm:$0xff]
          %v588 = vld [vmem:[%s378 + $0x2d8] sm:$0xff]
          %v589 = vld [vmem:[%s378 + $0x2e0] sm:$0xff]
          %v590 = vld [vmem:[%s378 + $0x2e8] sm:$0xff]
          %v591 = vld [vmem:[%s378 + $0x2f0] sm:$0xff]
          %v592 = vld [vmem:[%s378 + $0x2f8] sm:$0xff]
          %v593 = vld [vmem:[%s378 + $0x300] sm:$0xff]
          %v594 = vld [vmem:[%s378 + $0x308] sm:$0xff]
          %v595 = vld [vmem:[%s378 + $0x310] sm:$0xff]
          %v596 = vld [vmem:[%s378 + $0x318] sm:$0xff]
          %v597 = vld [vmem:[%s378 + $0x320] sm:$0xff]
          %v598 = vld [vmem:[%s378 + $0x328] sm:$0xff]
          %v599 = vld [vmem:[%s378 + $0x330] sm:$0xff]
          %v600 = vld [vmem:[%s378 + $0x338] sm:$0xff]
          %v601 = vld [vmem:[%s378 + $0x340] sm:$0xff]
          %v602 = vld [vmem:[%s378 + $0x348] sm:$0xff]
          %v603 = vld [vmem:[%s378 + $0x350] sm:$0xff]
          %v604 = vld [vmem:[%s378 + $0x358] sm:$0xff]
          %v605 = vld [vmem:[%s378 + $0x360] sm:$0xff]
          %v606 = vld [vmem:[%s378 + $0x368] sm:$0xff]
          %v607 = vld [vmem:[%s378 + $0x370] sm:$0xff]
          %v608 = vld [vmem:[%s378 + $0x378] sm:$0xff]
          %v609 = vld [vmem:[%s378 + $0x380] sm:$0xff]
          %v610 = vld [vmem:[%s378 + $0x388] sm:$0xff]
          %v611 = vld [vmem:[%s378 + $0x390] sm:$0xff]
          %v612 = vld [vmem:[%s378 + $0x398] sm:$0xff]
          %v613 = vld [vmem:[%s378 + $0x3a0] sm:$0xff]
          %v614 = vld [vmem:[%s378 + $0x3a8] sm:$0xff]
          %v615 = vld [vmem:[%s378 + $0x3b0] sm:$0xff]
          %v616 = vld [vmem:[%s378 + $0x3b8] sm:$0xff]
          %v617 = vld [vmem:[%s378 + $0x3c0] sm:$0xff]
          %v618 = vld [vmem:[%s378 + $0x3c8] sm:$0xff]
          %v619 = vld [vmem:[%s378 + $0x3d0] sm:$0xff]
          %v620 = vld [vmem:[%s378 + $0x3d8] sm:$0xff]
          %v621 = vld [vmem:[%s378 + $0x3e0] sm:$0xff]
          %v622 = vld [vmem:[%s378 + $0x3e8] sm:$0xff]
          %v623 = vld [vmem:[%s378 + $0x3f0] sm:$0xff]
          %v624 = vld [vmem:[%s378 + $0x3f8] sm:$0xff]
          %v625 = vld [vmem:[%s378 + $0x400] sm:$0xff]
          %v626 = vld [vmem:[%s378 + $0x408] sm:$0xff]
          %v627 = vld [vmem:[%s378 + $0x410] sm:$0xff]
          %v628 = vld [vmem:[%s378 + $0x418] sm:$0xff]
          %v629 = vld [vmem:[%s378 + $0x420] sm:$0xff]
          %v630 = vld [vmem:[%s378 + $0x428] sm:$0xff]
          %v631 = vld [vmem:[%s378 + $0x430] sm:$0xff]
          %v632 = vld [vmem:[%s378 + $0x438] sm:$0xff]
          %v633 = vld [vmem:[%s378 + $0x440] sm:$0xff]
          %v634 = vld [vmem:[%s378 + $0x448] sm:$0xff]
          %v635 = vld [vmem:[%s378 + $0x450] sm:$0xff]
          %v636 = vld [vmem:[%s378 + $0x458] sm:$0xff]
          %v637 = vld [vmem:[%s378 + $0x460] sm:$0xff]
          %v638 = vld [vmem:[%s378 + $0x468] sm:$0xff]
          %v639 = vld [vmem:[%s378 + $0x470] sm:$0xff]
          %v640 = vld [vmem:[%s378 + $0x478] sm:$0xff]
          %v641 = vld [vmem:[%s378 + $0x480] sm:$0xff]
          %v642 = vld [vmem:[%s378 + $0x488] sm:$0xff]
          %v643 = vld [vmem:[%s378 + $0x490] sm:$0xff]
          %v644 = vld [vmem:[%s378 + $0x498] sm:$0xff]
          %v645 = vld [vmem:[%s378 + $0x4a0] sm:$0xff]
          %v646 = vld [vmem:[%s378 + $0x4a8] sm:$0xff]
          %v647 = vld [vmem:[%s378 + $0x4b0] sm:$0xff]
          %v648 = vld [vmem:[%s378 + $0x4b8] sm:$0xff]
          %v649 = vld [vmem:[%s378 + $0x4c0] sm:$0xff]
          %v650 = vld [vmem:[%s378 + $0x4c8] sm:$0xff]
          %v651 = vld [vmem:[%s378 + $0x4d0] sm:$0xff]
          %v652 = vld [vmem:[%s378 + $0x4d8] sm:$0xff]
          %v653 = vld [vmem:[%s378 + $0x4e0] sm:$0xff]
          %v654 = vld [vmem:[%s378 + $0x4e8] sm:$0xff]
          %v655 = vld [vmem:[%s378 + $0x4f0] sm:$0xff]
          %v656 = vld [vmem:[%s378 + $0x4f8] sm:$0xff]
          %v657 = vld [vmem:[%s378 + $0x500] sm:$0xff]
          %v658 = vld [vmem:[%s378 + $0x508] sm:$0xff]
          %v659 = vld [vmem:[%s378 + $0x510] sm:$0xff]
          %v660 = vld [vmem:[%s378 + $0x518] sm:$0xff]
          %v661 = vld [vmem:[%s378 + $0x520] sm:$0xff]
          %v662 = vld [vmem:[%s378 + $0x528] sm:$0xff]
          %v663 = vld [vmem:[%s378 + $0x530] sm:$0xff]
          %v664 = vld [vmem:[%s378 + $0x538] sm:$0xff]
          %v665 = vld [vmem:[%s378 + $0x540] sm:$0xff]
          %v666 = vld [vmem:[%s378 + $0x548] sm:$0xff]
          %v667 = vld [vmem:[%s378 + $0x550] sm:$0xff]
          %v668 = vld [vmem:[%s378 + $0x558] sm:$0xff]
          %v669 = vld [vmem:[%s378 + $0x560] sm:$0xff]
          %v670 = vld [vmem:[%s378 + $0x568] sm:$0xff]
          %v671 = vld [vmem:[%s378 + $0x570] sm:$0xff]
          %v672 = vld [vmem:[%s378 + $0x578] sm:$0xff]
          %v673 = vld [vmem:[%s378 + $0x580] sm:$0xff]
          %v674 = vld [vmem:[%s378 + $0x588] sm:$0xff]
          %v675 = vld [vmem:[%s378 + $0x590] sm:$0xff]
          %v676 = vld [vmem:[%s378 + $0x598] sm:$0xff]
          %v677 = vld [vmem:[%s378 + $0x5a0] sm:$0xff]
          %v678 = vld [vmem:[%s378 + $0x5a8] sm:$0xff]
          %v679 = vld [vmem:[%s378 + $0x5b0] sm:$0xff]
          %v680 = vld [vmem:[%s378 + $0x5b8] sm:$0xff]
          %v681 = vld [vmem:[%s378 + $0x5c0] sm:$0xff]
          %v682 = vld [vmem:[%s378 + $0x5c8] sm:$0xff]
          %v683 = vld [vmem:[%s378 + $0x5d0] sm:$0xff]
          %v684 = vld [vmem:[%s378 + $0x5d8] sm:$0xff]
          %v685 = vld [vmem:[%s378 + $0x5e0] sm:$0xff]
          %v686 = vld [vmem:[%s378 + $0x5e8] sm:$0xff]
          %v687 = vld [vmem:[%s378 + $0x5f0] sm:$0xff]
          %v688 = vld [vmem:[%s378 + $0x5f8] sm:$0xff]
          %v689 = vld [vmem:[%s378 + $0x600] sm:$0xff]
          %v690 = vld [vmem:[%s378 + $0x608] sm:$0xff]
          %v691 = vld [vmem:[%s378 + $0x610] sm:$0xff]
          %v692 = vld [vmem:[%s378 + $0x618] sm:$0xff]
          %v693 = vld [vmem:[%s378 + $0x620] sm:$0xff]
          %v694 = vld [vmem:[%s378 + $0x628] sm:$0xff]
          %v695 = vld [vmem:[%s378 + $0x630] sm:$0xff]
          %v696 = vld [vmem:[%s378 + $0x638] sm:$0xff]
          %v697 = vld [vmem:[%s378 + $0x640] sm:$0xff]
          %v698 = vld [vmem:[%s378 + $0x648] sm:$0xff]
          %v699 = vld [vmem:[%s378 + $0x650] sm:$0xff]
          %v700 = vld [vmem:[%s378 + $0x658] sm:$0xff]
          %v701 = vld [vmem:[%s378 + $0x660] sm:$0xff]
          %v702 = vld [vmem:[%s378 + $0x668] sm:$0xff]
          %v703 = vld [vmem:[%s378 + $0x670] sm:$0xff]
          %v704 = vld [vmem:[%s378 + $0x678] sm:$0xff]
          %v705 = vld [vmem:[%s378 + $0x680] sm:$0xff]
          %v706 = vld [vmem:[%s378 + $0x688] sm:$0xff]
          %v707 = vld [vmem:[%s378 + $0x690] sm:$0xff]
          %v708 = vld [vmem:[%s378 + $0x698] sm:$0xff]
          %v709 = vld [vmem:[%s378 + $0x6a0] sm:$0xff]
          %v710 = vld [vmem:[%s378 + $0x6a8] sm:$0xff]
          %v711 = vld [vmem:[%s378 + $0x6b0] sm:$0xff]
          %v712 = vld [vmem:[%s378 + $0x6b8] sm:$0xff]
          %v713 = vld [vmem:[%s378 + $0x6c0] sm:$0xff]
          %v714 = vld [vmem:[%s378 + $0x6c8] sm:$0xff]
          %v715 = vld [vmem:[%s378 + $0x6d0] sm:$0xff]
          %v716 = vld [vmem:[%s378 + $0x6d8] sm:$0xff]
          %v717 = vld [vmem:[%s378 + $0x6e0] sm:$0xff]
          %v718 = vld [vmem:[%s378 + $0x6e8] sm:$0xff]
          %v719 = vld [vmem:[%s378 + $0x6f0] sm:$0xff]
          %v720 = vld [vmem:[%s378 + $0x6f8] sm:$0xff]
          %v721 = vld [vmem:[%s378 + $0x700] sm:$0xff]
          %v722 = vld [vmem:[%s378 + $0x708] sm:$0xff]
          %v723 = vld [vmem:[%s378 + $0x710] sm:$0xff]
          %v724 = vld [vmem:[%s378 + $0x718] sm:$0xff]
          %v725 = vld [vmem:[%s378 + $0x720] sm:$0xff]
          %v726 = vld [vmem:[%s378 + $0x728] sm:$0xff]
          %v727 = vld [vmem:[%s378 + $0x730] sm:$0xff]
          %v728 = vld [vmem:[%s378 + $0x738] sm:$0xff]
          %v729 = vld [vmem:[%s378 + $0x740] sm:$0xff]
          %v730 = vld [vmem:[%s378 + $0x748] sm:$0xff]
          %v731 = vld [vmem:[%s378 + $0x750] sm:$0xff]
          %v732 = vld [vmem:[%s378 + $0x758] sm:$0xff]
          %v733 = vld [vmem:[%s378 + $0x760] sm:$0xff]
          %v734 = vld [vmem:[%s378 + $0x768] sm:$0xff]
          %v735 = vld [vmem:[%s378 + $0x770] sm:$0xff]
          %v736 = vld [vmem:[%s378 + $0x778] sm:$0xff]
          %v737 = vld [vmem:[%s378 + $0x780] sm:$0xff]
          %v738 = vld [vmem:[%s378 + $0x788] sm:$0xff]
          %v739 = vld [vmem:[%s378 + $0x790] sm:$0xff]
          %v740 = vld [vmem:[%s378 + $0x798] sm:$0xff]
          %v741 = vld [vmem:[%s378 + $0x7a0] sm:$0xff]
          %v742 = vld [vmem:[%s378 + $0x7a8] sm:$0xff]
          %v743 = vld [vmem:[%s378 + $0x7b0] sm:$0xff]
          %v744 = vld [vmem:[%s378 + $0x7b8] sm:$0xff]
          %v745 = vld [vmem:[%s378 + $0x7c0] sm:$0xff]
          %v746 = vld [vmem:[%s378 + $0x7c8] sm:$0xff]
          %v747 = vld [vmem:[%s378 + $0x7d0] sm:$0xff]
          %v748 = vld [vmem:[%s378 + $0x7d8] sm:$0xff]
          %v749 = vld [vmem:[%s378 + $0x7e0] sm:$0xff]
          %v750 = vld [vmem:[%s378 + $0x7e8] sm:$0xff]
          %v751 = vld [vmem:[%s378 + $0x7f0] sm:$0xff]
          %v752 = vld [vmem:[%s378 + $0x7f8] sm:$0xff]
          %v755 = vunpack.c.l.b16 %v495
          %v756 = vunpack.c.h.b16 %v495
          %v757 = vunpack.c.l.b16 %v496
          %v758 = vunpack.c.h.b16 %v496
          %v759 = vpack.c.b16 %v755, %v755
          %v760 = vpack.c.b16 %v756, %v756
          %v761 = vpack.c.b16 %v757, %v757
          %v762 = vpack.c.b16 %v758, %v758
          %v1023 = vunpack.c.l.b16 %v497
          %v1024 = vunpack.c.h.b16 %v497
          %v1025 = vunpack.c.l.b16 %v498
          %v1026 = vunpack.c.h.b16 %v498
          %v1027 = vunpack.c.l.b16 %v499
          %v1028 = vunpack.c.h.b16 %v499
          %v1029 = vunpack.c.l.b16 %v500
          %v1030 = vunpack.c.h.b16 %v500
          %v1031 = vunpack.c.l.b16 %v501
          %v1032 = vunpack.c.h.b16 %v501
          %v1033 = vunpack.c.l.b16 %v502
          %v1034 = vunpack.c.h.b16 %v502
          %v1035 = vunpack.c.l.b16 %v503
          %v1036 = vunpack.c.h.b16 %v503
          %v1037 = vunpack.c.l.b16 %v504
          %v1038 = vunpack.c.h.b16 %v504
          %v1039 = vunpack.c.l.b16 %v505
          %v1040 = vunpack.c.h.b16 %v505
          %v1041 = vunpack.c.l.b16 %v506
          %v1042 = vunpack.c.h.b16 %v506
          %v1043 = vunpack.c.l.b16 %v507
          %v1044 = vunpack.c.h.b16 %v507
          %v1045 = vunpack.c.l.b16 %v508
          %v1046 = vunpack.c.h.b16 %v508
          %v1047 = vunpack.c.l.b16 %v509
          %v1048 = vunpack.c.h.b16 %v509
          %v1049 = vunpack.c.l.b16 %v510
          %v1050 = vunpack.c.h.b16 %v510
          %v1051 = vunpack.c.l.b16 %v511
          %v1052 = vunpack.c.h.b16 %v511
          %v1053 = vunpack.c.l.b16 %v512
          %v1054 = vunpack.c.h.b16 %v512
          %v1055 = vunpack.c.l.b16 %v513
          %v1056 = vunpack.c.h.b16 %v513
          %v1057 = vunpack.c.l.b16 %v514
          %v1058 = vunpack.c.h.b16 %v514
          %v1059 = vunpack.c.l.b16 %v515
          %v1060 = vunpack.c.h.b16 %v515
          %v1061 = vunpack.c.l.b16 %v516
          %v1062 = vunpack.c.h.b16 %v516
          %v1063 = vunpack.c.l.b16 %v517
          %v1064 = vunpack.c.h.b16 %v517
          %v1065 = vunpack.c.l.b16 %v518
          %v1066 = vunpack.c.h.b16 %v518
          %v1067 = vunpack.c.l.b16 %v519
          %v1068 = vunpack.c.h.b16 %v519
          %v1069 = vunpack.c.l.b16 %v520
          %v1070 = vunpack.c.h.b16 %v520
          %v1071 = vunpack.c.l.b16 %v521
          %v1072 = vunpack.c.h.b16 %v521
          %v1073 = vunpack.c.l.b16 %v522
          %v1074 = vunpack.c.h.b16 %v522
          %v1075 = vunpack.c.l.b16 %v523
          %v1076 = vunpack.c.h.b16 %v523
          %v1077 = vunpack.c.l.b16 %v524
          %v1078 = vunpack.c.h.b16 %v524
          %v1079 = vunpack.c.l.b16 %v525
          %v1080 = vunpack.c.h.b16 %v525
          %v1081 = vunpack.c.l.b16 %v526
          %v1082 = vunpack.c.h.b16 %v526
          %v1083 = vunpack.c.l.b16 %v527
          %v1084 = vunpack.c.h.b16 %v527
          %v1085 = vunpack.c.l.b16 %v528
          %v1086 = vunpack.c.h.b16 %v528
          %v1087 = vunpack.c.l.b16 %v529
          %v1088 = vunpack.c.h.b16 %v529
          %v1089 = vunpack.c.l.b16 %v530
          %v1090 = vunpack.c.h.b16 %v530
          %v1091 = vunpack.c.l.b16 %v531
          %v1092 = vunpack.c.h.b16 %v531
          %v1093 = vunpack.c.l.b16 %v532
          %v1094 = vunpack.c.h.b16 %v532
          %v1095 = vunpack.c.l.b16 %v533
          %v1096 = vunpack.c.h.b16 %v533
          %v1097 = vunpack.c.l.b16 %v534
          %v1098 = vunpack.c.h.b16 %v534
          %v1099 = vunpack.c.l.b16 %v535
          %v1100 = vunpack.c.h.b16 %v535
          %v1101 = vunpack.c.l.b16 %v536
          %v1102 = vunpack.c.h.b16 %v536
          %v1103 = vunpack.c.l.b16 %v537
          %v1104 = vunpack.c.h.b16 %v537
          %v1105 = vunpack.c.l.b16 %v538
          %v1106 = vunpack.c.h.b16 %v538
          %v1107 = vunpack.c.l.b16 %v539
          %v1108 = vunpack.c.h.b16 %v539
          %v1109 = vunpack.c.l.b16 %v540
          %v1110 = vunpack.c.h.b16 %v540
          %v1111 = vunpack.c.l.b16 %v541
          %v1112 = vunpack.c.h.b16 %v541
          %v1113 = vunpack.c.l.b16 %v542
          %v1114 = vunpack.c.h.b16 %v542
          %v1115 = vunpack.c.l.b16 %v543
          %v1116 = vunpack.c.h.b16 %v543
          %v1117 = vunpack.c.l.b16 %v544
          %v1118 = vunpack.c.h.b16 %v544
          %v1119 = vunpack.c.l.b16 %v545
          %v1120 = vunpack.c.h.b16 %v545
          %v1121 = vunpack.c.l.b16 %v546
          %v1122 = vunpack.c.h.b16 %v546
          %v1123 = vunpack.c.l.b16 %v547
          %v1124 = vunpack.c.h.b16 %v547
          %v1125 = vunpack.c.l.b16 %v548
          %v1126 = vunpack.c.h.b16 %v548
          %v1127 = vunpack.c.l.b16 %v549
          %v1128 = vunpack.c.h.b16 %v549
          %v1129 = vunpack.c.l.b16 %v550
          %v1130 = vunpack.c.h.b16 %v550
          %v1131 = vunpack.c.l.b16 %v551
          %v1132 = vunpack.c.h.b16 %v551
          %v1133 = vunpack.c.l.b16 %v552
          %v1134 = vunpack.c.h.b16 %v552
          %v1135 = vunpack.c.l.b16 %v553
          %v1136 = vunpack.c.h.b16 %v553
          %v1137 = vunpack.c.l.b16 %v554
          %v1138 = vunpack.c.h.b16 %v554
          %v1139 = vunpack.c.l.b16 %v555
          %v1140 = vunpack.c.h.b16 %v555
          %v1141 = vunpack.c.l.b16 %v556
          %v1142 = vunpack.c.h.b16 %v556
          %v1143 = vunpack.c.l.b16 %v557
          %v1144 = vunpack.c.h.b16 %v557
          %v1145 = vunpack.c.l.b16 %v558
          %v1146 = vunpack.c.h.b16 %v558
          %v1147 = vunpack.c.l.b16 %v559
          %v1148 = vunpack.c.h.b16 %v559
          %v1149 = vunpack.c.l.b16 %v560
          %v1150 = vunpack.c.h.b16 %v560
          %v1151 = vunpack.c.l.b16 %v561
          %v1152 = vunpack.c.h.b16 %v561
          %v1153 = vunpack.c.l.b16 %v562
          %v1154 = vunpack.c.h.b16 %v562
          %v1155 = vunpack.c.l.b16 %v563
          %v1156 = vunpack.c.h.b16 %v563
          %v1157 = vunpack.c.l.b16 %v564
          %v1158 = vunpack.c.h.b16 %v564
          %v1159 = vunpack.c.l.b16 %v565
          %v1160 = vunpack.c.h.b16 %v565
          %v1161 = vunpack.c.l.b16 %v566
          %v1162 = vunpack.c.h.b16 %v566
          %v1163 = vunpack.c.l.b16 %v567
          %v1164 = vunpack.c.h.b16 %v567
          %v1165 = vunpack.c.l.b16 %v568
          %v1166 = vunpack.c.h.b16 %v568
          %v1167 = vunpack.c.l.b16 %v569
          %v1168 = vunpack.c.h.b16 %v569
          %v1169 = vunpack.c.l.b16 %v570
          %v1170 = vunpack.c.h.b16 %v570
          %v1171 = vunpack.c.l.b16 %v571
          %v1172 = vunpack.c.h.b16 %v571
          %v1173 = vunpack.c.l.b16 %v572
          %v1174 = vunpack.c.h.b16 %v572
          %v1175 = vunpack.c.l.b16 %v573
          %v1176 = vunpack.c.h.b16 %v573
          %v1177 = vunpack.c.l.b16 %v574
          %v1178 = vunpack.c.h.b16 %v574
          %v1179 = vunpack.c.l.b16 %v575
          %v1180 = vunpack.c.h.b16 %v575
          %v1181 = vunpack.c.l.b16 %v576
          %v1182 = vunpack.c.h.b16 %v576
          %v1183 = vunpack.c.l.b16 %v577
          %v1184 = vunpack.c.h.b16 %v577
          %v1185 = vunpack.c.l.b16 %v578
          %v1186 = vunpack.c.h.b16 %v578
          %v1187 = vunpack.c.l.b16 %v579
          %v1188 = vunpack.c.h.b16 %v579
          %v1189 = vunpack.c.l.b16 %v580
          %v1190 = vunpack.c.h.b16 %v580
          %v1191 = vunpack.c.l.b16 %v581
          %v1192 = vunpack.c.h.b16 %v581
          %v1193 = vunpack.c.l.b16 %v582
          %v1194 = vunpack.c.h.b16 %v582
          %v1195 = vunpack.c.l.b16 %v583
          %v1196 = vunpack.c.h.b16 %v583
          %v1197 = vunpack.c.l.b16 %v584
          %v1198 = vunpack.c.h.b16 %v584
          %v1199 = vunpack.c.l.b16 %v585
          %v1200 = vunpack.c.h.b16 %v585
          %v1201 = vunpack.c.l.b16 %v586
          %v1202 = vunpack.c.h.b16 %v586
          %v1203 = vunpack.c.l.b16 %v587
          %v1204 = vunpack.c.h.b16 %v587
          %v1205 = vunpack.c.l.b16 %v588
          %v1206 = vunpack.c.h.b16 %v588
          %v1207 = vunpack.c.l.b16 %v589
          %v1208 = vunpack.c.h.b16 %v589
          %v1209 = vunpack.c.l.b16 %v590
          %v1210 = vunpack.c.h.b16 %v590
          %v1211 = vunpack.c.l.b16 %v591
          %v1212 = vunpack.c.h.b16 %v591
          %v1213 = vunpack.c.l.b16 %v592
          %v1214 = vunpack.c.h.b16 %v592
          %v1215 = vunpack.c.l.b16 %v593
          %v1216 = vunpack.c.h.b16 %v593
          %v1217 = vunpack.c.l.b16 %v594
          %v1218 = vunpack.c.h.b16 %v594
          %v1219 = vunpack.c.l.b16 %v595
          %v1220 = vunpack.c.h.b16 %v595
          %v1221 = vunpack.c.l.b16 %v596
          %v1222 = vunpack.c.h.b16 %v596
          %v1223 = vunpack.c.l.b16 %v597
          %v1224 = vunpack.c.h.b16 %v597
          %v1225 = vunpack.c.l.b16 %v598
          %v1226 = vunpack.c.h.b16 %v598
          %v1227 = vunpack.c.l.b16 %v599
          %v1228 = vunpack.c.h.b16 %v599
          %v1229 = vunpack.c.l.b16 %v600
          %v1230 = vunpack.c.h.b16 %v600
          %v1231 = vunpack.c.l.b16 %v601
          %v1232 = vunpack.c.h.b16 %v601
          %v1233 = vunpack.c.l.b16 %v602
          %v1234 = vunpack.c.h.b16 %v602
          %v1235 = vunpack.c.l.b16 %v603
          %v1236 = vunpack.c.h.b16 %v603
          %v1237 = vunpack.c.l.b16 %v604
          %v1238 = vunpack.c.h.b16 %v604
          %v1239 = vunpack.c.l.b16 %v605
          %v1240 = vunpack.c.h.b16 %v605
          %v1241 = vunpack.c.l.b16 %v606
          %v1242 = vunpack.c.h.b16 %v606
          %v1243 = vunpack.c.l.b16 %v607
          %v1244 = vunpack.c.h.b16 %v607
          %v1245 = vunpack.c.l.b16 %v608
          %v1246 = vunpack.c.h.b16 %v608
          %v1247 = vunpack.c.l.b16 %v609
          %v1248 = vunpack.c.h.b16 %v609
          %v1249 = vunpack.c.l.b16 %v610
          %v1250 = vunpack.c.h.b16 %v610
          %v1251 = vunpack.c.l.b16 %v611
          %v1252 = vunpack.c.h.b16 %v611
          %v1253 = vunpack.c.l.b16 %v612
          %v1254 = vunpack.c.h.b16 %v612
          %v1255 = vunpack.c.l.b16 %v613
          %v1256 = vunpack.c.h.b16 %v613
          %v1257 = vunpack.c.l.b16 %v614
          %v1258 = vunpack.c.h.b16 %v614
          %v1259 = vunpack.c.l.b16 %v615
          %v1260 = vunpack.c.h.b16 %v615
          %v1261 = vunpack.c.l.b16 %v616
          %v1262 = vunpack.c.h.b16 %v616
          %v1263 = vunpack.c.l.b16 %v617
          %v1264 = vunpack.c.h.b16 %v617
          %v1265 = vunpack.c.l.b16 %v618
          %v1266 = vunpack.c.h.b16 %v618
          %v1267 = vunpack.c.l.b16 %v619
          %v1268 = vunpack.c.h.b16 %v619
          %v1269 = vunpack.c.l.b16 %v620
          %v1270 = vunpack.c.h.b16 %v620
          %v1271 = vunpack.c.l.b16 %v621
          %v1272 = vunpack.c.h.b16 %v621
          %v1273 = vunpack.c.l.b16 %v622
          %v1274 = vunpack.c.h.b16 %v622
          %v1275 = vunpack.c.l.b16 %v623
          %v1276 = vunpack.c.h.b16 %v623
          %v1277 = vunpack.c.l.b16 %v624
          %v1278 = vunpack.c.h.b16 %v624
          %v1279 = vunpack.c.l.b16 %v625
          %v1280 = vunpack.c.h.b16 %v625
          %v1281 = vunpack.c.l.b16 %v626
          %v1282 = vunpack.c.h.b16 %v626
          %v1283 = vunpack.c.l.b16 %v627
          %v1284 = vunpack.c.h.b16 %v627
          %v1285 = vunpack.c.l.b16 %v628
          %v1286 = vunpack.c.h.b16 %v628
          %v1287 = vunpack.c.l.b16 %v629
          %v1288 = vunpack.c.h.b16 %v629
          %v1289 = vunpack.c.l.b16 %v630
          %v1290 = vunpack.c.h.b16 %v630
          %v1291 = vunpack.c.l.b16 %v631
          %v1292 = vunpack.c.h.b16 %v631
          %v1293 = vunpack.c.l.b16 %v632
          %v1294 = vunpack.c.h.b16 %v632
          %v1295 = vunpack.c.l.b16 %v633
          %v1296 = vunpack.c.h.b16 %v633
          %v1297 = vunpack.c.l.b16 %v634
          %v1298 = vunpack.c.h.b16 %v634
          %v1299 = vunpack.c.l.b16 %v635
          %v1300 = vunpack.c.h.b16 %v635
          %v1301 = vunpack.c.l.b16 %v636
          %v1302 = vunpack.c.h.b16 %v636
          %v1303 = vunpack.c.l.b16 %v637
          %v1304 = vunpack.c.h.b16 %v637
          %v1305 = vunpack.c.l.b16 %v638
          %v1306 = vunpack.c.h.b16 %v638
          %v1307 = vunpack.c.l.b16 %v639
          %v1308 = vunpack.c.h.b16 %v639
          %v1309 = vunpack.c.l.b16 %v640
          %v1310 = vunpack.c.h.b16 %v640
          %v1311 = vunpack.c.l.b16 %v641
          %v1312 = vunpack.c.h.b16 %v641
          %v1313 = vunpack.c.l.b16 %v642
          %v1314 = vunpack.c.h.b16 %v642
          %v1315 = vunpack.c.l.b16 %v643
          %v1316 = vunpack.c.h.b16 %v643
          %v1317 = vunpack.c.l.b16 %v644
          %v1318 = vunpack.c.h.b16 %v644
          %v1319 = vunpack.c.l.b16 %v645
          %v1320 = vunpack.c.h.b16 %v645
          %v1321 = vunpack.c.l.b16 %v646
          %v1322 = vunpack.c.h.b16 %v646
          %v1323 = vunpack.c.l.b16 %v647
          %v1324 = vunpack.c.h.b16 %v647
          %v1325 = vunpack.c.l.b16 %v648
          %v1326 = vunpack.c.h.b16 %v648
          %v1327 = vunpack.c.l.b16 %v649
          %v1328 = vunpack.c.h.b16 %v649
          %v1329 = vunpack.c.l.b16 %v650
          %v1330 = vunpack.c.h.b16 %v650
          %v1331 = vunpack.c.l.b16 %v651
          %v1332 = vunpack.c.h.b16 %v651
          %v1333 = vunpack.c.l.b16 %v652
          %v1334 = vunpack.c.h.b16 %v652
          %v1335 = vunpack.c.l.b16 %v653
          %v1336 = vunpack.c.h.b16 %v653
          %v1337 = vunpack.c.l.b16 %v654
          %v1338 = vunpack.c.h.b16 %v654
          %v1339 = vunpack.c.l.b16 %v655
          %v1340 = vunpack.c.h.b16 %v655
          %v1341 = vunpack.c.l.b16 %v656
          %v1342 = vunpack.c.h.b16 %v656
          %v1343 = vunpack.c.l.b16 %v657
          %v1344 = vunpack.c.h.b16 %v657
          %v1345 = vunpack.c.l.b16 %v658
          %v1346 = vunpack.c.h.b16 %v658
          %v1347 = vunpack.c.l.b16 %v659
          %v1348 = vunpack.c.h.b16 %v659
          %v1349 = vunpack.c.l.b16 %v660
          %v1350 = vunpack.c.h.b16 %v660
          %v1351 = vunpack.c.l.b16 %v661
          %v1352 = vunpack.c.h.b16 %v661
          %v1353 = vunpack.c.l.b16 %v662
          %v1354 = vunpack.c.h.b16 %v662
          %v1355 = vunpack.c.l.b16 %v663
          %v1356 = vunpack.c.h.b16 %v663
          %v1357 = vunpack.c.l.b16 %v664
          %v1358 = vunpack.c.h.b16 %v664
          %v1359 = vunpack.c.l.b16 %v665
          %v1360 = vunpack.c.h.b16 %v665
          %v1361 = vunpack.c.l.b16 %v666
          %v1362 = vunpack.c.h.b16 %v666
          %v1363 = vunpack.c.l.b16 %v667
          %v1364 = vunpack.c.h.b16 %v667
          %v1365 = vunpack.c.l.b16 %v668
          %v1366 = vunpack.c.h.b16 %v668
          %v1367 = vunpack.c.l.b16 %v669
          %v1368 = vunpack.c.h.b16 %v669
          %v1369 = vunpack.c.l.b16 %v670
          %v1370 = vunpack.c.h.b16 %v670
          %v1371 = vunpack.c.l.b16 %v671
          %v1372 = vunpack.c.h.b16 %v671
          %v1373 = vunpack.c.l.b16 %v672
          %v1374 = vunpack.c.h.b16 %v672
          %v1375 = vunpack.c.l.b16 %v673
          %v1376 = vunpack.c.h.b16 %v673
          %v1377 = vunpack.c.l.b16 %v674
          %v1378 = vunpack.c.h.b16 %v674
          %v1379 = vunpack.c.l.b16 %v675
          %v1380 = vunpack.c.h.b16 %v675
          %v1381 = vunpack.c.l.b16 %v676
          %v1382 = vunpack.c.h.b16 %v676
          %v1383 = vunpack.c.l.b16 %v677
          %v1384 = vunpack.c.h.b16 %v677
          %v1385 = vunpack.c.l.b16 %v678
          %v1386 = vunpack.c.h.b16 %v678
          %v1387 = vunpack.c.l.b16 %v679
          %v1388 = vunpack.c.h.b16 %v679
          %v1389 = vunpack.c.l.b16 %v680
          %v1390 = vunpack.c.h.b16 %v680
          %v1391 = vunpack.c.l.b16 %v681
          %v1392 = vunpack.c.h.b16 %v681
          %v1393 = vunpack.c.l.b16 %v682
          %v1394 = vunpack.c.h.b16 %v682
          %v1395 = vunpack.c.l.b16 %v683
          %v1396 = vunpack.c.h.b16 %v683
          %v1397 = vunpack.c.l.b16 %v684
          %v1398 = vunpack.c.h.b16 %v684
          %v1399 = vunpack.c.l.b16 %v685
          %v1400 = vunpack.c.h.b16 %v685
          %v1401 = vunpack.c.l.b16 %v686
          %v1402 = vunpack.c.h.b16 %v686
          %v1403 = vunpack.c.l.b16 %v687
          %v1404 = vunpack.c.h.b16 %v687
          %v1405 = vunpack.c.l.b16 %v688
          %v1406 = vunpack.c.h.b16 %v688
          %v1407 = vunpack.c.l.b16 %v689
          %v1408 = vunpack.c.h.b16 %v689
          %v1409 = vunpack.c.l.b16 %v690
          %v1410 = vunpack.c.h.b16 %v690
          %v1411 = vunpack.c.l.b16 %v691
          %v1412 = vunpack.c.h.b16 %v691
          %v1413 = vunpack.c.l.b16 %v692
          %v1414 = vunpack.c.h.b16 %v692
          %v1415 = vunpack.c.l.b16 %v693
          %v1416 = vunpack.c.h.b16 %v693
          %v1417 = vunpack.c.l.b16 %v694
          %v1418 = vunpack.c.h.b16 %v694
          %v1419 = vunpack.c.l.b16 %v695
          %v1420 = vunpack.c.h.b16 %v695
          %v1421 = vunpack.c.l.b16 %v696
          %v1422 = vunpack.c.h.b16 %v696
          %v1423 = vunpack.c.l.b16 %v697
          %v1424 = vunpack.c.h.b16 %v697
          %v1425 = vunpack.c.l.b16 %v698
          %v1426 = vunpack.c.h.b16 %v698
          %v1427 = vunpack.c.l.b16 %v699
          %v1428 = vunpack.c.h.b16 %v699
          %v1429 = vunpack.c.l.b16 %v700
          %v1430 = vunpack.c.h.b16 %v700
          %v1431 = vunpack.c.l.b16 %v701
          %v1432 = vunpack.c.h.b16 %v701
          %v1433 = vunpack.c.l.b16 %v702
          %v1434 = vunpack.c.h.b16 %v702
          %v1435 = vunpack.c.l.b16 %v703
          %v1436 = vunpack.c.h.b16 %v703
          %v1437 = vunpack.c.l.b16 %v704
          %v1438 = vunpack.c.h.b16 %v704
          %v1439 = vunpack.c.l.b16 %v705
          %v1440 = vunpack.c.h.b16 %v705
          %v1441 = vunpack.c.l.b16 %v706
          %v1442 = vunpack.c.h.b16 %v706
          %v1443 = vunpack.c.l.b16 %v707
          %v1444 = vunpack.c.h.b16 %v707
          %v1445 = vunpack.c.l.b16 %v708
          %v1446 = vunpack.c.h.b16 %v708
          %v1447 = vunpack.c.l.b16 %v709
          %v1448 = vunpack.c.h.b16 %v709
          %v1449 = vunpack.c.l.b16 %v710
          %v1450 = vunpack.c.h.b16 %v710
          %v1451 = vunpack.c.l.b16 %v711
          %v1452 = vunpack.c.h.b16 %v711
          %v1453 = vunpack.c.l.b16 %v712
          %v1454 = vunpack.c.h.b16 %v712
          %v1455 = vunpack.c.l.b16 %v713
          %v1456 = vunpack.c.h.b16 %v713
          %v1457 = vunpack.c.l.b16 %v714
          %v1458 = vunpack.c.h.b16 %v714
          %v1459 = vunpack.c.l.b16 %v715
          %v1460 = vunpack.c.h.b16 %v715
          %v1461 = vunpack.c.l.b16 %v716
          %v1462 = vunpack.c.h.b16 %v716
          %v1463 = vunpack.c.l.b16 %v717
          %v1464 = vunpack.c.h.b16 %v717
          %v1465 = vunpack.c.l.b16 %v718
          %v1466 = vunpack.c.h.b16 %v718
          %v1467 = vunpack.c.l.b16 %v719
          %v1468 = vunpack.c.h.b16 %v719
          %v1469 = vunpack.c.l.b16 %v720
          %v1470 = vunpack.c.h.b16 %v720
          %v1471 = vunpack.c.l.b16 %v721
          %v1472 = vunpack.c.h.b16 %v721
          %v1473 = vunpack.c.l.b16 %v722
          %v1474 = vunpack.c.h.b16 %v722
          %v1475 = vunpack.c.l.b16 %v723
          %v1476 = vunpack.c.h.b16 %v723
          %v1477 = vunpack.c.l.b16 %v724
          %v1478 = vunpack.c.h.b16 %v724
          %v1479 = vunpack.c.l.b16 %v725
          %v1480 = vunpack.c.h.b16 %v725
          %v1481 = vunpack.c.l.b16 %v726
          %v1482 = vunpack.c.h.b16 %v726
          %v1483 = vunpack.c.l.b16 %v727
          %v1484 = vunpack.c.h.b16 %v727
          %v1485 = vunpack.c.l.b16 %v728
          %v1486 = vunpack.c.h.b16 %v728
          %v1487 = vunpack.c.l.b16 %v729
          %v1488 = vunpack.c.h.b16 %v729
          %v1489 = vunpack.c.l.b16 %v730
          %v1490 = vunpack.c.h.b16 %v730
          %v1491 = vunpack.c.l.b16 %v731
          %v1492 = vunpack.c.h.b16 %v731
          %v1493 = vunpack.c.l.b16 %v732
          %v1494 = vunpack.c.h.b16 %v732
          %v1495 = vunpack.c.l.b16 %v733
          %v1496 = vunpack.c.h.b16 %v733
          %v1497 = vunpack.c.l.b16 %v734
          %v1498 = vunpack.c.h.b16 %v734
          %v1499 = vunpack.c.l.b16 %v735
          %v1500 = vunpack.c.h.b16 %v735
          %v1501 = vunpack.c.l.b16 %v736
          %v1502 = vunpack.c.h.b16 %v736
          %v1503 = vunpack.c.l.b16 %v737
          %v1504 = vunpack.c.h.b16 %v737
          %v1505 = vunpack.c.l.b16 %v738
          %v1506 = vunpack.c.h.b16 %v738
          %v1507 = vunpack.c.l.b16 %v739
          %v1508 = vunpack.c.h.b16 %v739
          %v1509 = vunpack.c.l.b16 %v740
          %v1510 = vunpack.c.h.b16 %v740
          %v1511 = vunpack.c.l.b16 %v741
          %v1512 = vunpack.c.h.b16 %v741
          %v1513 = vunpack.c.l.b16 %v742
          %v1514 = vunpack.c.h.b16 %v742
          %v1515 = vunpack.c.l.b16 %v743
          %v1516 = vunpack.c.h.b16 %v743
          %v1517 = vunpack.c.l.b16 %v744
          %v1518 = vunpack.c.h.b16 %v744
          %v1519 = vunpack.c.l.b16 %v745
          %v1520 = vunpack.c.h.b16 %v745
          %v1521 = vunpack.c.l.b16 %v746
          %v1522 = vunpack.c.h.b16 %v746
          %v1523 = vunpack.c.l.b16 %v747
          %v1524 = vunpack.c.h.b16 %v747
          %v1525 = vunpack.c.l.b16 %v748
          %v1526 = vunpack.c.h.b16 %v748
          %v1527 = vunpack.c.l.b16 %v749
          %v1528 = vunpack.c.h.b16 %v749
          %v1529 = vunpack.c.l.b16 %v750
          %v1530 = vunpack.c.h.b16 %v750
          %v1531 = vunpack.c.l.b16 %v751
          %v1532 = vunpack.c.h.b16 %v751
          %v1533 = vunpack.c.l.b16 %v752
          %v1534 = vunpack.c.h.b16 %v752
          %v1535 = vpack.c.b16 %v1031, %v1023
          %v1536 = vpack.c.b16 %v1032, %v1024
          %v1537 = vpack.c.b16 %v1033, %v1025
          %v1538 = vpack.c.b16 %v1034, %v1026
          %v1539 = vpack.c.b16 %v1035, %v1027
          %v1540 = vpack.c.b16 %v1036, %v1028
          %v1541 = vpack.c.b16 %v1037, %v1029
          %v1542 = vpack.c.b16 %v1038, %v1030
          %v1543 = vpack.c.b16 %v1047, %v1039
          %v1544 = vpack.c.b16 %v1048, %v1040
          %v1545 = vpack.c.b16 %v1049, %v1041
          %v1546 = vpack.c.b16 %v1050, %v1042
          %v1547 = vpack.c.b16 %v1051, %v1043
          %v1548 = vpack.c.b16 %v1052, %v1044
          %v1549 = vpack.c.b16 %v1053, %v1045
          %v1550 = vpack.c.b16 %v1054, %v1046
          %v1551 = vpack.c.b16 %v1063, %v1055
          %v1552 = vpack.c.b16 %v1064, %v1056
          %v1553 = vpack.c.b16 %v1065, %v1057
          %v1554 = vpack.c.b16 %v1066, %v1058
          %v1555 = vpack.c.b16 %v1067, %v1059
          %v1556 = vpack.c.b16 %v1068, %v1060
          %v1557 = vpack.c.b16 %v1069, %v1061
          %v1558 = vpack.c.b16 %v1070, %v1062
          %v1559 = vpack.c.b16 %v1079, %v1071
          %v1560 = vpack.c.b16 %v1080, %v1072
          %v1561 = vpack.c.b16 %v1081, %v1073
          %v1562 = vpack.c.b16 %v1082, %v1074
          %v1563 = vpack.c.b16 %v1083, %v1075
          %v1564 = vpack.c.b16 %v1084, %v1076
          %v1565 = vpack.c.b16 %v1085, %v1077
          %v1566 = vpack.c.b16 %v1086, %v1078
          %v1567 = vpack.c.b16 %v1095, %v1087
          %v1568 = vpack.c.b16 %v1096, %v1088
          %v1569 = vpack.c.b16 %v1097, %v1089
          %v1570 = vpack.c.b16 %v1098, %v1090
          %v1571 = vpack.c.b16 %v1099, %v1091
          %v1572 = vpack.c.b16 %v1100, %v1092
          %v1573 = vpack.c.b16 %v1101, %v1093
          %v1574 = vpack.c.b16 %v1102, %v1094
          %v1575 = vpack.c.b16 %v1111, %v1103
          %v1576 = vpack.c.b16 %v1112, %v1104
          %v1577 = vpack.c.b16 %v1113, %v1105
          %v1578 = vpack.c.b16 %v1114, %v1106
          %v1579 = vpack.c.b16 %v1115, %v1107
          %v1580 = vpack.c.b16 %v1116, %v1108
          %v1581 = vpack.c.b16 %v1117, %v1109
          %v1582 = vpack.c.b16 %v1118, %v1110
          %v1583 = vpack.c.b16 %v1127, %v1119
          %v1584 = vpack.c.b16 %v1128, %v1120
          %v1585 = vpack.c.b16 %v1129, %v1121
          %v1586 = vpack.c.b16 %v1130, %v1122
          %v1587 = vpack.c.b16 %v1131, %v1123
          %v1588 = vpack.c.b16 %v1132, %v1124
          %v1589 = vpack.c.b16 %v1133, %v1125
          %v1590 = vpack.c.b16 %v1134, %v1126
          %v1591 = vpack.c.b16 %v1143, %v1135
          %v1592 = vpack.c.b16 %v1144, %v1136
          %v1593 = vpack.c.b16 %v1145, %v1137
          %v1594 = vpack.c.b16 %v1146, %v1138
          %v1595 = vpack.c.b16 %v1147, %v1139
          %v1596 = vpack.c.b16 %v1148, %v1140
          %v1597 = vpack.c.b16 %v1149, %v1141
          %v1598 = vpack.c.b16 %v1150, %v1142
          %v1599 = vpack.c.b16 %v1159, %v1151
          %v1600 = vpack.c.b16 %v1160, %v1152
          %v1601 = vpack.c.b16 %v1161, %v1153
          %v1602 = vpack.c.b16 %v1162, %v1154
          %v1603 = vpack.c.b16 %v1163, %v1155
          %v1604 = vpack.c.b16 %v1164, %v1156
          %v1605 = vpack.c.b16 %v1165, %v1157
          %v1606 = vpack.c.b16 %v1166, %v1158
          %v1607 = vpack.c.b16 %v1175, %v1167
          %v1608 = vpack.c.b16 %v1176, %v1168
          %v1609 = vpack.c.b16 %v1177, %v1169
          %v1610 = vpack.c.b16 %v1178, %v1170
          %v1611 = vpack.c.b16 %v1179, %v1171
          %v1612 = vpack.c.b16 %v1180, %v1172
          %v1613 = vpack.c.b16 %v1181, %v1173
          %v1614 = vpack.c.b16 %v1182, %v1174
          %v1615 = vpack.c.b16 %v1191, %v1183
          %v1616 = vpack.c.b16 %v1192, %v1184
          %v1617 = vpack.c.b16 %v1193, %v1185
          %v1618 = vpack.c.b16 %v1194, %v1186
          %v1619 = vpack.c.b16 %v1195, %v1187
          %v1620 = vpack.c.b16 %v1196, %v1188
          %v1621 = vpack.c.b16 %v1197, %v1189
          %v1622 = vpack.c.b16 %v1198, %v1190
          %v1623 = vpack.c.b16 %v1207, %v1199
          %v1624 = vpack.c.b16 %v1208, %v1200
          %v1625 = vpack.c.b16 %v1209, %v1201
          %v1626 = vpack.c.b16 %v1210, %v1202
          %v1627 = vpack.c.b16 %v1211, %v1203
          %v1628 = vpack.c.b16 %v1212, %v1204
          %v1629 = vpack.c.b16 %v1213, %v1205
          %v1630 = vpack.c.b16 %v1214, %v1206
          %v1631 = vpack.c.b16 %v1223, %v1215
          %v1632 = vpack.c.b16 %v1224, %v1216
          %v1633 = vpack.c.b16 %v1225, %v1217
          %v1634 = vpack.c.b16 %v1226, %v1218
          %v1635 = vpack.c.b16 %v1227, %v1219
          %v1636 = vpack.c.b16 %v1228, %v1220
          %v1637 = vpack.c.b16 %v1229, %v1221
          %v1638 = vpack.c.b16 %v1230, %v1222
          %v1639 = vpack.c.b16 %v1239, %v1231
          %v1640 = vpack.c.b16 %v1240, %v1232
          %v1641 = vpack.c.b16 %v1241, %v1233
          %v1642 = vpack.c.b16 %v1242, %v1234
          %v1643 = vpack.c.b16 %v1243, %v1235
          %v1644 = vpack.c.b16 %v1244, %v1236
          %v1645 = vpack.c.b16 %v1245, %v1237
          %v1646 = vpack.c.b16 %v1246, %v1238
          %v1647 = vpack.c.b16 %v1255, %v1247
          %v1648 = vpack.c.b16 %v1256, %v1248
          %v1649 = vpack.c.b16 %v1257, %v1249
          %v1650 = vpack.c.b16 %v1258, %v1250
          %v1651 = vpack.c.b16 %v1259, %v1251
          %v1652 = vpack.c.b16 %v1260, %v1252
          %v1653 = vpack.c.b16 %v1261, %v1253
          %v1654 = vpack.c.b16 %v1262, %v1254
          %v1655 = vpack.c.b16 %v1271, %v1263
          %v1656 = vpack.c.b16 %v1272, %v1264
          %v1657 = vpack.c.b16 %v1273, %v1265
          %v1658 = vpack.c.b16 %v1274, %v1266
          %v1659 = vpack.c.b16 %v1275, %v1267
          %v1660 = vpack.c.b16 %v1276, %v1268
          %v1661 = vpack.c.b16 %v1277, %v1269
          %v1662 = vpack.c.b16 %v1278, %v1270
          %v1663 = vpack.c.b16 %v1287, %v1279
          %v1664 = vpack.c.b16 %v1288, %v1280
          %v1665 = vpack.c.b16 %v1289, %v1281
          %v1666 = vpack.c.b16 %v1290, %v1282
          %v1667 = vpack.c.b16 %v1291, %v1283
          %v1668 = vpack.c.b16 %v1292, %v1284
          %v1669 = vpack.c.b16 %v1293, %v1285
          %v1670 = vpack.c.b16 %v1294, %v1286
          %v1671 = vpack.c.b16 %v1303, %v1295
          %v1672 = vpack.c.b16 %v1304, %v1296
          %v1673 = vpack.c.b16 %v1305, %v1297
          %v1674 = vpack.c.b16 %v1306, %v1298
          %v1675 = vpack.c.b16 %v1307, %v1299
          %v1676 = vpack.c.b16 %v1308, %v1300
          %v1677 = vpack.c.b16 %v1309, %v1301
          %v1678 = vpack.c.b16 %v1310, %v1302
          %v1679 = vpack.c.b16 %v1319, %v1311
          %v1680 = vpack.c.b16 %v1320, %v1312
          %v1681 = vpack.c.b16 %v1321, %v1313
          %v1682 = vpack.c.b16 %v1322, %v1314
          %v1683 = vpack.c.b16 %v1323, %v1315
          %v1684 = vpack.c.b16 %v1324, %v1316
          %v1685 = vpack.c.b16 %v1325, %v1317
          %v1686 = vpack.c.b16 %v1326, %v1318
          %v1687 = vpack.c.b16 %v1335, %v1327
          %v1688 = vpack.c.b16 %v1336, %v1328
          %v1689 = vpack.c.b16 %v1337, %v1329
          %v1690 = vpack.c.b16 %v1338, %v1330
          %v1691 = vpack.c.b16 %v1339, %v1331
          %v1692 = vpack.c.b16 %v1340, %v1332
          %v1693 = vpack.c.b16 %v1341, %v1333
          %v1694 = vpack.c.b16 %v1342, %v1334
          %v1695 = vpack.c.b16 %v1351, %v1343
          %v1696 = vpack.c.b16 %v1352, %v1344
          %v1697 = vpack.c.b16 %v1353, %v1345
          %v1698 = vpack.c.b16 %v1354, %v1346
          %v1699 = vpack.c.b16 %v1355, %v1347
          %v1700 = vpack.c.b16 %v1356, %v1348
          %v1701 = vpack.c.b16 %v1357, %v1349
          %v1702 = vpack.c.b16 %v1358, %v1350
          %v1703 = vpack.c.b16 %v1367, %v1359
          %v1704 = vpack.c.b16 %v1368, %v1360
          %v1705 = vpack.c.b16 %v1369, %v1361
          %v1706 = vpack.c.b16 %v1370, %v1362
          %v1707 = vpack.c.b16 %v1371, %v1363
          %v1708 = vpack.c.b16 %v1372, %v1364
          %v1709 = vpack.c.b16 %v1373, %v1365
          %v1710 = vpack.c.b16 %v1374, %v1366
          %v1711 = vpack.c.b16 %v1383, %v1375
          %v1712 = vpack.c.b16 %v1384, %v1376
          %v1713 = vpack.c.b16 %v1385, %v1377
          %v1714 = vpack.c.b16 %v1386, %v1378
          %v1715 = vpack.c.b16 %v1387, %v1379
          %v1716 = vpack.c.b16 %v1388, %v1380
          %v1717 = vpack.c.b16 %v1389, %v1381
          %v1718 = vpack.c.b16 %v1390, %v1382
          %v1719 = vpack.c.b16 %v1399, %v1391
          %v1720 = vpack.c.b16 %v1400, %v1392
          %v1721 = vpack.c.b16 %v1401, %v1393
          %v1722 = vpack.c.b16 %v1402, %v1394
          %v1723 = vpack.c.b16 %v1403, %v1395
          %v1724 = vpack.c.b16 %v1404, %v1396
          %v1725 = vpack.c.b16 %v1405, %v1397
          %v1726 = vpack.c.b16 %v1406, %v1398
          %v1727 = vpack.c.b16 %v1415, %v1407
          %v1728 = vpack.c.b16 %v1416, %v1408
          %v1729 = vpack.c.b16 %v1417, %v1409
          %v1730 = vpack.c.b16 %v1418, %v1410
          %v1731 = vpack.c.b16 %v1419, %v1411
          %v1732 = vpack.c.b16 %v1420, %v1412
          %v1733 = vpack.c.b16 %v1421, %v1413
          %v1734 = vpack.c.b16 %v1422, %v1414
          %v1735 = vpack.c.b16 %v1431, %v1423
          %v1736 = vpack.c.b16 %v1432, %v1424
          %v1737 = vpack.c.b16 %v1433, %v1425
          %v1738 = vpack.c.b16 %v1434, %v1426
          %v1739 = vpack.c.b16 %v1435, %v1427
          %v1740 = vpack.c.b16 %v1436, %v1428
          %v1741 = vpack.c.b16 %v1437, %v1429
          %v1742 = vpack.c.b16 %v1438, %v1430
          %v1743 = vpack.c.b16 %v1447, %v1439
          %v1744 = vpack.c.b16 %v1448, %v1440
          %v1745 = vpack.c.b16 %v1449, %v1441
          %v1746 = vpack.c.b16 %v1450, %v1442
          %v1747 = vpack.c.b16 %v1451, %v1443
          %v1748 = vpack.c.b16 %v1452, %v1444
          %v1749 = vpack.c.b16 %v1453, %v1445
          %v1750 = vpack.c.b16 %v1454, %v1446
          %v1751 = vpack.c.b16 %v1463, %v1455
          %v1752 = vpack.c.b16 %v1464, %v1456
          %v1753 = vpack.c.b16 %v1465, %v1457
          %v1754 = vpack.c.b16 %v1466, %v1458
          %v1755 = vpack.c.b16 %v1467, %v1459
          %v1756 = vpack.c.b16 %v1468, %v1460
          %v1757 = vpack.c.b16 %v1469, %v1461
          %v1758 = vpack.c.b16 %v1470, %v1462
          %v1759 = vpack.c.b16 %v1479, %v1471
          %v1760 = vpack.c.b16 %v1480, %v1472
          %v1761 = vpack.c.b16 %v1481, %v1473
          %v1762 = vpack.c.b16 %v1482, %v1474
          %v1763 = vpack.c.b16 %v1483, %v1475
          %v1764 = vpack.c.b16 %v1484, %v1476
          %v1765 = vpack.c.b16 %v1485, %v1477
          %v1766 = vpack.c.b16 %v1486, %v1478
          %v1767 = vpack.c.b16 %v1495, %v1487
          %v1768 = vpack.c.b16 %v1496, %v1488
          %v1769 = vpack.c.b16 %v1497, %v1489
          %v1770 = vpack.c.b16 %v1498, %v1490
          %v1771 = vpack.c.b16 %v1499, %v1491
          %v1772 = vpack.c.b16 %v1500, %v1492
          %v1773 = vpack.c.b16 %v1501, %v1493
          %v1774 = vpack.c.b16 %v1502, %v1494
          %v1775 = vpack.c.b16 %v1511, %v1503
          %v1776 = vpack.c.b16 %v1512, %v1504
          %v1777 = vpack.c.b16 %v1513, %v1505
          %v1778 = vpack.c.b16 %v1514, %v1506
          %v1779 = vpack.c.b16 %v1515, %v1507
          %v1780 = vpack.c.b16 %v1516, %v1508
          %v1781 = vpack.c.b16 %v1517, %v1509
          %v1782 = vpack.c.b16 %v1518, %v1510
          %v1783 = vpack.c.b16 %v1527, %v1519
          %v1784 = vpack.c.b16 %v1528, %v1520
          %v1785 = vpack.c.b16 %v1529, %v1521
          %v1786 = vpack.c.b16 %v1530, %v1522
          %v1787 = vpack.c.b16 %v1531, %v1523
          %v1788 = vpack.c.b16 %v1532, %v1524
          %v1789 = vpack.c.b16 %v1533, %v1525
          %v1790 = vpack.c.b16 %v1534, %v1526
          %2047 = vmatpush.bf16.msra.mxu0 %v1591
          %2048 = vmatpush.bf16.msra.mxu0 %v1583
          %2049 = vmatpush.bf16.msra.mxu0 %v1575
          %2050 = vmatpush.bf16.msra.mxu0 %v1567
          %2051 = vmatpush.bf16.msra.mxu0 %v1559
          %2052 = vmatpush.bf16.msra.mxu0 %v1551
          %2053 = vmatpush.bf16.msra.mxu0 %v1543
          %2054 = vmatpush.bf16.msra.mxu0 %v1535
          %2055 = vmatmul.bf16.gmra.mxu0 %v759
          %v2056 = vpop.f32.mrf.mxu0
          %v2057 = vadd.f32 0.0, %v2056
          %v2058 = vpop.f32.mrf.mxu0
          %2059 = vdwg.mxu0
          %2060 = vmatpush.bf16.msra.mxu0 %v1655
          %2061 = vmatpush.bf16.msra.mxu0 %v1647
          %2062 = vmatpush.bf16.msra.mxu0 %v1639
          %2063 = vmatpush.bf16.msra.mxu0 %v1631
          %2064 = vmatpush.bf16.msra.mxu0 %v1623
          %2065 = vmatpush.bf16.msra.mxu0 %v1615
          %2066 = vmatpush.bf16.msra.mxu0 %v1607
          %2067 = vmatpush.bf16.msra.mxu0 %v1599
          %2068 = vmatmul.bf16.gmra.mxu0 %v760
          %v2069 = vpop.f32.mrf.mxu0
          %v2070 = vadd.f32 %v2057, %v2069
          %v2071 = vpop.f32.mrf.mxu0
          %2072 = vdwg.mxu0
          %2073 = vmatpush.bf16.msra.mxu0 %v1719
          %2074 = vmatpush.bf16.msra.mxu0 %v1711
          %2075 = vmatpush.bf16.msra.mxu0 %v1703
          %2076 = vmatpush.bf16.msra.mxu0 %v1695
          %2077 = vmatpush.bf16.msra.mxu0 %v1687
          %2078 = vmatpush.bf16.msra.mxu0 %v1679
          %2079 = vmatpush.bf16.msra.mxu0 %v1671
          %2080 = vmatpush.bf16.msra.mxu0 %v1663
          %2081 = vmatmul.bf16.gmra.mxu0 %v761
          %v2082 = vpop.f32.mrf.mxu0
          %v2083 = vadd.f32 %v2070, %v2082
          %v2084 = vpop.f32.mrf.mxu0
          %2085 = vdwg.mxu0
          %2086 = vmatpush.bf16.msra.mxu0 %v1783
          %2087 = vmatpush.bf16.msra.mxu0 %v1775
          %2088 = vmatpush.bf16.msra.mxu0 %v1767
          %2089 = vmatpush.bf16.msra.mxu0 %v1759
          %2090 = vmatpush.bf16.msra.mxu0 %v1751
          %2091 = vmatpush.bf16.msra.mxu0 %v1743
          %2092 = vmatpush.bf16.msra.mxu0 %v1735
          %2093 = vmatpush.bf16.msra.mxu0 %v1727
          %2094 = vmatmul.bf16.gmra.mxu0 %v762
          %v2095 = vpop.f32.mrf.mxu0
          %v2096 = vadd.f32 %v2083, %v2095
          %v2097 = vpop.f32.mrf.mxu0
          %2098 = vdwg.mxu0
          %2099 = vmatpush.bf16.msra.mxu0 %v1592
          %2100 = vmatpush.bf16.msra.mxu0 %v1584
          %2101 = vmatpush.bf16.msra.mxu0 %v1576
          %2102 = vmatpush.bf16.msra.mxu0 %v1568
          %2103 = vmatpush.bf16.msra.mxu0 %v1560
          %2104 = vmatpush.bf16.msra.mxu0 %v1552
          %2105 = vmatpush.bf16.msra.mxu0 %v1544
          %2106 = vmatpush.bf16.msra.mxu0 %v1536
          %2107 = vmatmul.bf16.gmra.mxu0 %v759
          %v2108 = vpop.f32.mrf.mxu0
          %v2109 = vadd.f32 0.0, %v2108
          %v2110 = vpop.f32.mrf.mxu0
          %2111 = vdwg.mxu0
          %2112 = vmatpush.bf16.msra.mxu0 %v1656
          %2113 = vmatpush.bf16.msra.mxu0 %v1648
          %2114 = vmatpush.bf16.msra.mxu0 %v1640
          %2115 = vmatpush.bf16.msra.mxu0 %v1632
          %2116 = vmatpush.bf16.msra.mxu0 %v1624
          %2117 = vmatpush.bf16.msra.mxu0 %v1616
          %2118 = vmatpush.bf16.msra.mxu0 %v1608
          %2119 = vmatpush.bf16.msra.mxu0 %v1600
          %2120 = vmatmul.bf16.gmra.mxu0 %v760
          %v2121 = vpop.f32.mrf.mxu0
          %v2122 = vadd.f32 %v2109, %v2121
          %v2123 = vpop.f32.mrf.mxu0
          %2124 = vdwg.mxu0
          %2125 = vmatpush.bf16.msra.mxu0 %v1720
          %2126 = vmatpush.bf16.msra.mxu0 %v1712
          %2127 = vmatpush.bf16.msra.mxu0 %v1704
          %2128 = vmatpush.bf16.msra.mxu0 %v1696
          %2129 = vmatpush.bf16.msra.mxu0 %v1688
          %2130 = vmatpush.bf16.msra.mxu0 %v1680
          %2131 = vmatpush.bf16.msra.mxu0 %v1672
          %2132 = vmatpush.bf16.msra.mxu0 %v1664
          %2133 = vmatmul.bf16.gmra.mxu0 %v761
          %v2134 = vpop.f32.mrf.mxu0
          %v2135 = vadd.f32 %v2122, %v2134
          %v2136 = vpop.f32.mrf.mxu0
          %2137 = vdwg.mxu0
          %2138 = vmatpush.bf16.msra.mxu0 %v1784
          %2139 = vmatpush.bf16.msra.mxu0 %v1776
          %2140 = vmatpush.bf16.msra.mxu0 %v1768
          %2141 = vmatpush.bf16.msra.mxu0 %v1760
          %2142 = vmatpush.bf16.msra.mxu0 %v1752
          %2143 = vmatpush.bf16.msra.mxu0 %v1744
          %2144 = vmatpush.bf16.msra.mxu0 %v1736
          %2145 = vmatpush.bf16.msra.mxu0 %v1728
          %2146 = vmatmul.bf16.gmra.mxu0 %v762
          %v2147 = vpop.f32.mrf.mxu0
          %v2148 = vadd.f32 %v2135, %v2147
          %v2149 = vpop.f32.mrf.mxu0
          %2150 = vdwg.mxu0
          %2151 = vmatpush.bf16.msra.mxu0 %v1593
          %2152 = vmatpush.bf16.msra.mxu0 %v1585
          %2153 = vmatpush.bf16.msra.mxu0 %v1577
          %2154 = vmatpush.bf16.msra.mxu0 %v1569
          %2155 = vmatpush.bf16.msra.mxu0 %v1561
          %2156 = vmatpush.bf16.msra.mxu0 %v1553
          %2157 = vmatpush.bf16.msra.mxu0 %v1545
          %2158 = vmatpush.bf16.msra.mxu0 %v1537
          %2159 = vmatmul.bf16.gmra.mxu0 %v759
          %v2160 = vpop.f32.mrf.mxu0
          %v2161 = vadd.f32 0.0, %v2160
          %v2162 = vpop.f32.mrf.mxu0
          %2163 = vdwg.mxu0
          %2164 = vmatpush.bf16.msra.mxu0 %v1657
          %2165 = vmatpush.bf16.msra.mxu0 %v1649
          %2166 = vmatpush.bf16.msra.mxu0 %v1641
          %2167 = vmatpush.bf16.msra.mxu0 %v1633
          %2168 = vmatpush.bf16.msra.mxu0 %v1625
          %2169 = vmatpush.bf16.msra.mxu0 %v1617
          %2170 = vmatpush.bf16.msra.mxu0 %v1609
          %2171 = vmatpush.bf16.msra.mxu0 %v1601
          %2172 = vmatmul.bf16.gmra.mxu0 %v760
          %v2173 = vpop.f32.mrf.mxu0
          %v2174 = vadd.f32 %v2161, %v2173
          %v2175 = vpop.f32.mrf.mxu0
          %2176 = vdwg.mxu0
          %2177 = vmatpush.bf16.msra.mxu0 %v1721
          %2178 = vmatpush.bf16.msra.mxu0 %v1713
          %2179 = vmatpush.bf16.msra.mxu0 %v1705
          %2180 = vmatpush.bf16.msra.mxu0 %v1697
          %2181 = vmatpush.bf16.msra.mxu0 %v1689
          %2182 = vmatpush.bf16.msra.mxu0 %v1681
          %2183 = vmatpush.bf16.msra.mxu0 %v1673
          %2184 = vmatpush.bf16.msra.mxu0 %v1665
          %2185 = vmatmul.bf16.gmra.mxu0 %v761
          %v2186 = vpop.f32.mrf.mxu0
          %v2187 = vadd.f32 %v2174, %v2186
          %v2188 = vpop.f32.mrf.mxu0
          %2189 = vdwg.mxu0
          %2190 = vmatpush.bf16.msra.mxu0 %v1785
          %2191 = vmatpush.bf16.msra.mxu0 %v1777
          %2192 = vmatpush.bf16.msra.mxu0 %v1769
          %2193 = vmatpush.bf16.msra.mxu0 %v1761
          %2194 = vmatpush.bf16.msra.mxu0 %v1753
          %2195 = vmatpush.bf16.msra.mxu0 %v1745
          %2196 = vmatpush.bf16.msra.mxu0 %v1737
          %2197 = vmatpush.bf16.msra.mxu0 %v1729
          %2198 = vmatmul.bf16.gmra.mxu0 %v762
          %v2199 = vpop.f32.mrf.mxu0
          %v2200 = vadd.f32 %v2187, %v2199
          %v2201 = vpop.f32.mrf.mxu0
          %2202 = vdwg.mxu0
          %2203 = vmatpush.bf16.msra.mxu0 %v1594
          %2204 = vmatpush.bf16.msra.mxu0 %v1586
          %2205 = vmatpush.bf16.msra.mxu0 %v1578
          %2206 = vmatpush.bf16.msra.mxu0 %v1570
          %2207 = vmatpush.bf16.msra.mxu0 %v1562
          %2208 = vmatpush.bf16.msra.mxu0 %v1554
          %2209 = vmatpush.bf16.msra.mxu0 %v1546
          %2210 = vmatpush.bf16.msra.mxu0 %v1538
          %2211 = vmatmul.bf16.gmra.mxu0 %v759
          %v2212 = vpop.f32.mrf.mxu0
          %v2213 = vadd.f32 0.0, %v2212
          %v2214 = vpop.f32.mrf.mxu0
          %2215 = vdwg.mxu0
          %2216 = vmatpush.bf16.msra.mxu0 %v1658
          %2217 = vmatpush.bf16.msra.mxu0 %v1650
          %2218 = vmatpush.bf16.msra.mxu0 %v1642
          %2219 = vmatpush.bf16.msra.mxu0 %v1634
          %2220 = vmatpush.bf16.msra.mxu0 %v1626
          %2221 = vmatpush.bf16.msra.mxu0 %v1618
          %2222 = vmatpush.bf16.msra.mxu0 %v1610
          %2223 = vmatpush.bf16.msra.mxu0 %v1602
          %2224 = vmatmul.bf16.gmra.mxu0 %v760
          %v2225 = vpop.f32.mrf.mxu0
          %v2226 = vadd.f32 %v2213, %v2225
          %v2227 = vpop.f32.mrf.mxu0
          %2228 = vdwg.mxu0
          %2229 = vmatpush.bf16.msra.mxu0 %v1722
          %2230 = vmatpush.bf16.msra.mxu0 %v1714
          %2231 = vmatpush.bf16.msra.mxu0 %v1706
          %2232 = vmatpush.bf16.msra.mxu0 %v1698
          %2233 = vmatpush.bf16.msra.mxu0 %v1690
          %2234 = vmatpush.bf16.msra.mxu0 %v1682
          %2235 = vmatpush.bf16.msra.mxu0 %v1674
          %2236 = vmatpush.bf16.msra.mxu0 %v1666
          %2237 = vmatmul.bf16.gmra.mxu0 %v761
          %v2238 = vpop.f32.mrf.mxu0
          %v2239 = vadd.f32 %v2226, %v2238
          %v2240 = vpop.f32.mrf.mxu0
          %2241 = vdwg.mxu0
          %2242 = vmatpush.bf16.msra.mxu0 %v1786
          %2243 = vmatpush.bf16.msra.mxu0 %v1778
          %2244 = vmatpush.bf16.msra.mxu0 %v1770
          %2245 = vmatpush.bf16.msra.mxu0 %v1762
          %2246 = vmatpush.bf16.msra.mxu0 %v1754
          %2247 = vmatpush.bf16.msra.mxu0 %v1746
          %2248 = vmatpush.bf16.msra.mxu0 %v1738
          %2249 = vmatpush.bf16.msra.mxu0 %v1730
          %2250 = vmatmul.bf16.gmra.mxu0 %v762
          %v2251 = vpop.f32.mrf.mxu0
          %v2252 = vadd.f32 %v2239, %v2251
          %v2253 = vpop.f32.mrf.mxu0
          %2254 = vdwg.mxu0
          %2255 = vmatpush.bf16.msra.mxu0 %v1595
          %2256 = vmatpush.bf16.msra.mxu0 %v1587
          %2257 = vmatpush.bf16.msra.mxu0 %v1579
          %2258 = vmatpush.bf16.msra.mxu0 %v1571
          %2259 = vmatpush.bf16.msra.mxu0 %v1563
          %2260 = vmatpush.bf16.msra.mxu0 %v1555
          %2261 = vmatpush.bf16.msra.mxu0 %v1547
          %2262 = vmatpush.bf16.msra.mxu0 %v1539
          %2263 = vmatmul.bf16.gmra.mxu0 %v759
          %v2264 = vpop.f32.mrf.mxu0
          %v2265 = vadd.f32 0.0, %v2264
          %v2266 = vpop.f32.mrf.mxu0
          %2267 = vdwg.mxu0
          %2268 = vmatpush.bf16.msra.mxu0 %v1659
          %2269 = vmatpush.bf16.msra.mxu0 %v1651
          %2270 = vmatpush.bf16.msra.mxu0 %v1643
          %2271 = vmatpush.bf16.msra.mxu0 %v1635
          %2272 = vmatpush.bf16.msra.mxu0 %v1627
          %2273 = vmatpush.bf16.msra.mxu0 %v1619
          %2274 = vmatpush.bf16.msra.mxu0 %v1611
          %2275 = vmatpush.bf16.msra.mxu0 %v1603
          %2276 = vmatmul.bf16.gmra.mxu0 %v760
          %v2277 = vpop.f32.mrf.mxu0
          %v2278 = vadd.f32 %v2265, %v2277
          %v2279 = vpop.f32.mrf.mxu0
          %2280 = vdwg.mxu0
          %2281 = vmatpush.bf16.msra.mxu0 %v1723
          %2282 = vmatpush.bf16.msra.mxu0 %v1715
          %2283 = vmatpush.bf16.msra.mxu0 %v1707
          %2284 = vmatpush.bf16.msra.mxu0 %v1699
          %2285 = vmatpush.bf16.msra.mxu0 %v1691
          %2286 = vmatpush.bf16.msra.mxu0 %v1683
          %2287 = vmatpush.bf16.msra.mxu0 %v1675
          %2288 = vmatpush.bf16.msra.mxu0 %v1667
          %2289 = vmatmul.bf16.gmra.mxu0 %v761
          %v2290 = vpop.f32.mrf.mxu0
          %v2291 = vadd.f32 %v2278, %v2290
          %v2292 = vpop.f32.mrf.mxu0
          %2293 = vdwg.mxu0
          %2294 = vmatpush.bf16.msra.mxu0 %v1787
          %2295 = vmatpush.bf16.msra.mxu0 %v1779
          %2296 = vmatpush.bf16.msra.mxu0 %v1771
          %2297 = vmatpush.bf16.msra.mxu0 %v1763
          %2298 = vmatpush.bf16.msra.mxu0 %v1755
          %2299 = vmatpush.bf16.msra.mxu0 %v1747
          %2300 = vmatpush.bf16.msra.mxu0 %v1739
          %2301 = vmatpush.bf16.msra.mxu0 %v1731
          %2302 = vmatmul.bf16.gmra.mxu0 %v762
          %v2303 = vpop.f32.mrf.mxu0
          %v2304 = vadd.f32 %v2291, %v2303
          %v2305 = vpop.f32.mrf.mxu0
          %2306 = vdwg.mxu0
          %2307 = vmatpush.bf16.msra.mxu0 %v1596
          %2308 = vmatpush.bf16.msra.mxu0 %v1588
          %2309 = vmatpush.bf16.msra.mxu0 %v1580
          %2310 = vmatpush.bf16.msra.mxu0 %v1572
          %2311 = vmatpush.bf16.msra.mxu0 %v1564
          %2312 = vmatpush.bf16.msra.mxu0 %v1556
          %2313 = vmatpush.bf16.msra.mxu0 %v1548
          %2314 = vmatpush.bf16.msra.mxu0 %v1540
          %2315 = vmatmul.bf16.gmra.mxu0 %v759
          %v2316 = vpop.f32.mrf.mxu0
          %v2317 = vadd.f32 0.0, %v2316
          %v2318 = vpop.f32.mrf.mxu0
          %2319 = vdwg.mxu0
          %2320 = vmatpush.bf16.msra.mxu0 %v1660
          %2321 = vmatpush.bf16.msra.mxu0 %v1652
          %2322 = vmatpush.bf16.msra.mxu0 %v1644
          %2323 = vmatpush.bf16.msra.mxu0 %v1636
          %2324 = vmatpush.bf16.msra.mxu0 %v1628
          %2325 = vmatpush.bf16.msra.mxu0 %v1620
          %2326 = vmatpush.bf16.msra.mxu0 %v1612
          %2327 = vmatpush.bf16.msra.mxu0 %v1604
          %2328 = vmatmul.bf16.gmra.mxu0 %v760
          %v2329 = vpop.f32.mrf.mxu0
          %v2330 = vadd.f32 %v2317, %v2329
          %v2331 = vpop.f32.mrf.mxu0
          %2332 = vdwg.mxu0
          %2333 = vmatpush.bf16.msra.mxu0 %v1724
          %2334 = vmatpush.bf16.msra.mxu0 %v1716
          %2335 = vmatpush.bf16.msra.mxu0 %v1708
          %2336 = vmatpush.bf16.msra.mxu0 %v1700
          %2337 = vmatpush.bf16.msra.mxu0 %v1692
          %2338 = vmatpush.bf16.msra.mxu0 %v1684
          %2339 = vmatpush.bf16.msra.mxu0 %v1676
          %2340 = vmatpush.bf16.msra.mxu0 %v1668
          %2341 = vmatmul.bf16.gmra.mxu0 %v761
          %v2342 = vpop.f32.mrf.mxu0
          %v2343 = vadd.f32 %v2330, %v2342
          %v2344 = vpop.f32.mrf.mxu0
          %2345 = vdwg.mxu0
          %2346 = vmatpush.bf16.msra.mxu0 %v1788
          %2347 = vmatpush.bf16.msra.mxu0 %v1780
          %2348 = vmatpush.bf16.msra.mxu0 %v1772
          %2349 = vmatpush.bf16.msra.mxu0 %v1764
          %2350 = vmatpush.bf16.msra.mxu0 %v1756
          %2351 = vmatpush.bf16.msra.mxu0 %v1748
          %2352 = vmatpush.bf16.msra.mxu0 %v1740
          %2353 = vmatpush.bf16.msra.mxu0 %v1732
          %2354 = vmatmul.bf16.gmra.mxu0 %v762
          %v2355 = vpop.f32.mrf.mxu0
          %v2356 = vadd.f32 %v2343, %v2355
          %v2357 = vpop.f32.mrf.mxu0
          %2358 = vdwg.mxu0
          %2359 = vmatpush.bf16.msra.mxu0 %v1597
          %2360 = vmatpush.bf16.msra.mxu0 %v1589
          %2361 = vmatpush.bf16.msra.mxu0 %v1581
          %2362 = vmatpush.bf16.msra.mxu0 %v1573
          %2363 = vmatpush.bf16.msra.mxu0 %v1565
          %2364 = vmatpush.bf16.msra.mxu0 %v1557
          %2365 = vmatpush.bf16.msra.mxu0 %v1549
          %2366 = vmatpush.bf16.msra.mxu0 %v1541
          %2367 = vmatmul.bf16.gmra.mxu0 %v759
          %v2368 = vpop.f32.mrf.mxu0
          %v2369 = vadd.f32 0.0, %v2368
          %v2370 = vpop.f32.mrf.mxu0
          %2371 = vdwg.mxu0
          %2372 = vmatpush.bf16.msra.mxu0 %v1661
          %2373 = vmatpush.bf16.msra.mxu0 %v1653
          %2374 = vmatpush.bf16.msra.mxu0 %v1645
          %2375 = vmatpush.bf16.msra.mxu0 %v1637
          %2376 = vmatpush.bf16.msra.mxu0 %v1629
          %2377 = vmatpush.bf16.msra.mxu0 %v1621
          %2378 = vmatpush.bf16.msra.mxu0 %v1613
          %2379 = vmatpush.bf16.msra.mxu0 %v1605
          %2380 = vmatmul.bf16.gmra.mxu0 %v760
          %v2381 = vpop.f32.mrf.mxu0
          %v2382 = vadd.f32 %v2369, %v2381
          %v2383 = vpop.f32.mrf.mxu0
          %2384 = vdwg.mxu0
          %2385 = vmatpush.bf16.msra.mxu0 %v1725
          %2386 = vmatpush.bf16.msra.mxu0 %v1717
          %2387 = vmatpush.bf16.msra.mxu0 %v1709
          %2388 = vmatpush.bf16.msra.mxu0 %v1701
          %2389 = vmatpush.bf16.msra.mxu0 %v1693
          %2390 = vmatpush.bf16.msra.mxu0 %v1685
          %2391 = vmatpush.bf16.msra.mxu0 %v1677
          %2392 = vmatpush.bf16.msra.mxu0 %v1669
          %2393 = vmatmul.bf16.gmra.mxu0 %v761
          %v2394 = vpop.f32.mrf.mxu0
          %v2395 = vadd.f32 %v2382, %v2394
          %v2396 = vpop.f32.mrf.mxu0
          %2397 = vdwg.mxu0
          %2398 = vmatpush.bf16.msra.mxu0 %v1789
          %2399 = vmatpush.bf16.msra.mxu0 %v1781
          %2400 = vmatpush.bf16.msra.mxu0 %v1773
          %2401 = vmatpush.bf16.msra.mxu0 %v1765
          %2402 = vmatpush.bf16.msra.mxu0 %v1757
          %2403 = vmatpush.bf16.msra.mxu0 %v1749
          %2404 = vmatpush.bf16.msra.mxu0 %v1741
          %2405 = vmatpush.bf16.msra.mxu0 %v1733
          %2406 = vmatmul.bf16.gmra.mxu0 %v762
          %v2407 = vpop.f32.mrf.mxu0
          %v2408 = vadd.f32 %v2395, %v2407
          %v2409 = vpop.f32.mrf.mxu0
          %2410 = vdwg.mxu0
          %2411 = vmatpush.bf16.msra.mxu0 %v1598
          %2412 = vmatpush.bf16.msra.mxu0 %v1590
          %2413 = vmatpush.bf16.msra.mxu0 %v1582
          %2414 = vmatpush.bf16.msra.mxu0 %v1574
          %2415 = vmatpush.bf16.msra.mxu0 %v1566
          %2416 = vmatpush.bf16.msra.mxu0 %v1558
          %2417 = vmatpush.bf16.msra.mxu0 %v1550
          %2418 = vmatpush.bf16.msra.mxu0 %v1542
          %2419 = vmatmul.bf16.gmra.mxu0 %v759
          %v2420 = vpop.f32.mrf.mxu0
          %v2421 = vadd.f32 0.0, %v2420
          %v2422 = vpop.f32.mrf.mxu0
          %2423 = vdwg.mxu0
          %2424 = vmatpush.bf16.msra.mxu0 %v1662
          %2425 = vmatpush.bf16.msra.mxu0 %v1654
          %2426 = vmatpush.bf16.msra.mxu0 %v1646
          %2427 = vmatpush.bf16.msra.mxu0 %v1638
          %2428 = vmatpush.bf16.msra.mxu0 %v1630
          %2429 = vmatpush.bf16.msra.mxu0 %v1622
          %2430 = vmatpush.bf16.msra.mxu0 %v1614
          %2431 = vmatpush.bf16.msra.mxu0 %v1606
          %2432 = vmatmul.bf16.gmra.mxu0 %v760
          %v2433 = vpop.f32.mrf.mxu0
          %v2434 = vadd.f32 %v2421, %v2433
          %v2435 = vpop.f32.mrf.mxu0
          %2436 = vdwg.mxu0
          %2437 = vmatpush.bf16.msra.mxu0 %v1726
          %2438 = vmatpush.bf16.msra.mxu0 %v1718
          %2439 = vmatpush.bf16.msra.mxu0 %v1710
          %2440 = vmatpush.bf16.msra.mxu0 %v1702
          %2441 = vmatpush.bf16.msra.mxu0 %v1694
          %2442 = vmatpush.bf16.msra.mxu0 %v1686
          %2443 = vmatpush.bf16.msra.mxu0 %v1678
          %2444 = vmatpush.bf16.msra.mxu0 %v1670
          %2445 = vmatmul.bf16.gmra.mxu0 %v761
          %v2446 = vpop.f32.mrf.mxu0
          %v2447 = vadd.f32 %v2434, %v2446
          %v2448 = vpop.f32.mrf.mxu0
          %2449 = vdwg.mxu0
          %2450 = vmatpush.bf16.msra.mxu0 %v1790
          %2451 = vmatpush.bf16.msra.mxu0 %v1782
          %2452 = vmatpush.bf16.msra.mxu0 %v1774
          %2453 = vmatpush.bf16.msra.mxu0 %v1766
          %2454 = vmatpush.bf16.msra.mxu0 %v1758
          %2455 = vmatpush.bf16.msra.mxu0 %v1750
          %2456 = vmatpush.bf16.msra.mxu0 %v1742
          %2457 = vmatpush.bf16.msra.mxu0 %v1734
          %2458 = vmatmul.bf16.gmra.mxu0 %v762
          %v2459 = vpop.f32.mrf.mxu0
          %v2460 = vadd.f32 %v2447, %v2459
          %v2461 = vpop.f32.mrf.mxu0
          %2462 = vdwg.mxu0
          %v2463 = vadd.f32 %v487, %v2096
          %v2464 = vadd.f32 %v488, %v2148
          %v2465 = vadd.f32 %v489, %v2200
          %v2466 = vadd.f32 %v490, %v2252
          %v2467 = vadd.f32 %v491, %v2304
          %v2468 = vadd.f32 %v492, %v2356
          %v2469 = vadd.f32 %v493, %v2408
          %v2470 = vadd.f32 %v494, %v2460
          %2471 = vst [vmem:[#allocation2] sm:$0xff] %v2463
          %2472 = vst [vmem:[#allocation2 + $0x8] sm:$0xff] %v2464
          %2473 = vst [vmem:[#allocation2 + $0x10] sm:$0xff] %v2465
          %2474 = vst [vmem:[#allocation2 + $0x18] sm:$0xff] %v2466
          %2475 = vst [vmem:[#allocation2 + $0x20] sm:$0xff] %v2467
          %2476 = vst [vmem:[#allocation2 + $0x28] sm:$0xff] %v2468
          %2477 = vst [vmem:[#allocation2 + $0x30] sm:$0xff] %v2469
          %2478 = vst [vmem:[#allocation2 + $0x38] sm:$0xff] %v2470
        $region76: #{tpu_custom_call.1} parent=43 // pred_fallthru
          _
        %p2479 = scmp.eq.s32.totalorder %s27, 1
        // Predicated region
        $region77: #{tpu_custom_call.1} parent=43 // pred_check
          %p2480 = pneg %p2479
        $region78: #{tpu_custom_call.1} parent=43 // pred_check_branch
          %2482 = sbr.rel (%p2480) target = $region80
        $region79: #{tpu_custom_call.1} parent=43 // pred_region
          %v2483 = vld [vmem:[#allocation2] sm:$0xff]
          %v2484 = vld [vmem:[#allocation2 + $0x8] sm:$0xff]
          %v2485 = vld [vmem:[#allocation2 + $0x10] sm:$0xff]
          %v2486 = vld [vmem:[#allocation2 + $0x18] sm:$0xff]
          %v2487 = vld [vmem:[#allocation2 + $0x20] sm:$0xff]
          %v2488 = vld [vmem:[#allocation2 + $0x28] sm:$0xff]
          %v2489 = vld [vmem:[#allocation2 + $0x30] sm:$0xff]
          %v2490 = vld [vmem:[#allocation2 + $0x38] sm:$0xff]
          %v2491 = vld [vmem:[#allocation8] sm:$0xff]
          %v2493 = vperm.slane %v2491, 0
          %v2494 = vperm.slane %v2491, 1
          %v2495 = vperm.slane %v2491, 2
          %v2496 = vperm.slane %v2491, 3
          %v2497 = vperm.slane %v2491, 4
          %v2498 = vperm.slane %v2491, 5
          %v2499 = vperm.slane %v2491, 6
          %v2500 = vperm.slane %v2491, 7
          %v2509 = vadd.f32 %v2483, %v2493
          %v2510 = vadd.f32 %v2484, %v2494
          %v2511 = vadd.f32 %v2485, %v2495
          %v2512 = vadd.f32 %v2486, %v2496
          %v2513 = vadd.f32 %v2487, %v2497
          %v2514 = vadd.f32 %v2488, %v2498
          %v2515 = vadd.f32 %v2489, %v2499
          %v2516 = vadd.f32 %v2490, %v2500
          %vm2517 = vcmp.ge.f32.partialorder %v2509, 0.0
          %vm2518 = vcmp.ge.f32.partialorder %v2510, 0.0
          %vm2519 = vcmp.ge.f32.partialorder %v2511, 0.0
          %vm2520 = vcmp.ge.f32.partialorder %v2512, 0.0
          %vm2521 = vcmp.ge.f32.partialorder %v2513, 0.0
          %vm2522 = vcmp.ge.f32.partialorder %v2514, 0.0
          %vm2523 = vcmp.ge.f32.partialorder %v2515, 0.0
          %vm2524 = vcmp.ge.f32.partialorder %v2516, 0.0
          %v2525 = vmul.f32 %v2509, 0.2
          %v2526 = vmul.f32 %v2510, 0.2
          %v2527 = vmul.f32 %v2511, 0.2
          %v2528 = vmul.f32 %v2512, 0.2
          %v2529 = vmul.f32 %v2513, 0.2
          %v2530 = vmul.f32 %v2514, 0.2
          %v2531 = vmul.f32 %v2515, 0.2
          %v2532 = vmul.f32 %v2516, 0.2
          %v2533 = vsel %vm2517, %v2509, %v2525
          %v2534 = vsel %vm2518, %v2510, %v2526
          %v2535 = vsel %vm2519, %v2511, %v2527
          %v2536 = vsel %vm2520, %v2512, %v2528
          %v2537 = vsel %vm2521, %v2513, %v2529
          %v2538 = vsel %vm2522, %v2514, %v2530
          %v2539 = vsel %vm2523, %v2515, %v2531
          %v2540 = vsel %vm2524, %v2516, %v2532
          %v2541 = vld [vmem:[#allocation9] sm:$0xff]
          %v2542 = vld [vmem:[#allocation9 + $0x8] sm:$0xff]
          %v2543 = vld [vmem:[#allocation9 + $0x10] sm:$0xff]
          %v2544 = vld [vmem:[#allocation9 + $0x18] sm:$0xff]
          %v2545 = vld [vmem:[#allocation9 + $0x20] sm:$0xff]
          %v2546 = vld [vmem:[#allocation9 + $0x28] sm:$0xff]
          %v2547 = vld [vmem:[#allocation9 + $0x30] sm:$0xff]
          %v2548 = vld [vmem:[#allocation9 + $0x38] sm:$0xff]
          %v2549 = vmul.f32 %v2533, %v2541
          %v2550 = vmul.f32 %v2534, %v2542
          %v2551 = vmul.f32 %v2535, %v2543
          %v2552 = vmul.f32 %v2536, %v2544
          %v2553 = vmul.f32 %v2537, %v2545
          %v2554 = vmul.f32 %v2538, %v2546
          %v2555 = vmul.f32 %v2539, %v2547
          %v2556 = vmul.f32 %v2540, %v2548
          %2557 = vst [vmem:[#allocation2] sm:$0xff] %v2549
          %2558 = vst [vmem:[#allocation2 + $0x8] sm:$0xff] %v2550
          %2559 = vst [vmem:[#allocation2 + $0x10] sm:$0xff] %v2551
          %2560 = vst [vmem:[#allocation2 + $0x18] sm:$0xff] %v2552
          %2561 = vst [vmem:[#allocation2 + $0x20] sm:$0xff] %v2553
          %2562 = vst [vmem:[#allocation2 + $0x28] sm:$0xff] %v2554
          %2563 = vst [vmem:[#allocation2 + $0x30] sm:$0xff] %v2555
          %2564 = vst [vmem:[#allocation2 + $0x38] sm:$0xff] %v2556
        $region80: #{tpu_custom_call.1} parent=43 // pred_fallthru
          _
        %p2565 = scmp.ge.s32.totalorder %s27, 2
        // Predicated region
        $region81: #{tpu_custom_call.1} parent=43 // pred_check
          %p2566 = pneg %p2565
        $region82: #{tpu_custom_call.1} parent=43 // pred_check_branch
          %2568 = sbr.rel (%p2566) target = $region84
        $region83: #{tpu_custom_call.1} parent=43 // pred_region
          %v2569 = vld [vmem:[#allocation2] sm:$0xff]
          %v2570 = vld [vmem:[#allocation2 + $0x8] sm:$0xff]
          %v2571 = vld [vmem:[#allocation2 + $0x10] sm:$0xff]
          %v2572 = vld [vmem:[#allocation2 + $0x18] sm:$0xff]
          %v2573 = vld [vmem:[#allocation2 + $0x20] sm:$0xff]
          %v2574 = vld [vmem:[#allocation2 + $0x28] sm:$0xff]
          %v2575 = vld [vmem:[#allocation2 + $0x30] sm:$0xff]
          %v2576 = vld [vmem:[#allocation2 + $0x38] sm:$0xff]
          %v2577 = vpack.c.bf16 %v2569, %v2569
          %v2578 = vpack.c.bf16 %v2570, %v2570
          %v2579 = vpack.c.bf16 %v2571, %v2571
          %v2580 = vpack.c.bf16 %v2572, %v2572
          %v2581 = vpack.c.bf16 %v2573, %v2573
          %v2582 = vpack.c.bf16 %v2574, %v2574
          %v2583 = vpack.c.bf16 %v2575, %v2575
          %v2584 = vpack.c.bf16 %v2576, %v2576
          %v2585 = vld [vmem:[%s398] sm:$0xff]
          %v2586 = vld [vmem:[%s398 + $0x8] sm:$0xff]
          %v2587 = vld [vmem:[%s398 + $0x10] sm:$0xff]
          %v2588 = vld [vmem:[%s398 + $0x18] sm:$0xff]
          %v2589 = vld [vmem:[%s398 + $0x20] sm:$0xff]
          %v2590 = vld [vmem:[%s398 + $0x28] sm:$0xff]
          %v2591 = vld [vmem:[%s398 + $0x30] sm:$0xff]
          %v2592 = vld [vmem:[%s398 + $0x38] sm:$0xff]
          %v2593 = vld [vmem:[%s398 + $0x40] sm:$0xff]
          %v2594 = vld [vmem:[%s398 + $0x48] sm:$0xff]
          %v2595 = vld [vmem:[%s398 + $0x50] sm:$0xff]
          %v2596 = vld [vmem:[%s398 + $0x58] sm:$0xff]
          %v2597 = vld [vmem:[%s398 + $0x60] sm:$0xff]
          %v2598 = vld [vmem:[%s398 + $0x68] sm:$0xff]
          %v2599 = vld [vmem:[%s398 + $0x70] sm:$0xff]
          %v2600 = vld [vmem:[%s398 + $0x78] sm:$0xff]
          %v2601 = vld [vmem:[%s398 + $0x80] sm:$0xff]
          %v2602 = vld [vmem:[%s398 + $0x88] sm:$0xff]
          %v2603 = vld [vmem:[%s398 + $0x90] sm:$0xff]
          %v2604 = vld [vmem:[%s398 + $0x98] sm:$0xff]
          %v2605 = vld [vmem:[%s398 + $0xa0] sm:$0xff]
          %v2606 = vld [vmem:[%s398 + $0xa8] sm:$0xff]
          %v2607 = vld [vmem:[%s398 + $0xb0] sm:$0xff]
          %v2608 = vld [vmem:[%s398 + $0xb8] sm:$0xff]
          %v2609 = vld [vmem:[%s398 + $0xc0] sm:$0xff]
          %v2610 = vld [vmem:[%s398 + $0xc8] sm:$0xff]
          %v2611 = vld [vmem:[%s398 + $0xd0] sm:$0xff]
          %v2612 = vld [vmem:[%s398 + $0xd8] sm:$0xff]
          %v2613 = vld [vmem:[%s398 + $0xe0] sm:$0xff]
          %v2614 = vld [vmem:[%s398 + $0xe8] sm:$0xff]
          %v2615 = vld [vmem:[%s398 + $0xf0] sm:$0xff]
          %v2616 = vld [vmem:[%s398 + $0xf8] sm:$0xff]
          %v2617 = vld [vmem:[%s398 + $0x100] sm:$0xff]
          %v2618 = vld [vmem:[%s398 + $0x108] sm:$0xff]
          %v2619 = vld [vmem:[%s398 + $0x110] sm:$0xff]
          %v2620 = vld [vmem:[%s398 + $0x118] sm:$0xff]
          %v2621 = vld [vmem:[%s398 + $0x120] sm:$0xff]
          %v2622 = vld [vmem:[%s398 + $0x128] sm:$0xff]
          %v2623 = vld [vmem:[%s398 + $0x130] sm:$0xff]
          %v2624 = vld [vmem:[%s398 + $0x138] sm:$0xff]
          %v2625 = vld [vmem:[%s398 + $0x140] sm:$0xff]
          %v2626 = vld [vmem:[%s398 + $0x148] sm:$0xff]
          %v2627 = vld [vmem:[%s398 + $0x150] sm:$0xff]
          %v2628 = vld [vmem:[%s398 + $0x158] sm:$0xff]
          %v2629 = vld [vmem:[%s398 + $0x160] sm:$0xff]
          %v2630 = vld [vmem:[%s398 + $0x168] sm:$0xff]
          %v2631 = vld [vmem:[%s398 + $0x170] sm:$0xff]
          %v2632 = vld [vmem:[%s398 + $0x178] sm:$0xff]
          %v2633 = vld [vmem:[%s398 + $0x180] sm:$0xff]
          %v2634 = vld [vmem:[%s398 + $0x188] sm:$0xff]
          %v2635 = vld [vmem:[%s398 + $0x190] sm:$0xff]
          %v2636 = vld [vmem:[%s398 + $0x198] sm:$0xff]
          %v2637 = vld [vmem:[%s398 + $0x1a0] sm:$0xff]
          %v2638 = vld [vmem:[%s398 + $0x1a8] sm:$0xff]
          %v2639 = vld [vmem:[%s398 + $0x1b0] sm:$0xff]
          %v2640 = vld [vmem:[%s398 + $0x1b8] sm:$0xff]
          %v2641 = vld [vmem:[%s398 + $0x1c0] sm:$0xff]
          %v2642 = vld [vmem:[%s398 + $0x1c8] sm:$0xff]
          %v2643 = vld [vmem:[%s398 + $0x1d0] sm:$0xff]
          %v2644 = vld [vmem:[%s398 + $0x1d8] sm:$0xff]
          %v2645 = vld [vmem:[%s398 + $0x1e0] sm:$0xff]
          %v2646 = vld [vmem:[%s398 + $0x1e8] sm:$0xff]
          %v2647 = vld [vmem:[%s398 + $0x1f0] sm:$0xff]
          %v2648 = vld [vmem:[%s398 + $0x1f8] sm:$0xff]
          %v2649 = vld [vmem:[%s398 + $0x200] sm:$0xff]
          %v2650 = vld [vmem:[%s398 + $0x208] sm:$0xff]
          %v2651 = vld [vmem:[%s398 + $0x210] sm:$0xff]
          %v2652 = vld [vmem:[%s398 + $0x218] sm:$0xff]
          %v2653 = vld [vmem:[%s398 + $0x220] sm:$0xff]
          %v2654 = vld [vmem:[%s398 + $0x228] sm:$0xff]
          %v2655 = vld [vmem:[%s398 + $0x230] sm:$0xff]
          %v2656 = vld [vmem:[%s398 + $0x238] sm:$0xff]
          %v2657 = vld [vmem:[%s398 + $0x240] sm:$0xff]
          %v2658 = vld [vmem:[%s398 + $0x248] sm:$0xff]
          %v2659 = vld [vmem:[%s398 + $0x250] sm:$0xff]
          %v2660 = vld [vmem:[%s398 + $0x258] sm:$0xff]
          %v2661 = vld [vmem:[%s398 + $0x260] sm:$0xff]
          %v2662 = vld [vmem:[%s398 + $0x268] sm:$0xff]
          %v2663 = vld [vmem:[%s398 + $0x270] sm:$0xff]
          %v2664 = vld [vmem:[%s398 + $0x278] sm:$0xff]
          %v2665 = vld [vmem:[%s398 + $0x280] sm:$0xff]
          %v2666 = vld [vmem:[%s398 + $0x288] sm:$0xff]
          %v2667 = vld [vmem:[%s398 + $0x290] sm:$0xff]
          %v2668 = vld [vmem:[%s398 + $0x298] sm:$0xff]
          %v2669 = vld [vmem:[%s398 + $0x2a0] sm:$0xff]
          %v2670 = vld [vmem:[%s398 + $0x2a8] sm:$0xff]
          %v2671 = vld [vmem:[%s398 + $0x2b0] sm:$0xff]
          %v2672 = vld [vmem:[%s398 + $0x2b8] sm:$0xff]
          %v2673 = vld [vmem:[%s398 + $0x2c0] sm:$0xff]
          %v2674 = vld [vmem:[%s398 + $0x2c8] sm:$0xff]
          %v2675 = vld [vmem:[%s398 + $0x2d0] sm:$0xff]
          %v2676 = vld [vmem:[%s398 + $0x2d8] sm:$0xff]
          %v2677 = vld [vmem:[%s398 + $0x2e0] sm:$0xff]
          %v2678 = vld [vmem:[%s398 + $0x2e8] sm:$0xff]
          %v2679 = vld [vmem:[%s398 + $0x2f0] sm:$0xff]
          %v2680 = vld [vmem:[%s398 + $0x2f8] sm:$0xff]
          %v2681 = vld [vmem:[%s398 + $0x300] sm:$0xff]
          %v2682 = vld [vmem:[%s398 + $0x308] sm:$0xff]
          %v2683 = vld [vmem:[%s398 + $0x310] sm:$0xff]
          %v2684 = vld [vmem:[%s398 + $0x318] sm:$0xff]
          %v2685 = vld [vmem:[%s398 + $0x320] sm:$0xff]
          %v2686 = vld [vmem:[%s398 + $0x328] sm:$0xff]
          %v2687 = vld [vmem:[%s398 + $0x330] sm:$0xff]
          %v2688 = vld [vmem:[%s398 + $0x338] sm:$0xff]
          %v2689 = vld [vmem:[%s398 + $0x340] sm:$0xff]
          %v2690 = vld [vmem:[%s398 + $0x348] sm:$0xff]
          %v2691 = vld [vmem:[%s398 + $0x350] sm:$0xff]
          %v2692 = vld [vmem:[%s398 + $0x358] sm:$0xff]
          %v2693 = vld [vmem:[%s398 + $0x360] sm:$0xff]
          %v2694 = vld [vmem:[%s398 + $0x368] sm:$0xff]
          %v2695 = vld [vmem:[%s398 + $0x370] sm:$0xff]
          %v2696 = vld [vmem:[%s398 + $0x378] sm:$0xff]
          %v2697 = vld [vmem:[%s398 + $0x380] sm:$0xff]
          %v2698 = vld [vmem:[%s398 + $0x388] sm:$0xff]
          %v2699 = vld [vmem:[%s398 + $0x390] sm:$0xff]
          %v2700 = vld [vmem:[%s398 + $0x398] sm:$0xff]
          %v2701 = vld [vmem:[%s398 + $0x3a0] sm:$0xff]
          %v2702 = vld [vmem:[%s398 + $0x3a8] sm:$0xff]
          %v2703 = vld [vmem:[%s398 + $0x3b0] sm:$0xff]
          %v2704 = vld [vmem:[%s398 + $0x3b8] sm:$0xff]
          %v2705 = vld [vmem:[%s398 + $0x3c0] sm:$0xff]
          %v2706 = vld [vmem:[%s398 + $0x3c8] sm:$0xff]
          %v2707 = vld [vmem:[%s398 + $0x3d0] sm:$0xff]
          %v2708 = vld [vmem:[%s398 + $0x3d8] sm:$0xff]
          %v2709 = vld [vmem:[%s398 + $0x3e0] sm:$0xff]
          %v2710 = vld [vmem:[%s398 + $0x3e8] sm:$0xff]
          %v2711 = vld [vmem:[%s398 + $0x3f0] sm:$0xff]
          %v2712 = vld [vmem:[%s398 + $0x3f8] sm:$0xff]
          %v2713 = vld [vmem:[%s398 + $0x400] sm:$0xff]
          %v2714 = vld [vmem:[%s398 + $0x408] sm:$0xff]
          %v2715 = vld [vmem:[%s398 + $0x410] sm:$0xff]
          %v2716 = vld [vmem:[%s398 + $0x418] sm:$0xff]
          %v2717 = vld [vmem:[%s398 + $0x420] sm:$0xff]
          %v2718 = vld [vmem:[%s398 + $0x428] sm:$0xff]
          %v2719 = vld [vmem:[%s398 + $0x430] sm:$0xff]
          %v2720 = vld [vmem:[%s398 + $0x438] sm:$0xff]
          %v2721 = vld [vmem:[%s398 + $0x440] sm:$0xff]
          %v2722 = vld [vmem:[%s398 + $0x448] sm:$0xff]
          %v2723 = vld [vmem:[%s398 + $0x450] sm:$0xff]
          %v2724 = vld [vmem:[%s398 + $0x458] sm:$0xff]
          %v2725 = vld [vmem:[%s398 + $0x460] sm:$0xff]
          %v2726 = vld [vmem:[%s398 + $0x468] sm:$0xff]
          %v2727 = vld [vmem:[%s398 + $0x470] sm:$0xff]
          %v2728 = vld [vmem:[%s398 + $0x478] sm:$0xff]
          %v2729 = vld [vmem:[%s398 + $0x480] sm:$0xff]
          %v2730 = vld [vmem:[%s398 + $0x488] sm:$0xff]
          %v2731 = vld [vmem:[%s398 + $0x490] sm:$0xff]
          %v2732 = vld [vmem:[%s398 + $0x498] sm:$0xff]
          %v2733 = vld [vmem:[%s398 + $0x4a0] sm:$0xff]
          %v2734 = vld [vmem:[%s398 + $0x4a8] sm:$0xff]
          %v2735 = vld [vmem:[%s398 + $0x4b0] sm:$0xff]
          %v2736 = vld [vmem:[%s398 + $0x4b8] sm:$0xff]
          %v2737 = vld [vmem:[%s398 + $0x4c0] sm:$0xff]
          %v2738 = vld [vmem:[%s398 + $0x4c8] sm:$0xff]
          %v2739 = vld [vmem:[%s398 + $0x4d0] sm:$0xff]
          %v2740 = vld [vmem:[%s398 + $0x4d8] sm:$0xff]
          %v2741 = vld [vmem:[%s398 + $0x4e0] sm:$0xff]
          %v2742 = vld [vmem:[%s398 + $0x4e8] sm:$0xff]
          %v2743 = vld [vmem:[%s398 + $0x4f0] sm:$0xff]
          %v2744 = vld [vmem:[%s398 + $0x4f8] sm:$0xff]
          %v2745 = vld [vmem:[%s398 + $0x500] sm:$0xff]
          %v2746 = vld [vmem:[%s398 + $0x508] sm:$0xff]
          %v2747 = vld [vmem:[%s398 + $0x510] sm:$0xff]
          %v2748 = vld [vmem:[%s398 + $0x518] sm:$0xff]
          %v2749 = vld [vmem:[%s398 + $0x520] sm:$0xff]
          %v2750 = vld [vmem:[%s398 + $0x528] sm:$0xff]
          %v2751 = vld [vmem:[%s398 + $0x530] sm:$0xff]
          %v2752 = vld [vmem:[%s398 + $0x538] sm:$0xff]
          %v2753 = vld [vmem:[%s398 + $0x540] sm:$0xff]
          %v2754 = vld [vmem:[%s398 + $0x548] sm:$0xff]
          %v2755 = vld [vmem:[%s398 + $0x550] sm:$0xff]
          %v2756 = vld [vmem:[%s398 + $0x558] sm:$0xff]
          %v2757 = vld [vmem:[%s398 + $0x560] sm:$0xff]
          %v2758 = vld [vmem:[%s398 + $0x568] sm:$0xff]
          %v2759 = vld [vmem:[%s398 + $0x570] sm:$0xff]
          %v2760 = vld [vmem:[%s398 + $0x578] sm:$0xff]
          %v2761 = vld [vmem:[%s398 + $0x580] sm:$0xff]
          %v2762 = vld [vmem:[%s398 + $0x588] sm:$0xff]
          %v2763 = vld [vmem:[%s398 + $0x590] sm:$0xff]
          %v2764 = vld [vmem:[%s398 + $0x598] sm:$0xff]
          %v2765 = vld [vmem:[%s398 + $0x5a0] sm:$0xff]
          %v2766 = vld [vmem:[%s398 + $0x5a8] sm:$0xff]
          %v2767 = vld [vmem:[%s398 + $0x5b0] sm:$0xff]
          %v2768 = vld [vmem:[%s398 + $0x5b8] sm:$0xff]
          %v2769 = vld [vmem:[%s398 + $0x5c0] sm:$0xff]
          %v2770 = vld [vmem:[%s398 + $0x5c8] sm:$0xff]
          %v2771 = vld [vmem:[%s398 + $0x5d0] sm:$0xff]
          %v2772 = vld [vmem:[%s398 + $0x5d8] sm:$0xff]
          %v2773 = vld [vmem:[%s398 + $0x5e0] sm:$0xff]
          %v2774 = vld [vmem:[%s398 + $0x5e8] sm:$0xff]
          %v2775 = vld [vmem:[%s398 + $0x5f0] sm:$0xff]
          %v2776 = vld [vmem:[%s398 + $0x5f8] sm:$0xff]
          %v2777 = vld [vmem:[%s398 + $0x600] sm:$0xff]
          %v2778 = vld [vmem:[%s398 + $0x608] sm:$0xff]
          %v2779 = vld [vmem:[%s398 + $0x610] sm:$0xff]
          %v2780 = vld [vmem:[%s398 + $0x618] sm:$0xff]
          %v2781 = vld [vmem:[%s398 + $0x620] sm:$0xff]
          %v2782 = vld [vmem:[%s398 + $0x628] sm:$0xff]
          %v2783 = vld [vmem:[%s398 + $0x630] sm:$0xff]
          %v2784 = vld [vmem:[%s398 + $0x638] sm:$0xff]
          %v2785 = vld [vmem:[%s398 + $0x640] sm:$0xff]
          %v2786 = vld [vmem:[%s398 + $0x648] sm:$0xff]
          %v2787 = vld [vmem:[%s398 + $0x650] sm:$0xff]
          %v2788 = vld [vmem:[%s398 + $0x658] sm:$0xff]
          %v2789 = vld [vmem:[%s398 + $0x660] sm:$0xff]
          %v2790 = vld [vmem:[%s398 + $0x668] sm:$0xff]
          %v2791 = vld [vmem:[%s398 + $0x670] sm:$0xff]
          %v2792 = vld [vmem:[%s398 + $0x678] sm:$0xff]
          %v2793 = vld [vmem:[%s398 + $0x680] sm:$0xff]
          %v2794 = vld [vmem:[%s398 + $0x688] sm:$0xff]
          %v2795 = vld [vmem:[%s398 + $0x690] sm:$0xff]
          %v2796 = vld [vmem:[%s398 + $0x698] sm:$0xff]
          %v2797 = vld [vmem:[%s398 + $0x6a0] sm:$0xff]
          %v2798 = vld [vmem:[%s398 + $0x6a8] sm:$0xff]
          %v2799 = vld [vmem:[%s398 + $0x6b0] sm:$0xff]
          %v2800 = vld [vmem:[%s398 + $0x6b8] sm:$0xff]
          %v2801 = vld [vmem:[%s398 + $0x6c0] sm:$0xff]
          %v2802 = vld [vmem:[%s398 + $0x6c8] sm:$0xff]
          %v2803 = vld [vmem:[%s398 + $0x6d0] sm:$0xff]
          %v2804 = vld [vmem:[%s398 + $0x6d8] sm:$0xff]
          %v2805 = vld [vmem:[%s398 + $0x6e0] sm:$0xff]
          %v2806 = vld [vmem:[%s398 + $0x6e8] sm:$0xff]
          %v2807 = vld [vmem:[%s398 + $0x6f0] sm:$0xff]
          %v2808 = vld [vmem:[%s398 + $0x6f8] sm:$0xff]
          %v2809 = vld [vmem:[%s398 + $0x700] sm:$0xff]
          %v2810 = vld [vmem:[%s398 + $0x708] sm:$0xff]
          %v2811 = vld [vmem:[%s398 + $0x710] sm:$0xff]
          %v2812 = vld [vmem:[%s398 + $0x718] sm:$0xff]
          %v2813 = vld [vmem:[%s398 + $0x720] sm:$0xff]
          %v2814 = vld [vmem:[%s398 + $0x728] sm:$0xff]
          %v2815 = vld [vmem:[%s398 + $0x730] sm:$0xff]
          %v2816 = vld [vmem:[%s398 + $0x738] sm:$0xff]
          %v2817 = vld [vmem:[%s398 + $0x740] sm:$0xff]
          %v2818 = vld [vmem:[%s398 + $0x748] sm:$0xff]
          %v2819 = vld [vmem:[%s398 + $0x750] sm:$0xff]
          %v2820 = vld [vmem:[%s398 + $0x758] sm:$0xff]
          %v2821 = vld [vmem:[%s398 + $0x760] sm:$0xff]
          %v2822 = vld [vmem:[%s398 + $0x768] sm:$0xff]
          %v2823 = vld [vmem:[%s398 + $0x770] sm:$0xff]
          %v2824 = vld [vmem:[%s398 + $0x778] sm:$0xff]
          %v2825 = vld [vmem:[%s398 + $0x780] sm:$0xff]
          %v2826 = vld [vmem:[%s398 + $0x788] sm:$0xff]
          %v2827 = vld [vmem:[%s398 + $0x790] sm:$0xff]
          %v2828 = vld [vmem:[%s398 + $0x798] sm:$0xff]
          %v2829 = vld [vmem:[%s398 + $0x7a0] sm:$0xff]
          %v2830 = vld [vmem:[%s398 + $0x7a8] sm:$0xff]
          %v2831 = vld [vmem:[%s398 + $0x7b0] sm:$0xff]
          %v2832 = vld [vmem:[%s398 + $0x7b8] sm:$0xff]
          %v2833 = vld [vmem:[%s398 + $0x7c0] sm:$0xff]
          %v2834 = vld [vmem:[%s398 + $0x7c8] sm:$0xff]
          %v2835 = vld [vmem:[%s398 + $0x7d0] sm:$0xff]
          %v2836 = vld [vmem:[%s398 + $0x7d8] sm:$0xff]
          %v2837 = vld [vmem:[%s398 + $0x7e0] sm:$0xff]
          %v2838 = vld [vmem:[%s398 + $0x7e8] sm:$0xff]
          %v2839 = vld [vmem:[%s398 + $0x7f0] sm:$0xff]
          %v2840 = vld [vmem:[%s398 + $0x7f8] sm:$0xff]
          %v2841 = vld [vmem:[%s408] sm:$0xf]
          %v2843 = vperm.slane %v2841, 0
          %v2844 = vperm.slane %v2841, 1
          %v2845 = vperm.slane %v2841, 2
          %v2846 = vperm.slane %v2841, 3
          %v3107 = vunpack.c.l.b16 %v2585
          %v3108 = vunpack.c.h.b16 %v2585
          %v3109 = vunpack.c.l.b16 %v2586
          %v3110 = vunpack.c.h.b16 %v2586
          %v3111 = vunpack.c.l.b16 %v2587
          %v3112 = vunpack.c.h.b16 %v2587
          %v3113 = vunpack.c.l.b16 %v2588
          %v3114 = vunpack.c.h.b16 %v2588
          %v3115 = vunpack.c.l.b16 %v2589
          %v3116 = vunpack.c.h.b16 %v2589
          %v3117 = vunpack.c.l.b16 %v2590
          %v3118 = vunpack.c.h.b16 %v2590
          %v3119 = vunpack.c.l.b16 %v2591
          %v3120 = vunpack.c.h.b16 %v2591
          %v3121 = vunpack.c.l.b16 %v2592
          %v3122 = vunpack.c.h.b16 %v2592
          %v3123 = vunpack.c.l.b16 %v2593
          %v3124 = vunpack.c.h.b16 %v2593
          %v3125 = vunpack.c.l.b16 %v2594
          %v3126 = vunpack.c.h.b16 %v2594
          %v3127 = vunpack.c.l.b16 %v2595
          %v3128 = vunpack.c.h.b16 %v2595
          %v3129 = vunpack.c.l.b16 %v2596
          %v3130 = vunpack.c.h.b16 %v2596
          %v3131 = vunpack.c.l.b16 %v2597
          %v3132 = vunpack.c.h.b16 %v2597
          %v3133 = vunpack.c.l.b16 %v2598
          %v3134 = vunpack.c.h.b16 %v2598
          %v3135 = vunpack.c.l.b16 %v2599
          %v3136 = vunpack.c.h.b16 %v2599
          %v3137 = vunpack.c.l.b16 %v2600
          %v3138 = vunpack.c.h.b16 %v2600
          %v3139 = vunpack.c.l.b16 %v2601
          %v3140 = vunpack.c.h.b16 %v2601
          %v3141 = vunpack.c.l.b16 %v2602
          %v3142 = vunpack.c.h.b16 %v2602
          %v3143 = vunpack.c.l.b16 %v2603
          %v3144 = vunpack.c.h.b16 %v2603
          %v3145 = vunpack.c.l.b16 %v2604
          %v3146 = vunpack.c.h.b16 %v2604
          %v3147 = vunpack.c.l.b16 %v2605
          %v3148 = vunpack.c.h.b16 %v2605
          %v3149 = vunpack.c.l.b16 %v2606
          %v3150 = vunpack.c.h.b16 %v2606
          %v3151 = vunpack.c.l.b16 %v2607
          %v3152 = vunpack.c.h.b16 %v2607
          %v3153 = vunpack.c.l.b16 %v2608
          %v3154 = vunpack.c.h.b16 %v2608
          %v3155 = vunpack.c.l.b16 %v2609
          %v3156 = vunpack.c.h.b16 %v2609
          %v3157 = vunpack.c.l.b16 %v2610
          %v3158 = vunpack.c.h.b16 %v2610
          %v3159 = vunpack.c.l.b16 %v2611
          %v3160 = vunpack.c.h.b16 %v2611
          %v3161 = vunpack.c.l.b16 %v2612
          %v3162 = vunpack.c.h.b16 %v2612
          %v3163 = vunpack.c.l.b16 %v2613
          %v3164 = vunpack.c.h.b16 %v2613
          %v3165 = vunpack.c.l.b16 %v2614
          %v3166 = vunpack.c.h.b16 %v2614
          %v3167 = vunpack.c.l.b16 %v2615
          %v3168 = vunpack.c.h.b16 %v2615
          %v3169 = vunpack.c.l.b16 %v2616
          %v3170 = vunpack.c.h.b16 %v2616
          %v3171 = vunpack.c.l.b16 %v2617
          %v3172 = vunpack.c.h.b16 %v2617
          %v3173 = vunpack.c.l.b16 %v2618
          %v3174 = vunpack.c.h.b16 %v2618
          %v3175 = vunpack.c.l.b16 %v2619
          %v3176 = vunpack.c.h.b16 %v2619
          %v3177 = vunpack.c.l.b16 %v2620
          %v3178 = vunpack.c.h.b16 %v2620
          %v3179 = vunpack.c.l.b16 %v2621
          %v3180 = vunpack.c.h.b16 %v2621
          %v3181 = vunpack.c.l.b16 %v2622
          %v3182 = vunpack.c.h.b16 %v2622
          %v3183 = vunpack.c.l.b16 %v2623
          %v3184 = vunpack.c.h.b16 %v2623
          %v3185 = vunpack.c.l.b16 %v2624
          %v3186 = vunpack.c.h.b16 %v2624
          %v3187 = vunpack.c.l.b16 %v2625
          %v3188 = vunpack.c.h.b16 %v2625
          %v3189 = vunpack.c.l.b16 %v2626
          %v3190 = vunpack.c.h.b16 %v2626
          %v3191 = vunpack.c.l.b16 %v2627
          %v3192 = vunpack.c.h.b16 %v2627
          %v3193 = vunpack.c.l.b16 %v2628
          %v3194 = vunpack.c.h.b16 %v2628
          %v3195 = vunpack.c.l.b16 %v2629
          %v3196 = vunpack.c.h.b16 %v2629
          %v3197 = vunpack.c.l.b16 %v2630
          %v3198 = vunpack.c.h.b16 %v2630
          %v3199 = vunpack.c.l.b16 %v2631
          %v3200 = vunpack.c.h.b16 %v2631
          %v3201 = vunpack.c.l.b16 %v2632
          %v3202 = vunpack.c.h.b16 %v2632
          %v3203 = vunpack.c.l.b16 %v2633
          %v3204 = vunpack.c.h.b16 %v2633
          %v3205 = vunpack.c.l.b16 %v2634
          %v3206 = vunpack.c.h.b16 %v2634
          %v3207 = vunpack.c.l.b16 %v2635
          %v3208 = vunpack.c.h.b16 %v2635
          %v3209 = vunpack.c.l.b16 %v2636
          %v3210 = vunpack.c.h.b16 %v2636
          %v3211 = vunpack.c.l.b16 %v2637
          %v3212 = vunpack.c.h.b16 %v2637
          %v3213 = vunpack.c.l.b16 %v2638
          %v3214 = vunpack.c.h.b16 %v2638
          %v3215 = vunpack.c.l.b16 %v2639
          %v3216 = vunpack.c.h.b16 %v2639
          %v3217 = vunpack.c.l.b16 %v2640
          %v3218 = vunpack.c.h.b16 %v2640
          %v3219 = vunpack.c.l.b16 %v2641
          %v3220 = vunpack.c.h.b16 %v2641
          %v3221 = vunpack.c.l.b16 %v2642
          %v3222 = vunpack.c.h.b16 %v2642
          %v3223 = vunpack.c.l.b16 %v2643
          %v3224 = vunpack.c.h.b16 %v2643
          %v3225 = vunpack.c.l.b16 %v2644
          %v3226 = vunpack.c.h.b16 %v2644
          %v3227 = vunpack.c.l.b16 %v2645
          %v3228 = vunpack.c.h.b16 %v2645
          %v3229 = vunpack.c.l.b16 %v2646
          %v3230 = vunpack.c.h.b16 %v2646
          %v3231 = vunpack.c.l.b16 %v2647
          %v3232 = vunpack.c.h.b16 %v2647
          %v3233 = vunpack.c.l.b16 %v2648
          %v3234 = vunpack.c.h.b16 %v2648
          %v3235 = vunpack.c.l.b16 %v2649
          %v3236 = vunpack.c.h.b16 %v2649
          %v3237 = vunpack.c.l.b16 %v2650
          %v3238 = vunpack.c.h.b16 %v2650
          %v3239 = vunpack.c.l.b16 %v2651
          %v3240 = vunpack.c.h.b16 %v2651
          %v3241 = vunpack.c.l.b16 %v2652
          %v3242 = vunpack.c.h.b16 %v2652
          %v3243 = vunpack.c.l.b16 %v2653
          %v3244 = vunpack.c.h.b16 %v2653
          %v3245 = vunpack.c.l.b16 %v2654
          %v3246 = vunpack.c.h.b16 %v2654
          %v3247 = vunpack.c.l.b16 %v2655
          %v3248 = vunpack.c.h.b16 %v2655
          %v3249 = vunpack.c.l.b16 %v2656
          %v3250 = vunpack.c.h.b16 %v2656
          %v3251 = vunpack.c.l.b16 %v2657
          %v3252 = vunpack.c.h.b16 %v2657
          %v3253 = vunpack.c.l.b16 %v2658
          %v3254 = vunpack.c.h.b16 %v2658
          %v3255 = vunpack.c.l.b16 %v2659
          %v3256 = vunpack.c.h.b16 %v2659
          %v3257 = vunpack.c.l.b16 %v2660
          %v3258 = vunpack.c.h.b16 %v2660
          %v3259 = vunpack.c.l.b16 %v2661
          %v3260 = vunpack.c.h.b16 %v2661
          %v3261 = vunpack.c.l.b16 %v2662
          %v3262 = vunpack.c.h.b16 %v2662
          %v3263 = vunpack.c.l.b16 %v2663
          %v3264 = vunpack.c.h.b16 %v2663
          %v3265 = vunpack.c.l.b16 %v2664
          %v3266 = vunpack.c.h.b16 %v2664
          %v3267 = vunpack.c.l.b16 %v2665
          %v3268 = vunpack.c.h.b16 %v2665
          %v3269 = vunpack.c.l.b16 %v2666
          %v3270 = vunpack.c.h.b16 %v2666
          %v3271 = vunpack.c.l.b16 %v2667
          %v3272 = vunpack.c.h.b16 %v2667
          %v3273 = vunpack.c.l.b16 %v2668
          %v3274 = vunpack.c.h.b16 %v2668
          %v3275 = vunpack.c.l.b16 %v2669
          %v3276 = vunpack.c.h.b16 %v2669
          %v3277 = vunpack.c.l.b16 %v2670
          %v3278 = vunpack.c.h.b16 %v2670
          %v3279 = vunpack.c.l.b16 %v2671
          %v3280 = vunpack.c.h.b16 %v2671
          %v3281 = vunpack.c.l.b16 %v2672
          %v3282 = vunpack.c.h.b16 %v2672
          %v3283 = vunpack.c.l.b16 %v2673
          %v3284 = vunpack.c.h.b16 %v2673
          %v3285 = vunpack.c.l.b16 %v2674
          %v3286 = vunpack.c.h.b16 %v2674
          %v3287 = vunpack.c.l.b16 %v2675
          %v3288 = vunpack.c.h.b16 %v2675
          %v3289 = vunpack.c.l.b16 %v2676
          %v3290 = vunpack.c.h.b16 %v2676
          %v3291 = vunpack.c.l.b16 %v2677
          %v3292 = vunpack.c.h.b16 %v2677
          %v3293 = vunpack.c.l.b16 %v2678
          %v3294 = vunpack.c.h.b16 %v2678
          %v3295 = vunpack.c.l.b16 %v2679
          %v3296 = vunpack.c.h.b16 %v2679
          %v3297 = vunpack.c.l.b16 %v2680
          %v3298 = vunpack.c.h.b16 %v2680
          %v3299 = vunpack.c.l.b16 %v2681
          %v3300 = vunpack.c.h.b16 %v2681
          %v3301 = vunpack.c.l.b16 %v2682
          %v3302 = vunpack.c.h.b16 %v2682
          %v3303 = vunpack.c.l.b16 %v2683
          %v3304 = vunpack.c.h.b16 %v2683
          %v3305 = vunpack.c.l.b16 %v2684
          %v3306 = vunpack.c.h.b16 %v2684
          %v3307 = vunpack.c.l.b16 %v2685
          %v3308 = vunpack.c.h.b16 %v2685
          %v3309 = vunpack.c.l.b16 %v2686
          %v3310 = vunpack.c.h.b16 %v2686
          %v3311 = vunpack.c.l.b16 %v2687
          %v3312 = vunpack.c.h.b16 %v2687
          %v3313 = vunpack.c.l.b16 %v2688
          %v3314 = vunpack.c.h.b16 %v2688
          %v3315 = vunpack.c.l.b16 %v2689
          %v3316 = vunpack.c.h.b16 %v2689
          %v3317 = vunpack.c.l.b16 %v2690
          %v3318 = vunpack.c.h.b16 %v2690
          %v3319 = vunpack.c.l.b16 %v2691
          %v3320 = vunpack.c.h.b16 %v2691
          %v3321 = vunpack.c.l.b16 %v2692
          %v3322 = vunpack.c.h.b16 %v2692
          %v3323 = vunpack.c.l.b16 %v2693
          %v3324 = vunpack.c.h.b16 %v2693
          %v3325 = vunpack.c.l.b16 %v2694
          %v3326 = vunpack.c.h.b16 %v2694
          %v3327 = vunpack.c.l.b16 %v2695
          %v3328 = vunpack.c.h.b16 %v2695
          %v3329 = vunpack.c.l.b16 %v2696
          %v3330 = vunpack.c.h.b16 %v2696
          %v3331 = vunpack.c.l.b16 %v2697
          %v3332 = vunpack.c.h.b16 %v2697
          %v3333 = vunpack.c.l.b16 %v2698
          %v3334 = vunpack.c.h.b16 %v2698
          %v3335 = vunpack.c.l.b16 %v2699
          %v3336 = vunpack.c.h.b16 %v2699
          %v3337 = vunpack.c.l.b16 %v2700
          %v3338 = vunpack.c.h.b16 %v2700
          %v3339 = vunpack.c.l.b16 %v2701
          %v3340 = vunpack.c.h.b16 %v2701
          %v3341 = vunpack.c.l.b16 %v2702
          %v3342 = vunpack.c.h.b16 %v2702
          %v3343 = vunpack.c.l.b16 %v2703
          %v3344 = vunpack.c.h.b16 %v2703
          %v3345 = vunpack.c.l.b16 %v2704
          %v3346 = vunpack.c.h.b16 %v2704
          %v3347 = vunpack.c.l.b16 %v2705
          %v3348 = vunpack.c.h.b16 %v2705
          %v3349 = vunpack.c.l.b16 %v2706
          %v3350 = vunpack.c.h.b16 %v2706
          %v3351 = vunpack.c.l.b16 %v2707
          %v3352 = vunpack.c.h.b16 %v2707
          %v3353 = vunpack.c.l.b16 %v2708
          %v3354 = vunpack.c.h.b16 %v2708
          %v3355 = vunpack.c.l.b16 %v2709
          %v3356 = vunpack.c.h.b16 %v2709
          %v3357 = vunpack.c.l.b16 %v2710
          %v3358 = vunpack.c.h.b16 %v2710
          %v3359 = vunpack.c.l.b16 %v2711
          %v3360 = vunpack.c.h.b16 %v2711
          %v3361 = vunpack.c.l.b16 %v2712
          %v3362 = vunpack.c.h.b16 %v2712
          %v3363 = vunpack.c.l.b16 %v2713
          %v3364 = vunpack.c.h.b16 %v2713
          %v3365 = vunpack.c.l.b16 %v2714
          %v3366 = vunpack.c.h.b16 %v2714
          %v3367 = vunpack.c.l.b16 %v2715
          %v3368 = vunpack.c.h.b16 %v2715
          %v3369 = vunpack.c.l.b16 %v2716
          %v3370 = vunpack.c.h.b16 %v2716
          %v3371 = vunpack.c.l.b16 %v2717
          %v3372 = vunpack.c.h.b16 %v2717
          %v3373 = vunpack.c.l.b16 %v2718
          %v3374 = vunpack.c.h.b16 %v2718
          %v3375 = vunpack.c.l.b16 %v2719
          %v3376 = vunpack.c.h.b16 %v2719
          %v3377 = vunpack.c.l.b16 %v2720
          %v3378 = vunpack.c.h.b16 %v2720
          %v3379 = vunpack.c.l.b16 %v2721
          %v3380 = vunpack.c.h.b16 %v2721
          %v3381 = vunpack.c.l.b16 %v2722
          %v3382 = vunpack.c.h.b16 %v2722
          %v3383 = vunpack.c.l.b16 %v2723
          %v3384 = vunpack.c.h.b16 %v2723
          %v3385 = vunpack.c.l.b16 %v2724
          %v3386 = vunpack.c.h.b16 %v2724
          %v3387 = vunpack.c.l.b16 %v2725
          %v3388 = vunpack.c.h.b16 %v2725
          %v3389 = vunpack.c.l.b16 %v2726
          %v3390 = vunpack.c.h.b16 %v2726
          %v3391 = vunpack.c.l.b16 %v2727
          %v3392 = vunpack.c.h.b16 %v2727
          %v3393 = vunpack.c.l.b16 %v2728
          %v3394 = vunpack.c.h.b16 %v2728
          %v3395 = vunpack.c.l.b16 %v2729
          %v3396 = vunpack.c.h.b16 %v2729
          %v3397 = vunpack.c.l.b16 %v2730
          %v3398 = vunpack.c.h.b16 %v2730
          %v3399 = vunpack.c.l.b16 %v2731
          %v3400 = vunpack.c.h.b16 %v2731
          %v3401 = vunpack.c.l.b16 %v2732
          %v3402 = vunpack.c.h.b16 %v2732
          %v3403 = vunpack.c.l.b16 %v2733
          %v3404 = vunpack.c.h.b16 %v2733
          %v3405 = vunpack.c.l.b16 %v2734
          %v3406 = vunpack.c.h.b16 %v2734
          %v3407 = vunpack.c.l.b16 %v2735
          %v3408 = vunpack.c.h.b16 %v2735
          %v3409 = vunpack.c.l.b16 %v2736
          %v3410 = vunpack.c.h.b16 %v2736
          %v3411 = vunpack.c.l.b16 %v2737
          %v3412 = vunpack.c.h.b16 %v2737
          %v3413 = vunpack.c.l.b16 %v2738
          %v3414 = vunpack.c.h.b16 %v2738
          %v3415 = vunpack.c.l.b16 %v2739
          %v3416 = vunpack.c.h.b16 %v2739
          %v3417 = vunpack.c.l.b16 %v2740
          %v3418 = vunpack.c.h.b16 %v2740
          %v3419 = vunpack.c.l.b16 %v2741
          %v3420 = vunpack.c.h.b16 %v2741
          %v3421 = vunpack.c.l.b16 %v2742
          %v3422 = vunpack.c.h.b16 %v2742
          %v3423 = vunpack.c.l.b16 %v2743
          %v3424 = vunpack.c.h.b16 %v2743
          %v3425 = vunpack.c.l.b16 %v2744
          %v3426 = vunpack.c.h.b16 %v2744
          %v3427 = vunpack.c.l.b16 %v2745
          %v3428 = vunpack.c.h.b16 %v2745
          %v3429 = vunpack.c.l.b16 %v2746
          %v3430 = vunpack.c.h.b16 %v2746
          %v3431 = vunpack.c.l.b16 %v2747
          %v3432 = vunpack.c.h.b16 %v2747
          %v3433 = vunpack.c.l.b16 %v2748
          %v3434 = vunpack.c.h.b16 %v2748
          %v3435 = vunpack.c.l.b16 %v2749
          %v3436 = vunpack.c.h.b16 %v2749
          %v3437 = vunpack.c.l.b16 %v2750
          %v3438 = vunpack.c.h.b16 %v2750
          %v3439 = vunpack.c.l.b16 %v2751
          %v3440 = vunpack.c.h.b16 %v2751
          %v3441 = vunpack.c.l.b16 %v2752
          %v3442 = vunpack.c.h.b16 %v2752
          %v3443 = vunpack.c.l.b16 %v2753
          %v3444 = vunpack.c.h.b16 %v2753
          %v3445 = vunpack.c.l.b16 %v2754
          %v3446 = vunpack.c.h.b16 %v2754
          %v3447 = vunpack.c.l.b16 %v2755
          %v3448 = vunpack.c.h.b16 %v2755
          %v3449 = vunpack.c.l.b16 %v2756
          %v3450 = vunpack.c.h.b16 %v2756
          %v3451 = vunpack.c.l.b16 %v2757
          %v3452 = vunpack.c.h.b16 %v2757
          %v3453 = vunpack.c.l.b16 %v2758
          %v3454 = vunpack.c.h.b16 %v2758
          %v3455 = vunpack.c.l.b16 %v2759
          %v3456 = vunpack.c.h.b16 %v2759
          %v3457 = vunpack.c.l.b16 %v2760
          %v3458 = vunpack.c.h.b16 %v2760
          %v3459 = vunpack.c.l.b16 %v2761
          %v3460 = vunpack.c.h.b16 %v2761
          %v3461 = vunpack.c.l.b16 %v2762
          %v3462 = vunpack.c.h.b16 %v2762
          %v3463 = vunpack.c.l.b16 %v2763
          %v3464 = vunpack.c.h.b16 %v2763
          %v3465 = vunpack.c.l.b16 %v2764
          %v3466 = vunpack.c.h.b16 %v2764
          %v3467 = vunpack.c.l.b16 %v2765
          %v3468 = vunpack.c.h.b16 %v2765
          %v3469 = vunpack.c.l.b16 %v2766
          %v3470 = vunpack.c.h.b16 %v2766
          %v3471 = vunpack.c.l.b16 %v2767
          %v3472 = vunpack.c.h.b16 %v2767
          %v3473 = vunpack.c.l.b16 %v2768
          %v3474 = vunpack.c.h.b16 %v2768
          %v3475 = vunpack.c.l.b16 %v2769
          %v3476 = vunpack.c.h.b16 %v2769
          %v3477 = vunpack.c.l.b16 %v2770
          %v3478 = vunpack.c.h.b16 %v2770
          %v3479 = vunpack.c.l.b16 %v2771
          %v3480 = vunpack.c.h.b16 %v2771
          %v3481 = vunpack.c.l.b16 %v2772
          %v3482 = vunpack.c.h.b16 %v2772
          %v3483 = vunpack.c.l.b16 %v2773
          %v3484 = vunpack.c.h.b16 %v2773
          %v3485 = vunpack.c.l.b16 %v2774
          %v3486 = vunpack.c.h.b16 %v2774
          %v3487 = vunpack.c.l.b16 %v2775
          %v3488 = vunpack.c.h.b16 %v2775
          %v3489 = vunpack.c.l.b16 %v2776
          %v3490 = vunpack.c.h.b16 %v2776
          %v3491 = vunpack.c.l.b16 %v2777
          %v3492 = vunpack.c.h.b16 %v2777
          %v3493 = vunpack.c.l.b16 %v2778
          %v3494 = vunpack.c.h.b16 %v2778
          %v3495 = vunpack.c.l.b16 %v2779
          %v3496 = vunpack.c.h.b16 %v2779
          %v3497 = vunpack.c.l.b16 %v2780
          %v3498 = vunpack.c.h.b16 %v2780
          %v3499 = vunpack.c.l.b16 %v2781
          %v3500 = vunpack.c.h.b16 %v2781
          %v3501 = vunpack.c.l.b16 %v2782
          %v3502 = vunpack.c.h.b16 %v2782
          %v3503 = vunpack.c.l.b16 %v2783
          %v3504 = vunpack.c.h.b16 %v2783
          %v3505 = vunpack.c.l.b16 %v2784
          %v3506 = vunpack.c.h.b16 %v2784
          %v3507 = vunpack.c.l.b16 %v2785
          %v3508 = vunpack.c.h.b16 %v2785
          %v3509 = vunpack.c.l.b16 %v2786
          %v3510 = vunpack.c.h.b16 %v2786
          %v3511 = vunpack.c.l.b16 %v2787
          %v3512 = vunpack.c.h.b16 %v2787
          %v3513 = vunpack.c.l.b16 %v2788
          %v3514 = vunpack.c.h.b16 %v2788
          %v3515 = vunpack.c.l.b16 %v2789
          %v3516 = vunpack.c.h.b16 %v2789
          %v3517 = vunpack.c.l.b16 %v2790
          %v3518 = vunpack.c.h.b16 %v2790
          %v3519 = vunpack.c.l.b16 %v2791
          %v3520 = vunpack.c.h.b16 %v2791
          %v3521 = vunpack.c.l.b16 %v2792
          %v3522 = vunpack.c.h.b16 %v2792
          %v3523 = vunpack.c.l.b16 %v2793
          %v3524 = vunpack.c.h.b16 %v2793
          %v3525 = vunpack.c.l.b16 %v2794
          %v3526 = vunpack.c.h.b16 %v2794
          %v3527 = vunpack.c.l.b16 %v2795
          %v3528 = vunpack.c.h.b16 %v2795
          %v3529 = vunpack.c.l.b16 %v2796
          %v3530 = vunpack.c.h.b16 %v2796
          %v3531 = vunpack.c.l.b16 %v2797
          %v3532 = vunpack.c.h.b16 %v2797
          %v3533 = vunpack.c.l.b16 %v2798
          %v3534 = vunpack.c.h.b16 %v2798
          %v3535 = vunpack.c.l.b16 %v2799
          %v3536 = vunpack.c.h.b16 %v2799
          %v3537 = vunpack.c.l.b16 %v2800
          %v3538 = vunpack.c.h.b16 %v2800
          %v3539 = vunpack.c.l.b16 %v2801
          %v3540 = vunpack.c.h.b16 %v2801
          %v3541 = vunpack.c.l.b16 %v2802
          %v3542 = vunpack.c.h.b16 %v2802
          %v3543 = vunpack.c.l.b16 %v2803
          %v3544 = vunpack.c.h.b16 %v2803
          %v3545 = vunpack.c.l.b16 %v2804
          %v3546 = vunpack.c.h.b16 %v2804
          %v3547 = vunpack.c.l.b16 %v2805
          %v3548 = vunpack.c.h.b16 %v2805
          %v3549 = vunpack.c.l.b16 %v2806
          %v3550 = vunpack.c.h.b16 %v2806
          %v3551 = vunpack.c.l.b16 %v2807
          %v3552 = vunpack.c.h.b16 %v2807
          %v3553 = vunpack.c.l.b16 %v2808
          %v3554 = vunpack.c.h.b16 %v2808
          %v3555 = vunpack.c.l.b16 %v2809
          %v3556 = vunpack.c.h.b16 %v2809
          %v3557 = vunpack.c.l.b16 %v2810
          %v3558 = vunpack.c.h.b16 %v2810
          %v3559 = vunpack.c.l.b16 %v2811
          %v3560 = vunpack.c.h.b16 %v2811
          %v3561 = vunpack.c.l.b16 %v2812
          %v3562 = vunpack.c.h.b16 %v2812
          %v3563 = vunpack.c.l.b16 %v2813
          %v3564 = vunpack.c.h.b16 %v2813
          %v3565 = vunpack.c.l.b16 %v2814
          %v3566 = vunpack.c.h.b16 %v2814
          %v3567 = vunpack.c.l.b16 %v2815
          %v3568 = vunpack.c.h.b16 %v2815
          %v3569 = vunpack.c.l.b16 %v2816
          %v3570 = vunpack.c.h.b16 %v2816
          %v3571 = vunpack.c.l.b16 %v2817
          %v3572 = vunpack.c.h.b16 %v2817
          %v3573 = vunpack.c.l.b16 %v2818
          %v3574 = vunpack.c.h.b16 %v2818
          %v3575 = vunpack.c.l.b16 %v2819
          %v3576 = vunpack.c.h.b16 %v2819
          %v3577 = vunpack.c.l.b16 %v2820
          %v3578 = vunpack.c.h.b16 %v2820
          %v3579 = vunpack.c.l.b16 %v2821
          %v3580 = vunpack.c.h.b16 %v2821
          %v3581 = vunpack.c.l.b16 %v2822
          %v3582 = vunpack.c.h.b16 %v2822
          %v3583 = vunpack.c.l.b16 %v2823
          %v3584 = vunpack.c.h.b16 %v2823
          %v3585 = vunpack.c.l.b16 %v2824
          %v3586 = vunpack.c.h.b16 %v2824
          %v3587 = vunpack.c.l.b16 %v2825
          %v3588 = vunpack.c.h.b16 %v2825
          %v3589 = vunpack.c.l.b16 %v2826
          %v3590 = vunpack.c.h.b16 %v2826
          %v3591 = vunpack.c.l.b16 %v2827
          %v3592 = vunpack.c.h.b16 %v2827
          %v3593 = vunpack.c.l.b16 %v2828
          %v3594 = vunpack.c.h.b16 %v2828
          %v3595 = vunpack.c.l.b16 %v2829
          %v3596 = vunpack.c.h.b16 %v2829
          %v3597 = vunpack.c.l.b16 %v2830
          %v3598 = vunpack.c.h.b16 %v2830
          %v3599 = vunpack.c.l.b16 %v2831
          %v3600 = vunpack.c.h.b16 %v2831
          %v3601 = vunpack.c.l.b16 %v2832
          %v3602 = vunpack.c.h.b16 %v2832
          %v3603 = vunpack.c.l.b16 %v2833
          %v3604 = vunpack.c.h.b16 %v2833
          %v3605 = vunpack.c.l.b16 %v2834
          %v3606 = vunpack.c.h.b16 %v2834
          %v3607 = vunpack.c.l.b16 %v2835
          %v3608 = vunpack.c.h.b16 %v2835
          %v3609 = vunpack.c.l.b16 %v2836
          %v3610 = vunpack.c.h.b16 %v2836
          %v3611 = vunpack.c.l.b16 %v2837
          %v3612 = vunpack.c.h.b16 %v2837
          %v3613 = vunpack.c.l.b16 %v2838
          %v3614 = vunpack.c.h.b16 %v2838
          %v3615 = vunpack.c.l.b16 %v2839
          %v3616 = vunpack.c.h.b16 %v2839
          %v3617 = vunpack.c.l.b16 %v2840
          %v3618 = vunpack.c.h.b16 %v2840
          %v3619 = vpack.c.b16 %v3111, %v3107
          %v3620 = vpack.c.b16 %v3112, %v3108
          %v3621 = vpack.c.b16 %v3113, %v3109
          %v3622 = vpack.c.b16 %v3114, %v3110
          %v3623 = vpack.c.b16 %v3119, %v3115
          %v3624 = vpack.c.b16 %v3120, %v3116
          %v3625 = vpack.c.b16 %v3121, %v3117
          %v3626 = vpack.c.b16 %v3122, %v3118
          %v3627 = vpack.c.b16 %v3127, %v3123
          %v3628 = vpack.c.b16 %v3128, %v3124
          %v3629 = vpack.c.b16 %v3129, %v3125
          %v3630 = vpack.c.b16 %v3130, %v3126
          %v3631 = vpack.c.b16 %v3135, %v3131
          %v3632 = vpack.c.b16 %v3136, %v3132
          %v3633 = vpack.c.b16 %v3137, %v3133
          %v3634 = vpack.c.b16 %v3138, %v3134
          %v3635 = vpack.c.b16 %v3143, %v3139
          %v3636 = vpack.c.b16 %v3144, %v3140
          %v3637 = vpack.c.b16 %v3145, %v3141
          %v3638 = vpack.c.b16 %v3146, %v3142
          %v3639 = vpack.c.b16 %v3151, %v3147
          %v3640 = vpack.c.b16 %v3152, %v3148
          %v3641 = vpack.c.b16 %v3153, %v3149
          %v3642 = vpack.c.b16 %v3154, %v3150
          %v3643 = vpack.c.b16 %v3159, %v3155
          %v3644 = vpack.c.b16 %v3160, %v3156
          %v3645 = vpack.c.b16 %v3161, %v3157
          %v3646 = vpack.c.b16 %v3162, %v3158
          %v3647 = vpack.c.b16 %v3167, %v3163
          %v3648 = vpack.c.b16 %v3168, %v3164
          %v3649 = vpack.c.b16 %v3169, %v3165
          %v3650 = vpack.c.b16 %v3170, %v3166
          %v3651 = vpack.c.b16 %v3175, %v3171
          %v3652 = vpack.c.b16 %v3176, %v3172
          %v3653 = vpack.c.b16 %v3177, %v3173
          %v3654 = vpack.c.b16 %v3178, %v3174
          %v3655 = vpack.c.b16 %v3183, %v3179
          %v3656 = vpack.c.b16 %v3184, %v3180
          %v3657 = vpack.c.b16 %v3185, %v3181
          %v3658 = vpack.c.b16 %v3186, %v3182
          %v3659 = vpack.c.b16 %v3191, %v3187
          %v3660 = vpack.c.b16 %v3192, %v3188
          %v3661 = vpack.c.b16 %v3193, %v3189
          %v3662 = vpack.c.b16 %v3194, %v3190
          %v3663 = vpack.c.b16 %v3199, %v3195
          %v3664 = vpack.c.b16 %v3200, %v3196
          %v3665 = vpack.c.b16 %v3201, %v3197
          %v3666 = vpack.c.b16 %v3202, %v3198
          %v3667 = vpack.c.b16 %v3207, %v3203
          %v3668 = vpack.c.b16 %v3208, %v3204
          %v3669 = vpack.c.b16 %v3209, %v3205
          %v3670 = vpack.c.b16 %v3210, %v3206
          %v3671 = vpack.c.b16 %v3215, %v3211
          %v3672 = vpack.c.b16 %v3216, %v3212
          %v3673 = vpack.c.b16 %v3217, %v3213
          %v3674 = vpack.c.b16 %v3218, %v3214
          %v3675 = vpack.c.b16 %v3223, %v3219
          %v3676 = vpack.c.b16 %v3224, %v3220
          %v3677 = vpack.c.b16 %v3225, %v3221
          %v3678 = vpack.c.b16 %v3226, %v3222
          %v3679 = vpack.c.b16 %v3231, %v3227
          %v3680 = vpack.c.b16 %v3232, %v3228
          %v3681 = vpack.c.b16 %v3233, %v3229
          %v3682 = vpack.c.b16 %v3234, %v3230
          %v3683 = vpack.c.b16 %v3239, %v3235
          %v3684 = vpack.c.b16 %v3240, %v3236
          %v3685 = vpack.c.b16 %v3241, %v3237
          %v3686 = vpack.c.b16 %v3242, %v3238
          %v3687 = vpack.c.b16 %v3247, %v3243
          %v3688 = vpack.c.b16 %v3248, %v3244
          %v3689 = vpack.c.b16 %v3249, %v3245
          %v3690 = vpack.c.b16 %v3250, %v3246
          %v3691 = vpack.c.b16 %v3255, %v3251
          %v3692 = vpack.c.b16 %v3256, %v3252
          %v3693 = vpack.c.b16 %v3257, %v3253
          %v3694 = vpack.c.b16 %v3258, %v3254
          %v3695 = vpack.c.b16 %v3263, %v3259
          %v3696 = vpack.c.b16 %v3264, %v3260
          %v3697 = vpack.c.b16 %v3265, %v3261
          %v3698 = vpack.c.b16 %v3266, %v3262
          %v3699 = vpack.c.b16 %v3271, %v3267
          %v3700 = vpack.c.b16 %v3272, %v3268
          %v3701 = vpack.c.b16 %v3273, %v3269
          %v3702 = vpack.c.b16 %v3274, %v3270
          %v3703 = vpack.c.b16 %v3279, %v3275
          %v3704 = vpack.c.b16 %v3280, %v3276
          %v3705 = vpack.c.b16 %v3281, %v3277
          %v3706 = vpack.c.b16 %v3282, %v3278
          %v3707 = vpack.c.b16 %v3287, %v3283
          %v3708 = vpack.c.b16 %v3288, %v3284
          %v3709 = vpack.c.b16 %v3289, %v3285
          %v3710 = vpack.c.b16 %v3290, %v3286
          %v3711 = vpack.c.b16 %v3295, %v3291
          %v3712 = vpack.c.b16 %v3296, %v3292
          %v3713 = vpack.c.b16 %v3297, %v3293
          %v3714 = vpack.c.b16 %v3298, %v3294
          %v3715 = vpack.c.b16 %v3303, %v3299
          %v3716 = vpack.c.b16 %v3304, %v3300
          %v3717 = vpack.c.b16 %v3305, %v3301
          %v3718 = vpack.c.b16 %v3306, %v3302
          %v3719 = vpack.c.b16 %v3311, %v3307
          %v3720 = vpack.c.b16 %v3312, %v3308
          %v3721 = vpack.c.b16 %v3313, %v3309
          %v3722 = vpack.c.b16 %v3314, %v3310
          %v3723 = vpack.c.b16 %v3319, %v3315
          %v3724 = vpack.c.b16 %v3320, %v3316
          %v3725 = vpack.c.b16 %v3321, %v3317
          %v3726 = vpack.c.b16 %v3322, %v3318
          %v3727 = vpack.c.b16 %v3327, %v3323
          %v3728 = vpack.c.b16 %v3328, %v3324
          %v3729 = vpack.c.b16 %v3329, %v3325
          %v3730 = vpack.c.b16 %v3330, %v3326
          %v3731 = vpack.c.b16 %v3335, %v3331
          %v3732 = vpack.c.b16 %v3336, %v3332
          %v3733 = vpack.c.b16 %v3337, %v3333
          %v3734 = vpack.c.b16 %v3338, %v3334
          %v3735 = vpack.c.b16 %v3343, %v3339
          %v3736 = vpack.c.b16 %v3344, %v3340
          %v3737 = vpack.c.b16 %v3345, %v3341
          %v3738 = vpack.c.b16 %v3346, %v3342
          %v3739 = vpack.c.b16 %v3351, %v3347
          %v3740 = vpack.c.b16 %v3352, %v3348
          %v3741 = vpack.c.b16 %v3353, %v3349
          %v3742 = vpack.c.b16 %v3354, %v3350
          %v3743 = vpack.c.b16 %v3359, %v3355
          %v3744 = vpack.c.b16 %v3360, %v3356
          %v3745 = vpack.c.b16 %v3361, %v3357
          %v3746 = vpack.c.b16 %v3362, %v3358
          %v3747 = vpack.c.b16 %v3367, %v3363
          %v3748 = vpack.c.b16 %v3368, %v3364
          %v3749 = vpack.c.b16 %v3369, %v3365
          %v3750 = vpack.c.b16 %v3370, %v3366
          %v3751 = vpack.c.b16 %v3375, %v3371
          %v3752 = vpack.c.b16 %v3376, %v3372
          %v3753 = vpack.c.b16 %v3377, %v3373
          %v3754 = vpack.c.b16 %v3378, %v3374
          %v3755 = vpack.c.b16 %v3383, %v3379
          %v3756 = vpack.c.b16 %v3384, %v3380
          %v3757 = vpack.c.b16 %v3385, %v3381
          %v3758 = vpack.c.b16 %v3386, %v3382
          %v3759 = vpack.c.b16 %v3391, %v3387
          %v3760 = vpack.c.b16 %v3392, %v3388
          %v3761 = vpack.c.b16 %v3393, %v3389
          %v3762 = vpack.c.b16 %v3394, %v3390
          %v3763 = vpack.c.b16 %v3399, %v3395
          %v3764 = vpack.c.b16 %v3400, %v3396
          %v3765 = vpack.c.b16 %v3401, %v3397
          %v3766 = vpack.c.b16 %v3402, %v3398
          %v3767 = vpack.c.b16 %v3407, %v3403
          %v3768 = vpack.c.b16 %v3408, %v3404
          %v3769 = vpack.c.b16 %v3409, %v3405
          %v3770 = vpack.c.b16 %v3410, %v3406
          %v3771 = vpack.c.b16 %v3415, %v3411
          %v3772 = vpack.c.b16 %v3416, %v3412
          %v3773 = vpack.c.b16 %v3417, %v3413
          %v3774 = vpack.c.b16 %v3418, %v3414
          %v3775 = vpack.c.b16 %v3423, %v3419
          %v3776 = vpack.c.b16 %v3424, %v3420
          %v3777 = vpack.c.b16 %v3425, %v3421
          %v3778 = vpack.c.b16 %v3426, %v3422
          %v3779 = vpack.c.b16 %v3431, %v3427
          %v3780 = vpack.c.b16 %v3432, %v3428
          %v3781 = vpack.c.b16 %v3433, %v3429
          %v3782 = vpack.c.b16 %v3434, %v3430
          %v3783 = vpack.c.b16 %v3439, %v3435
          %v3784 = vpack.c.b16 %v3440, %v3436
          %v3785 = vpack.c.b16 %v3441, %v3437
          %v3786 = vpack.c.b16 %v3442, %v3438
          %v3787 = vpack.c.b16 %v3447, %v3443
          %v3788 = vpack.c.b16 %v3448, %v3444
          %v3789 = vpack.c.b16 %v3449, %v3445
          %v3790 = vpack.c.b16 %v3450, %v3446
          %v3791 = vpack.c.b16 %v3455, %v3451
          %v3792 = vpack.c.b16 %v3456, %v3452
          %v3793 = vpack.c.b16 %v3457, %v3453
          %v3794 = vpack.c.b16 %v3458, %v3454
          %v3795 = vpack.c.b16 %v3463, %v3459
          %v3796 = vpack.c.b16 %v3464, %v3460
          %v3797 = vpack.c.b16 %v3465, %v3461
          %v3798 = vpack.c.b16 %v3466, %v3462
          %v3799 = vpack.c.b16 %v3471, %v3467
          %v3800 = vpack.c.b16 %v3472, %v3468
          %v3801 = vpack.c.b16 %v3473, %v3469
          %v3802 = vpack.c.b16 %v3474, %v3470
          %v3803 = vpack.c.b16 %v3479, %v3475
          %v3804 = vpack.c.b16 %v3480, %v3476
          %v3805 = vpack.c.b16 %v3481, %v3477
          %v3806 = vpack.c.b16 %v3482, %v3478
          %v3807 = vpack.c.b16 %v3487, %v3483
          %v3808 = vpack.c.b16 %v3488, %v3484
          %v3809 = vpack.c.b16 %v3489, %v3485
          %v3810 = vpack.c.b16 %v3490, %v3486
          %v3811 = vpack.c.b16 %v3495, %v3491
          %v3812 = vpack.c.b16 %v3496, %v3492
          %v3813 = vpack.c.b16 %v3497, %v3493
          %v3814 = vpack.c.b16 %v3498, %v3494
          %v3815 = vpack.c.b16 %v3503, %v3499
          %v3816 = vpack.c.b16 %v3504, %v3500
          %v3817 = vpack.c.b16 %v3505, %v3501
          %v3818 = vpack.c.b16 %v3506, %v3502
          %v3819 = vpack.c.b16 %v3511, %v3507
          %v3820 = vpack.c.b16 %v3512, %v3508
          %v3821 = vpack.c.b16 %v3513, %v3509
          %v3822 = vpack.c.b16 %v3514, %v3510
          %v3823 = vpack.c.b16 %v3519, %v3515
          %v3824 = vpack.c.b16 %v3520, %v3516
          %v3825 = vpack.c.b16 %v3521, %v3517
          %v3826 = vpack.c.b16 %v3522, %v3518
          %v3827 = vpack.c.b16 %v3527, %v3523
          %v3828 = vpack.c.b16 %v3528, %v3524
          %v3829 = vpack.c.b16 %v3529, %v3525
          %v3830 = vpack.c.b16 %v3530, %v3526
          %v3831 = vpack.c.b16 %v3535, %v3531
          %v3832 = vpack.c.b16 %v3536, %v3532
          %v3833 = vpack.c.b16 %v3537, %v3533
          %v3834 = vpack.c.b16 %v3538, %v3534
          %v3835 = vpack.c.b16 %v3543, %v3539
          %v3836 = vpack.c.b16 %v3544, %v3540
          %v3837 = vpack.c.b16 %v3545, %v3541
          %v3838 = vpack.c.b16 %v3546, %v3542
          %v3839 = vpack.c.b16 %v3551, %v3547
          %v3840 = vpack.c.b16 %v3552, %v3548
          %v3841 = vpack.c.b16 %v3553, %v3549
          %v3842 = vpack.c.b16 %v3554, %v3550
          %v3843 = vpack.c.b16 %v3559, %v3555
          %v3844 = vpack.c.b16 %v3560, %v3556
          %v3845 = vpack.c.b16 %v3561, %v3557
          %v3846 = vpack.c.b16 %v3562, %v3558
          %v3847 = vpack.c.b16 %v3567, %v3563
          %v3848 = vpack.c.b16 %v3568, %v3564
          %v3849 = vpack.c.b16 %v3569, %v3565
          %v3850 = vpack.c.b16 %v3570, %v3566
          %v3851 = vpack.c.b16 %v3575, %v3571
          %v3852 = vpack.c.b16 %v3576, %v3572
          %v3853 = vpack.c.b16 %v3577, %v3573
          %v3854 = vpack.c.b16 %v3578, %v3574
          %v3855 = vpack.c.b16 %v3583, %v3579
          %v3856 = vpack.c.b16 %v3584, %v3580
          %v3857 = vpack.c.b16 %v3585, %v3581
          %v3858 = vpack.c.b16 %v3586, %v3582
          %v3859 = vpack.c.b16 %v3591, %v3587
          %v3860 = vpack.c.b16 %v3592, %v3588
          %v3861 = vpack.c.b16 %v3593, %v3589
          %v3862 = vpack.c.b16 %v3594, %v3590
          %v3863 = vpack.c.b16 %v3599, %v3595
          %v3864 = vpack.c.b16 %v3600, %v3596
          %v3865 = vpack.c.b16 %v3601, %v3597
          %v3866 = vpack.c.b16 %v3602, %v3598
          %v3867 = vpack.c.b16 %v3607, %v3603
          %v3868 = vpack.c.b16 %v3608, %v3604
          %v3869 = vpack.c.b16 %v3609, %v3605
          %v3870 = vpack.c.b16 %v3610, %v3606
          %v3871 = vpack.c.b16 %v3615, %v3611
          %v3872 = vpack.c.b16 %v3616, %v3612
          %v3873 = vpack.c.b16 %v3617, %v3613
          %v3874 = vpack.c.b16 %v3618, %v3614
          %4131 = vmatpush.bf16.msra.mxu0 %v3647
          %4132 = vmatpush.bf16.msra.mxu0 %v3643
          %4133 = vmatpush.bf16.msra.mxu0 %v3639
          %4134 = vmatpush.bf16.msra.mxu0 %v3635
          %4135 = vmatpush.bf16.msra.mxu0 %v3631
          %4136 = vmatpush.bf16.msra.mxu0 %v3627
          %4137 = vmatpush.bf16.msra.mxu0 %v3623
          %4138 = vmatpush.bf16.msra.mxu0 %v3619
          %4139 = vmatmul.bf16.gmra.mxu0 %v2577
          %v4140 = vpop.f32.mrf.mxu0
          %v4141 = vadd.f32 %v2843, %v4140
          %v4142 = vpop.f32.mrf.mxu0
          %4143 = vdwg.mxu0
          %4144 = vmatpush.bf16.msra.mxu0 %v3679
          %4145 = vmatpush.bf16.msra.mxu0 %v3675
          %4146 = vmatpush.bf16.msra.mxu0 %v3671
          %4147 = vmatpush.bf16.msra.mxu0 %v3667
          %4148 = vmatpush.bf16.msra.mxu0 %v3663
          %4149 = vmatpush.bf16.msra.mxu0 %v3659
          %4150 = vmatpush.bf16.msra.mxu0 %v3655
          %4151 = vmatpush.bf16.msra.mxu0 %v3651
          %4152 = vmatmul.bf16.gmra.mxu0 %v2578
          %v4153 = vpop.f32.mrf.mxu0
          %v4154 = vadd.f32 %v4141, %v4153
          %v4155 = vpop.f32.mrf.mxu0
          %4156 = vdwg.mxu0
          %4157 = vmatpush.bf16.msra.mxu0 %v3711
          %4158 = vmatpush.bf16.msra.mxu0 %v3707
          %4159 = vmatpush.bf16.msra.mxu0 %v3703
          %4160 = vmatpush.bf16.msra.mxu0 %v3699
          %4161 = vmatpush.bf16.msra.mxu0 %v3695
          %4162 = vmatpush.bf16.msra.mxu0 %v3691
          %4163 = vmatpush.bf16.msra.mxu0 %v3687
          %4164 = vmatpush.bf16.msra.mxu0 %v3683
          %4165 = vmatmul.bf16.gmra.mxu0 %v2579
          %v4166 = vpop.f32.mrf.mxu0
          %v4167 = vadd.f32 %v4154, %v4166
          %v4168 = vpop.f32.mrf.mxu0
          %4169 = vdwg.mxu0
          %4170 = vmatpush.bf16.msra.mxu0 %v3743
          %4171 = vmatpush.bf16.msra.mxu0 %v3739
          %4172 = vmatpush.bf16.msra.mxu0 %v3735
          %4173 = vmatpush.bf16.msra.mxu0 %v3731
          %4174 = vmatpush.bf16.msra.mxu0 %v3727
          %4175 = vmatpush.bf16.msra.mxu0 %v3723
          %4176 = vmatpush.bf16.msra.mxu0 %v3719
          %4177 = vmatpush.bf16.msra.mxu0 %v3715
          %4178 = vmatmul.bf16.gmra.mxu0 %v2580
          %v4179 = vpop.f32.mrf.mxu0
          %v4180 = vadd.f32 %v4167, %v4179
          %v4181 = vpop.f32.mrf.mxu0
          %4182 = vdwg.mxu0
          %4183 = vmatpush.bf16.msra.mxu0 %v3775
          %4184 = vmatpush.bf16.msra.mxu0 %v3771
          %4185 = vmatpush.bf16.msra.mxu0 %v3767
          %4186 = vmatpush.bf16.msra.mxu0 %v3763
          %4187 = vmatpush.bf16.msra.mxu0 %v3759
          %4188 = vmatpush.bf16.msra.mxu0 %v3755
          %4189 = vmatpush.bf16.msra.mxu0 %v3751
          %4190 = vmatpush.bf16.msra.mxu0 %v3747
          %4191 = vmatmul.bf16.gmra.mxu0 %v2581
          %v4192 = vpop.f32.mrf.mxu0
          %v4193 = vadd.f32 %v4180, %v4192
          %v4194 = vpop.f32.mrf.mxu0
          %4195 = vdwg.mxu0
          %4196 = vmatpush.bf16.msra.mxu0 %v3807
          %4197 = vmatpush.bf16.msra.mxu0 %v3803
          %4198 = vmatpush.bf16.msra.mxu0 %v3799
          %4199 = vmatpush.bf16.msra.mxu0 %v3795
          %4200 = vmatpush.bf16.msra.mxu0 %v3791
          %4201 = vmatpush.bf16.msra.mxu0 %v3787
          %4202 = vmatpush.bf16.msra.mxu0 %v3783
          %4203 = vmatpush.bf16.msra.mxu0 %v3779
          %4204 = vmatmul.bf16.gmra.mxu0 %v2582
          %v4205 = vpop.f32.mrf.mxu0
          %v4206 = vadd.f32 %v4193, %v4205
          %v4207 = vpop.f32.mrf.mxu0
          %4208 = vdwg.mxu0
          %4209 = vmatpush.bf16.msra.mxu0 %v3839
          %4210 = vmatpush.bf16.msra.mxu0 %v3835
          %4211 = vmatpush.bf16.msra.mxu0 %v3831
          %4212 = vmatpush.bf16.msra.mxu0 %v3827
          %4213 = vmatpush.bf16.msra.mxu0 %v3823
          %4214 = vmatpush.bf16.msra.mxu0 %v3819
          %4215 = vmatpush.bf16.msra.mxu0 %v3815
          %4216 = vmatpush.bf16.msra.mxu0 %v3811
          %4217 = vmatmul.bf16.gmra.mxu0 %v2583
          %v4218 = vpop.f32.mrf.mxu0
          %v4219 = vadd.f32 %v4206, %v4218
          %v4220 = vpop.f32.mrf.mxu0
          %4221 = vdwg.mxu0
          %4222 = vmatpush.bf16.msra.mxu0 %v3871
          %4223 = vmatpush.bf16.msra.mxu0 %v3867
          %4224 = vmatpush.bf16.msra.mxu0 %v3863
          %4225 = vmatpush.bf16.msra.mxu0 %v3859
          %4226 = vmatpush.bf16.msra.mxu0 %v3855
          %4227 = vmatpush.bf16.msra.mxu0 %v3851
          %4228 = vmatpush.bf16.msra.mxu0 %v3847
          %4229 = vmatpush.bf16.msra.mxu0 %v3843
          %4230 = vmatmul.bf16.gmra.mxu0 %v2584
          %v4231 = vpop.f32.mrf.mxu0
          %v4232 = vadd.f32 %v4219, %v4231
          %v4233 = vpop.f32.mrf.mxu0
          %4234 = vdwg.mxu0
          %4235 = vmatpush.bf16.msra.mxu0 %v3648
          %4236 = vmatpush.bf16.msra.mxu0 %v3644
          %4237 = vmatpush.bf16.msra.mxu0 %v3640
          %4238 = vmatpush.bf16.msra.mxu0 %v3636
          %4239 = vmatpush.bf16.msra.mxu0 %v3632
          %4240 = vmatpush.bf16.msra.mxu0 %v3628
          %4241 = vmatpush.bf16.msra.mxu0 %v3624
          %4242 = vmatpush.bf16.msra.mxu0 %v3620
          %4243 = vmatmul.bf16.gmra.mxu0 %v2577
          %v4244 = vpop.f32.mrf.mxu0
          %v4245 = vadd.f32 %v2844, %v4244
          %v4246 = vpop.f32.mrf.mxu0
          %4247 = vdwg.mxu0
          %4248 = vmatpush.bf16.msra.mxu0 %v3680
          %4249 = vmatpush.bf16.msra.mxu0 %v3676
          %4250 = vmatpush.bf16.msra.mxu0 %v3672
          %4251 = vmatpush.bf16.msra.mxu0 %v3668
          %4252 = vmatpush.bf16.msra.mxu0 %v3664
          %4253 = vmatpush.bf16.msra.mxu0 %v3660
          %4254 = vmatpush.bf16.msra.mxu0 %v3656
          %4255 = vmatpush.bf16.msra.mxu0 %v3652
          %4256 = vmatmul.bf16.gmra.mxu0 %v2578
          %v4257 = vpop.f32.mrf.mxu0
          %v4258 = vadd.f32 %v4245, %v4257
          %v4259 = vpop.f32.mrf.mxu0
          %4260 = vdwg.mxu0
          %4261 = vmatpush.bf16.msra.mxu0 %v3712
          %4262 = vmatpush.bf16.msra.mxu0 %v3708
          %4263 = vmatpush.bf16.msra.mxu0 %v3704
          %4264 = vmatpush.bf16.msra.mxu0 %v3700
          %4265 = vmatpush.bf16.msra.mxu0 %v3696
          %4266 = vmatpush.bf16.msra.mxu0 %v3692
          %4267 = vmatpush.bf16.msra.mxu0 %v3688
          %4268 = vmatpush.bf16.msra.mxu0 %v3684
          %4269 = vmatmul.bf16.gmra.mxu0 %v2579
          %v4270 = vpop.f32.mrf.mxu0
          %v4271 = vadd.f32 %v4258, %v4270
          %v4272 = vpop.f32.mrf.mxu0
          %4273 = vdwg.mxu0
          %4274 = vmatpush.bf16.msra.mxu0 %v3744
          %4275 = vmatpush.bf16.msra.mxu0 %v3740
          %4276 = vmatpush.bf16.msra.mxu0 %v3736
          %4277 = vmatpush.bf16.msra.mxu0 %v3732
          %4278 = vmatpush.bf16.msra.mxu0 %v3728
          %4279 = vmatpush.bf16.msra.mxu0 %v3724
          %4280 = vmatpush.bf16.msra.mxu0 %v3720
          %4281 = vmatpush.bf16.msra.mxu0 %v3716
          %4282 = vmatmul.bf16.gmra.mxu0 %v2580
          %v4283 = vpop.f32.mrf.mxu0
          %v4284 = vadd.f32 %v4271, %v4283
          %v4285 = vpop.f32.mrf.mxu0
          %4286 = vdwg.mxu0
          %4287 = vmatpush.bf16.msra.mxu0 %v3776
          %4288 = vmatpush.bf16.msra.mxu0 %v3772
          %4289 = vmatpush.bf16.msra.mxu0 %v3768
          %4290 = vmatpush.bf16.msra.mxu0 %v3764
          %4291 = vmatpush.bf16.msra.mxu0 %v3760
          %4292 = vmatpush.bf16.msra.mxu0 %v3756
          %4293 = vmatpush.bf16.msra.mxu0 %v3752
          %4294 = vmatpush.bf16.msra.mxu0 %v3748
          %4295 = vmatmul.bf16.gmra.mxu0 %v2581
          %v4296 = vpop.f32.mrf.mxu0
          %v4297 = vadd.f32 %v4284, %v4296
          %v4298 = vpop.f32.mrf.mxu0
          %4299 = vdwg.mxu0
          %4300 = vmatpush.bf16.msra.mxu0 %v3808
          %4301 = vmatpush.bf16.msra.mxu0 %v3804
          %4302 = vmatpush.bf16.msra.mxu0 %v3800
          %4303 = vmatpush.bf16.msra.mxu0 %v3796
          %4304 = vmatpush.bf16.msra.mxu0 %v3792
          %4305 = vmatpush.bf16.msra.mxu0 %v3788
          %4306 = vmatpush.bf16.msra.mxu0 %v3784
          %4307 = vmatpush.bf16.msra.mxu0 %v3780
          %4308 = vmatmul.bf16.gmra.mxu0 %v2582
          %v4309 = vpop.f32.mrf.mxu0
          %v4310 = vadd.f32 %v4297, %v4309
          %v4311 = vpop.f32.mrf.mxu0
          %4312 = vdwg.mxu0
          %4313 = vmatpush.bf16.msra.mxu0 %v3840
          %4314 = vmatpush.bf16.msra.mxu0 %v3836
          %4315 = vmatpush.bf16.msra.mxu0 %v3832
          %4316 = vmatpush.bf16.msra.mxu0 %v3828
          %4317 = vmatpush.bf16.msra.mxu0 %v3824
          %4318 = vmatpush.bf16.msra.mxu0 %v3820
          %4319 = vmatpush.bf16.msra.mxu0 %v3816
          %4320 = vmatpush.bf16.msra.mxu0 %v3812
          %4321 = vmatmul.bf16.gmra.mxu0 %v2583
          %v4322 = vpop.f32.mrf.mxu0
          %v4323 = vadd.f32 %v4310, %v4322
          %v4324 = vpop.f32.mrf.mxu0
          %4325 = vdwg.mxu0
          %4326 = vmatpush.bf16.msra.mxu0 %v3872
          %4327 = vmatpush.bf16.msra.mxu0 %v3868
          %4328 = vmatpush.bf16.msra.mxu0 %v3864
          %4329 = vmatpush.bf16.msra.mxu0 %v3860
          %4330 = vmatpush.bf16.msra.mxu0 %v3856
          %4331 = vmatpush.bf16.msra.mxu0 %v3852
          %4332 = vmatpush.bf16.msra.mxu0 %v3848
          %4333 = vmatpush.bf16.msra.mxu0 %v3844
          %4334 = vmatmul.bf16.gmra.mxu0 %v2584
          %v4335 = vpop.f32.mrf.mxu0
          %v4336 = vadd.f32 %v4323, %v4335
          %v4337 = vpop.f32.mrf.mxu0
          %4338 = vdwg.mxu0
          %4339 = vmatpush.bf16.msra.mxu0 %v3649
          %4340 = vmatpush.bf16.msra.mxu0 %v3645
          %4341 = vmatpush.bf16.msra.mxu0 %v3641
          %4342 = vmatpush.bf16.msra.mxu0 %v3637
          %4343 = vmatpush.bf16.msra.mxu0 %v3633
          %4344 = vmatpush.bf16.msra.mxu0 %v3629
          %4345 = vmatpush.bf16.msra.mxu0 %v3625
          %4346 = vmatpush.bf16.msra.mxu0 %v3621
          %4347 = vmatmul.bf16.gmra.mxu0 %v2577
          %v4348 = vpop.f32.mrf.mxu0
          %v4349 = vadd.f32 %v2845, %v4348
          %v4350 = vpop.f32.mrf.mxu0
          %4351 = vdwg.mxu0
          %4352 = vmatpush.bf16.msra.mxu0 %v3681
          %4353 = vmatpush.bf16.msra.mxu0 %v3677
          %4354 = vmatpush.bf16.msra.mxu0 %v3673
          %4355 = vmatpush.bf16.msra.mxu0 %v3669
          %4356 = vmatpush.bf16.msra.mxu0 %v3665
          %4357 = vmatpush.bf16.msra.mxu0 %v3661
          %4358 = vmatpush.bf16.msra.mxu0 %v3657
          %4359 = vmatpush.bf16.msra.mxu0 %v3653
          %4360 = vmatmul.bf16.gmra.mxu0 %v2578
          %v4361 = vpop.f32.mrf.mxu0
          %v4362 = vadd.f32 %v4349, %v4361
          %v4363 = vpop.f32.mrf.mxu0
          %4364 = vdwg.mxu0
          %4365 = vmatpush.bf16.msra.mxu0 %v3713
          %4366 = vmatpush.bf16.msra.mxu0 %v3709
          %4367 = vmatpush.bf16.msra.mxu0 %v3705
          %4368 = vmatpush.bf16.msra.mxu0 %v3701
          %4369 = vmatpush.bf16.msra.mxu0 %v3697
          %4370 = vmatpush.bf16.msra.mxu0 %v3693
          %4371 = vmatpush.bf16.msra.mxu0 %v3689
          %4372 = vmatpush.bf16.msra.mxu0 %v3685
          %4373 = vmatmul.bf16.gmra.mxu0 %v2579
          %v4374 = vpop.f32.mrf.mxu0
          %v4375 = vadd.f32 %v4362, %v4374
          %v4376 = vpop.f32.mrf.mxu0
          %4377 = vdwg.mxu0
          %4378 = vmatpush.bf16.msra.mxu0 %v3745
          %4379 = vmatpush.bf16.msra.mxu0 %v3741
          %4380 = vmatpush.bf16.msra.mxu0 %v3737
          %4381 = vmatpush.bf16.msra.mxu0 %v3733
          %4382 = vmatpush.bf16.msra.mxu0 %v3729
          %4383 = vmatpush.bf16.msra.mxu0 %v3725
          %4384 = vmatpush.bf16.msra.mxu0 %v3721
          %4385 = vmatpush.bf16.msra.mxu0 %v3717
          %4386 = vmatmul.bf16.gmra.mxu0 %v2580
          %v4387 = vpop.f32.mrf.mxu0
          %v4388 = vadd.f32 %v4375, %v4387
          %v4389 = vpop.f32.mrf.mxu0
          %4390 = vdwg.mxu0
          %4391 = vmatpush.bf16.msra.mxu0 %v3777
          %4392 = vmatpush.bf16.msra.mxu0 %v3773
          %4393 = vmatpush.bf16.msra.mxu0 %v3769
          %4394 = vmatpush.bf16.msra.mxu0 %v3765
          %4395 = vmatpush.bf16.msra.mxu0 %v3761
          %4396 = vmatpush.bf16.msra.mxu0 %v3757
          %4397 = vmatpush.bf16.msra.mxu0 %v3753
          %4398 = vmatpush.bf16.msra.mxu0 %v3749
          %4399 = vmatmul.bf16.gmra.mxu0 %v2581
          %v4400 = vpop.f32.mrf.mxu0
          %v4401 = vadd.f32 %v4388, %v4400
          %v4402 = vpop.f32.mrf.mxu0
          %4403 = vdwg.mxu0
          %4404 = vmatpush.bf16.msra.mxu0 %v3809
          %4405 = vmatpush.bf16.msra.mxu0 %v3805
          %4406 = vmatpush.bf16.msra.mxu0 %v3801
          %4407 = vmatpush.bf16.msra.mxu0 %v3797
          %4408 = vmatpush.bf16.msra.mxu0 %v3793
          %4409 = vmatpush.bf16.msra.mxu0 %v3789
          %4410 = vmatpush.bf16.msra.mxu0 %v3785
          %4411 = vmatpush.bf16.msra.mxu0 %v3781
          %4412 = vmatmul.bf16.gmra.mxu0 %v2582
          %v4413 = vpop.f32.mrf.mxu0
          %v4414 = vadd.f32 %v4401, %v4413
          %v4415 = vpop.f32.mrf.mxu0
          %4416 = vdwg.mxu0
          %4417 = vmatpush.bf16.msra.mxu0 %v3841
          %4418 = vmatpush.bf16.msra.mxu0 %v3837
          %4419 = vmatpush.bf16.msra.mxu0 %v3833
          %4420 = vmatpush.bf16.msra.mxu0 %v3829
          %4421 = vmatpush.bf16.msra.mxu0 %v3825
          %4422 = vmatpush.bf16.msra.mxu0 %v3821
          %4423 = vmatpush.bf16.msra.mxu0 %v3817
          %4424 = vmatpush.bf16.msra.mxu0 %v3813
          %4425 = vmatmul.bf16.gmra.mxu0 %v2583
          %v4426 = vpop.f32.mrf.mxu0
          %v4427 = vadd.f32 %v4414, %v4426
          %v4428 = vpop.f32.mrf.mxu0
          %4429 = vdwg.mxu0
          %4430 = vmatpush.bf16.msra.mxu0 %v3873
          %4431 = vmatpush.bf16.msra.mxu0 %v3869
          %4432 = vmatpush.bf16.msra.mxu0 %v3865
          %4433 = vmatpush.bf16.msra.mxu0 %v3861
          %4434 = vmatpush.bf16.msra.mxu0 %v3857
          %4435 = vmatpush.bf16.msra.mxu0 %v3853
          %4436 = vmatpush.bf16.msra.mxu0 %v3849
          %4437 = vmatpush.bf16.msra.mxu0 %v3845
          %4438 = vmatmul.bf16.gmra.mxu0 %v2584
          %v4439 = vpop.f32.mrf.mxu0
          %v4440 = vadd.f32 %v4427, %v4439
          %v4441 = vpop.f32.mrf.mxu0
          %4442 = vdwg.mxu0
          %4443 = vmatpush.bf16.msra.mxu0 %v3650
          %4444 = vmatpush.bf16.msra.mxu0 %v3646
          %4445 = vmatpush.bf16.msra.mxu0 %v3642
          %4446 = vmatpush.bf16.msra.mxu0 %v3638
          %4447 = vmatpush.bf16.msra.mxu0 %v3634
          %4448 = vmatpush.bf16.msra.mxu0 %v3630
          %4449 = vmatpush.bf16.msra.mxu0 %v3626
          %4450 = vmatpush.bf16.msra.mxu0 %v3622
          %4451 = vmatmul.bf16.gmra.mxu0 %v2577
          %v4452 = vpop.f32.mrf.mxu0
          %v4453 = vadd.f32 %v2846, %v4452
          %v4454 = vpop.f32.mrf.mxu0
          %4455 = vdwg.mxu0
          %4456 = vmatpush.bf16.msra.mxu0 %v3682
          %4457 = vmatpush.bf16.msra.mxu0 %v3678
          %4458 = vmatpush.bf16.msra.mxu0 %v3674
          %4459 = vmatpush.bf16.msra.mxu0 %v3670
          %4460 = vmatpush.bf16.msra.mxu0 %v3666
          %4461 = vmatpush.bf16.msra.mxu0 %v3662
          %4462 = vmatpush.bf16.msra.mxu0 %v3658
          %4463 = vmatpush.bf16.msra.mxu0 %v3654
          %4464 = vmatmul.bf16.gmra.mxu0 %v2578
          %v4465 = vpop.f32.mrf.mxu0
          %v4466 = vadd.f32 %v4453, %v4465
          %v4467 = vpop.f32.mrf.mxu0
          %4468 = vdwg.mxu0
          %4469 = vmatpush.bf16.msra.mxu0 %v3714
          %4470 = vmatpush.bf16.msra.mxu0 %v3710
          %4471 = vmatpush.bf16.msra.mxu0 %v3706
          %4472 = vmatpush.bf16.msra.mxu0 %v3702
          %4473 = vmatpush.bf16.msra.mxu0 %v3698
          %4474 = vmatpush.bf16.msra.mxu0 %v3694
          %4475 = vmatpush.bf16.msra.mxu0 %v3690
          %4476 = vmatpush.bf16.msra.mxu0 %v3686
          %4477 = vmatmul.bf16.gmra.mxu0 %v2579
          %v4478 = vpop.f32.mrf.mxu0
          %v4479 = vadd.f32 %v4466, %v4478
          %v4480 = vpop.f32.mrf.mxu0
          %4481 = vdwg.mxu0
          %4482 = vmatpush.bf16.msra.mxu0 %v3746
          %4483 = vmatpush.bf16.msra.mxu0 %v3742
          %4484 = vmatpush.bf16.msra.mxu0 %v3738
          %4485 = vmatpush.bf16.msra.mxu0 %v3734
          %4486 = vmatpush.bf16.msra.mxu0 %v3730
          %4487 = vmatpush.bf16.msra.mxu0 %v3726
          %4488 = vmatpush.bf16.msra.mxu0 %v3722
          %4489 = vmatpush.bf16.msra.mxu0 %v3718
          %4490 = vmatmul.bf16.gmra.mxu0 %v2580
          %v4491 = vpop.f32.mrf.mxu0
          %v4492 = vadd.f32 %v4479, %v4491
          %v4493 = vpop.f32.mrf.mxu0
          %4494 = vdwg.mxu0
          %4495 = vmatpush.bf16.msra.mxu0 %v3778
          %4496 = vmatpush.bf16.msra.mxu0 %v3774
          %4497 = vmatpush.bf16.msra.mxu0 %v3770
          %4498 = vmatpush.bf16.msra.mxu0 %v3766
          %4499 = vmatpush.bf16.msra.mxu0 %v3762
          %4500 = vmatpush.bf16.msra.mxu0 %v3758
          %4501 = vmatpush.bf16.msra.mxu0 %v3754
          %4502 = vmatpush.bf16.msra.mxu0 %v3750
          %4503 = vmatmul.bf16.gmra.mxu0 %v2581
          %v4504 = vpop.f32.mrf.mxu0
          %v4505 = vadd.f32 %v4492, %v4504
          %v4506 = vpop.f32.mrf.mxu0
          %4507 = vdwg.mxu0
          %4508 = vmatpush.bf16.msra.mxu0 %v3810
          %4509 = vmatpush.bf16.msra.mxu0 %v3806
          %4510 = vmatpush.bf16.msra.mxu0 %v3802
          %4511 = vmatpush.bf16.msra.mxu0 %v3798
          %4512 = vmatpush.bf16.msra.mxu0 %v3794
          %4513 = vmatpush.bf16.msra.mxu0 %v3790
          %4514 = vmatpush.bf16.msra.mxu0 %v3786
          %4515 = vmatpush.bf16.msra.mxu0 %v3782
          %4516 = vmatmul.bf16.gmra.mxu0 %v2582
          %v4517 = vpop.f32.mrf.mxu0
          %v4518 = vadd.f32 %v4505, %v4517
          %v4519 = vpop.f32.mrf.mxu0
          %4520 = vdwg.mxu0
          %4521 = vmatpush.bf16.msra.mxu0 %v3842
          %4522 = vmatpush.bf16.msra.mxu0 %v3838
          %4523 = vmatpush.bf16.msra.mxu0 %v3834
          %4524 = vmatpush.bf16.msra.mxu0 %v3830
          %4525 = vmatpush.bf16.msra.mxu0 %v3826
          %4526 = vmatpush.bf16.msra.mxu0 %v3822
          %4527 = vmatpush.bf16.msra.mxu0 %v3818
          %4528 = vmatpush.bf16.msra.mxu0 %v3814
          %4529 = vmatmul.bf16.gmra.mxu0 %v2583
          %v4530 = vpop.f32.mrf.mxu0
          %v4531 = vadd.f32 %v4518, %v4530
          %v4532 = vpop.f32.mrf.mxu0
          %4533 = vdwg.mxu0
          %4534 = vmatpush.bf16.msra.mxu0 %v3874
          %4535 = vmatpush.bf16.msra.mxu0 %v3870
          %4536 = vmatpush.bf16.msra.mxu0 %v3866
          %4537 = vmatpush.bf16.msra.mxu0 %v3862
          %4538 = vmatpush.bf16.msra.mxu0 %v3858
          %4539 = vmatpush.bf16.msra.mxu0 %v3854
          %4540 = vmatpush.bf16.msra.mxu0 %v3850
          %4541 = vmatpush.bf16.msra.mxu0 %v3846
          %4542 = vmatmul.bf16.gmra.mxu0 %v2584
          %v4543 = vpop.f32.mrf.mxu0
          %v4544 = vadd.f32 %v4531, %v4543
          %v4545 = vpop.f32.mrf.mxu0
          %4546 = vdwg.mxu0
          %vm4547 = vcmp.ge.f32.partialorder %v4232, 0.0
          %vm4548 = vcmp.ge.f32.partialorder %v4336, 0.0
          %vm4549 = vcmp.ge.f32.partialorder %v4440, 0.0
          %vm4550 = vcmp.ge.f32.partialorder %v4544, 0.0
          %v4551 = vmul.f32 %v4232, 0.2
          %v4552 = vmul.f32 %v4336, 0.2
          %v4553 = vmul.f32 %v4440, 0.2
          %v4554 = vmul.f32 %v4544, 0.2
          %v4555 = vsel %vm4547, %v4232, %v4551
          %v4556 = vsel %vm4548, %v4336, %v4552
          %v4557 = vsel %vm4549, %v4440, %v4553
          %v4558 = vsel %vm4550, %v4544, %v4554
          %4559 = vst [vmem:[%s452] sm:$0xff] %v4555
          %4560 = vst [vmem:[%s452 + $0x8] sm:$0xff] %v4556
          %4561 = vst [vmem:[%s452 + $0x10] sm:$0xff] %v4557
          %4562 = vst [vmem:[%s452 + $0x18] sm:$0xff] %v4558
        $region84: #{tpu_custom_call.1} parent=43 // pred_fallthru
          _
        %s4563 = sand.u32 %s207, 1
        %s4564 = scalar_lea.sflag [#allocation5], %s4563
        %s4565 = sand.u32 %s207, 1
        %s4566 = smul.addr %s4565, 32
        %s4567 = scalar_lea.vmem [#allocation13], %s4566
        // Predicated region
        $region85: #{tpu_custom_call.1} parent=43 // pred_check
          %p4568 = pneg %p217
        $region86: #{tpu_custom_call.1} parent=43 // pred_check_branch
          %4570 = sbr.rel (%p4568) target = $region88
        $region87: #{tpu_custom_call.1} parent=43 // pred_region
          %s4571 = ssub.s32 %s27, 2
          %p4572 = scmp.gt.s32.totalorder %s4571, 0
          %s4573 = scalar_select %p4572, %s4571, 0
          %s4574 = smul.u32 4, %s4573
          %4576 = vsyncadd %s4564, 0
          %s4577 = smul.addr %s4574, 8
          %s4578 = scalar_lea.hbm %s6, %s4577
          %s4580 = sshll.u32 %s4567, 4
          %s4581 = int_to_ptr.vmem [resolvable:$true] %s4580
          %s4582 = sshll.u32 %s4578, 4
          %s4583 = int_to_ptr.hbm [resolvable:$true] %s4582
          %4585 = dma.vmem_to_hbm [thread:$0]  %s4581, 512, %s4583, %s4564
        $region88: #{tpu_custom_call.1} parent=43 // pred_fallthru
          _
      $region44: #{tpu_custom_call.1} parent=5 // pred_fallthru
        _
      %p4586 = scmp.le.s32.totalorder 2, %s22
      // Predicated region
      $region89: #{tpu_custom_call.1} parent=5 // pred_check
        %p4587 = pneg %p4586
      $region90: #{tpu_custom_call.1} parent=5 // pred_check_branch
        %4589 = sbr.rel (%p4587) target = $region92
      $region91: #{tpu_custom_call.1} parent=5 // pred_region
        %s4590 = ssub.s32 %s22, 2
        // Predicated region
        $region93: #{tpu_custom_call.1} parent=91 // pred_check
          %p4591 = pneg %p223
        $region94: #{tpu_custom_call.1} parent=91 // pred_check_branch
          %4593 = sbr.rel (%p4591) target = $region96
        $region95: #{tpu_custom_call.1} parent=91 // pred_region
          %s4594 = sand.u32 %s208, 1
          %s4595 = scalar_lea.sflag [#allocation5], %s4594
          %s4596 = sand.u32 %s208, 1
          %s4597 = smul.addr %s4596, 32
          %s4598 = scalar_lea.vmem [#allocation13], %s4597
          %4600 = dma.done %s4595, 512
        $region96: #{tpu_custom_call.1} parent=91 // pred_fallthru
          _
      $region92: #{tpu_custom_call.1} parent=5 // pred_fallthru
        _
    $region6: #{tpu_custom_call.1} parent=1 // loop_footer
      %s26 = sadd.s32 1, %s22
    $region7: #{tpu_custom_call.1} parent=1 // loop_footer_branch
      %21 = sbr.rel target = $region3
    $region8: #{tpu_custom_call.1} parent=1 // loop_exit
      _
    %4601 = vsyncpa [#allocation4], 1
    %s4602 = scalar_lea.sflag [#allocation4], 1
    %4603 = vsyncpa %s4602, 1
    %4604 = vsyncpa [#allocation7], 1
    %s4605 = scalar_lea.sflag [#allocation7], 1
    %4606 = vsyncpa %s4605, 1
    %4607 = vsyncpa [#allocation10], 1
    %4608 = vsyncpa [#allocation5], 1
    %s4609 = scalar_lea.sflag [#allocation5], 1
    %4610 = vsyncpa %s4609, 1

</llo_original>
